<compile_context>
chip_gen: v7x
topology: tpu7x:2x2x1
jax: 0.10.0
libtpu: 0.0.40
codegen_flags: <defaults>
</compile_context>

<pallas_src>
import functools

import jax
import jax.numpy as jnp
from jax.experimental import pallas as pl
from jax.experimental.pallas import tpu as pltpu


# bf16 operands + f32 accumulation (review recommendation for v6e/v7x MXU).
# Set to jnp.float32 for bit-exact parity with an f32 reference.
_MXU_OPERAND_DTYPE = jnp.bfloat16

# Small tiles -> comfortably under the scoped-VMEM default on v5e/v6e/v7x.
_VMEM_LIMIT_BYTES = 32 * 1024 * 1024


# ----------------------------- tiling helpers ------------------------------


def _round_up(x, m):
    return ((x + m - 1) // m) * m


def _tile_and_pad(dim, tile_target, align):
    """Pick a tile size (multiple of `align`) and the padded dim (multiple of
    the tile). `tile_target` must itself be a multiple of `align`."""
    if dim <= tile_target:
        t = _round_up(dim, align)
        return t, t
    return tile_target, _round_up(dim, tile_target)


# ----------------------------- Pallas kernels ------------------------------


def _matmul_bn_relu_kernel(p_ref, w_ref, scale_ref, shift_ref, o_ref, acc_ref):
    # grid = (N tiles, Cout tiles, K tiles); K (reduction) is last/"arbitrary".
    # p_ref: (tm, tk) bf16 im2col patches    w_ref: (tk, tn) bf16 weights
    # scale/shift: (1, tn) f32 folded BN     acc_ref: (tm, tn) f32 scratch
    @pl.when(pl.program_id(2) == 0)
    def _():
        acc_ref[...] = jnp.zeros_like(acc_ref)

    acc_ref[...] += jnp.dot(
        p_ref[...], w_ref[...], preferred_element_type=jnp.float32
    )

    @pl.when(pl.program_id(2) == pl.num_programs(2) - 1)
    def _():
        y = acc_ref[...] * scale_ref[...] + shift_ref[...]
        o_ref[...] = jnp.maximum(y, 0.0).astype(o_ref.dtype)


def _maxpool_kernel(p_ref, o_ref):
    # p_ref: (tile_n, KH*KW, C) -> elementwise max over the window axis.
    x = p_ref[...]
    acc = x[:, 0, :]
    for i in range(1, x.shape[1]):
        acc = jnp.maximum(acc, x[:, i, :])
    o_ref[...] = acc


# ------------------------------- glue (JAX) --------------------------------


def _im2col(x_nhwc, kh, kw, stride, padding):
    """Extract conv/pool patches. Returns (B, OH, OW, kh*kw, C) and dims."""
    B, H, W, C = x_nhwc.shape
    xp = jnp.pad(x_nhwc, ((0, 0), (padding, padding), (padding, padding), (0, 0)))
    OH = (H + 2 * padding - kh) // stride + 1
    OW = (W + 2 * padding - kw) // stride + 1
    cols = []
    for i in range(kh):
        for j in range(kw):
            cols.append(
                xp[:, i:i + stride * (OH - 1) + 1:stride,
                   j:j + stride * (OW - 1) + 1:stride, :]
            )
    patches = jnp.stack(cols, axis=3)  # (B, OH, OW, kh*kw, C)
    return patches, (B, OH, OW)


def conv_bn_relu(x_nhwc, w_hwio, scale, shift, *, stride, padding):
    """BasicBlock: Conv2d(bias=False) + BatchNorm2d(eval) + ReLU."""
    # TODO(synk): for production InceptionV4 sizes, gather the kh*kw taps
    # inside the kernel (per-tap dot into the scratch acc) instead of
    # materializing the 9x im2col expansion in HBM.
    KH, KW, Cin, Cout = w_hwio.shape
    patches, (B, OH, OW) = _im2col(x_nhwc, KH, KW, stride, padding)
    N = B * OH * OW
    Kdim = KH * KW * Cin

    # Tile sizes + padded (aligned) problem dims.
    tm, N_pad = _tile_and_pad(N, 256, 8)       # rows: sublane-aligned
    tk, K_pad = _tile_and_pad(Kdim, 512, 128)  # contraction: lane-aligned
    tn, C_pad = _tile_and_pad(Cout, 256, 128)  # output cols: lane-dense

    pmat = patches.reshape(N, Kdim).astype(_MXU_OPERAND_DTYPE)
    pmat = jnp.pad(pmat, ((0, N_pad - N), (0, K_pad - Kdim)))
    wmat = w_hwio.reshape(Kdim, Cout).astype(_MXU_OPERAND_DTYPE)
    wmat = jnp.pad(wmat, ((0, K_pad - Kdim), (0, C_pad - Cout)))
    scale_p = jnp.pad(scale.reshape(1, Cout).astype(jnp.float32),
                      ((0, 0), (0, C_pad - Cout)))
    shift_p = jnp.pad(shift.reshape(1, Cout).astype(jnp.float32),
                      ((0, 0), (0, C_pad - Cout)))

    grid = (N_pad // tm, C_pad // tn, K_pad // tk)

    out = pl.pallas_call(
        _matmul_bn_relu_kernel,
        out_shape=jax.ShapeDtypeStruct((N_pad, C_pad), x_nhwc.dtype),
        grid_spec=pltpu.PrefetchScalarGridSpec(
            num_scalar_prefetch=0,
            grid=grid,
            in_specs=[
                pl.BlockSpec((tm, tk), lambda i, j, k: (i, k)),
                pl.BlockSpec((tk, tn), lambda i, j, k: (k, j)),
                pl.BlockSpec((1, tn), lambda i, j, k: (0, j)),
                pl.BlockSpec((1, tn), lambda i, j, k: (0, j)),
            ],
            out_specs=pl.BlockSpec((tm, tn), lambda i, j, k: (i, j)),
            scratch_shapes=[pltpu.VMEM((tm, tn), jnp.float32)],
        ),
        compiler_params=pltpu.CompilerParams(
            dimension_semantics=("parallel", "parallel", "arbitrary"),
            vmem_limit_bytes=_VMEM_LIMIT_BYTES,
        ),
    )(pmat, wmat, scale_p, shift_p)

    return out[:N, :Cout].reshape(B, OH, OW, Cout)


def maxpool3x3_s2(x_nhwc):
    """nn.MaxPool2d(kernel_size=3, stride=2), padding=0."""
    # Note: zero-padding of the im2col is only valid because padding == 0
    # here; a padded max-pool would require -inf fill.
    patches, (B, OH, OW) = _im2col(x_nhwc, 3, 3, 2, 0)
    _, _, _, K, C = patches.shape
    N = B * OH * OW

    tile_n, N_pad = _tile_and_pad(N, 512, 8)
    pmat = patches.reshape(N, K, C)
    pmat = jnp.pad(pmat, ((0, N_pad - N), (0, 0), (0, 0)))

    out = pl.pallas_call(
        _maxpool_kernel,
        out_shape=jax.ShapeDtypeStruct((N_pad, C), x_nhwc.dtype),
        grid=(N_pad // tile_n,),
        in_specs=[pl.BlockSpec((tile_n, K, C), lambda i: (i, 0, 0))],
        out_specs=pl.BlockSpec((tile_n, C), lambda i: (i, 0)),
        compiler_params=pltpu.CompilerParams(
            dimension_semantics=("parallel",),
            vmem_limit_bytes=_VMEM_LIMIT_BYTES,
        ),
    )(pmat)
    return out[:N].reshape(B, OH, OW, C)


# ----------------------------- parameter setup -----------------------------


def _bn_fold(gamma, beta, mean, var, eps=1e-5):
    scale = gamma / jnp.sqrt(var + eps)
    shift = beta - mean * scale
    return scale, shift


def init_basic_block(key, cin, cout, ksize):
    kw_, kg, kb, km, kv = jax.random.split(key, 5)
    w = jax.random.normal(kw_, (ksize, ksize, cin, cout), jnp.float32) * 0.1
    gamma = jax.random.uniform(kg, (cout,), jnp.float32, 0.5, 1.5)
    beta = jax.random.normal(kb, (cout,), jnp.float32) * 0.1
    mean = jax.random.normal(km, (cout,), jnp.float32) * 0.1
    var = jax.random.uniform(kv, (cout,), jnp.float32, 0.5, 1.5)
    scale, shift = _bn_fold(gamma, beta, mean, var)
    return {"w": w, "scale": scale, "shift": shift}


# ------------------------------ ReductionA ---------------------------------


def reduction_a(x_nchw, params):
    x = jnp.transpose(x_nchw, (0, 2, 3, 1))  # NCHW -> NHWC

    # branch3x3stack: 1x1/s1 -> 3x3/s1/pad1 -> 3x3/s2
    p1, p2, p3 = params["stack1"], params["stack2"], params["stack3"]
    s = conv_bn_relu(x, p1["w"], p1["scale"], p1["shift"], stride=1, padding=0)
    s = conv_bn_relu(s, p2["w"], p2["scale"], p2["shift"], stride=1, padding=1)
    s = conv_bn_relu(s, p3["w"], p3["scale"], p3["shift"], stride=2, padding=0)

    # branch3x3: 3x3/s2
    pb = params["b3x3"]
    t = conv_bn_relu(x, pb["w"], pb["scale"], pb["shift"], stride=2, padding=0)

    # branchpool: MaxPool2d(3, stride=2)
    p = maxpool3x3_s2(x)

    # torch.cat(x, 1) == concat along channels: [stack(m), 3x3(n), pool(in)]
    out = jnp.concatenate([s, t, p], axis=-1)
    return jnp.transpose(out, (0, 3, 1, 2))  # NHWC -> NCHW


# ---------------------------------- main ------------------------------------


if __name__ == "__main__":
    key = jax.random.PRNGKey(0)
    kx, k1, k2, k3, k4 = jax.random.split(key, 5)

    in_channels, k, l, m, n = 4, 4, 6, 8, 6
    x = jax.random.normal(kx, (2, in_channels, 16, 16), jnp.float32)

    params = {
        "stack1": init_basic_block(k1, in_channels, k, 1),
        "stack2": init_basic_block(k2, k, l, 3),
        "stack3": init_basic_block(k3, l, m, 3),
        "b3x3": init_basic_block(k4, in_channels, n, 3),
    }

    fwd = jax.jit(functools.partial(reduction_a, params=params))
    out = jax.block_until_ready(fwd(x))

    # (16 - 3)//2 + 1 = 7 spatial; channels = m + n + in_channels = 18
    assert out.shape == (2, m + n + in_channels, 7, 7), out.shape
    assert out.dtype == jnp.float32
    print("KERNEL_OK")
</pallas_src>

<mosaic_0001>
module attributes {stable_mosaic.version = 11 : i64} {
  func.func @_matmul_bn_relu_kernel(%arg0: i32, %arg1: i32, %arg2: i32, %arg3: memref<104x128xbf16, #tpu.memory_space<vmem>>, %arg4: memref<128x128xbf16, #tpu.memory_space<vmem>>, %arg5: memref<1x128xf32, #tpu.memory_space<vmem>>, %arg6: memref<1x128xf32, #tpu.memory_space<vmem>>, %arg7: memref<104x128xf32, #tpu.memory_space<vmem>>, %arg8: memref<104x128xf32, #tpu.memory_space<vmem>>) attributes {dimension_semantics = [#tpu.dimension_semantics<parallel>, #tpu.dimension_semantics<parallel>, #tpu.dimension_semantics<arbitrary>], iteration_bounds = array<i64: 1, 1, 1>, scalar_prefetch = 0 : i64, scratch_operands = 1 : i64, tpu.core_type = #tpu.core_type<tc>, window_params = [{transform_indices = @transform_0, window_bounds = array<i64: 104, 128>}, {transform_indices = @transform_1, window_bounds = array<i64: 128, 128>}, {transform_indices = @transform_2, window_bounds = array<i64: 1, 128>}, {transform_indices = @transform_3, window_bounds = array<i64: 1, 128>}, {transform_indices = @transform_4, window_bounds = array<i64: 104, 128>}]} {
    %c0_i32 = arith.constant 0 : i32
    %0 = arith.cmpi eq, %arg2, %c0_i32 : i32
    %1 = arith.extui %0 : i1 to i32
    %c0_i32_0 = arith.constant 0 : i32
    %2 = arith.cmpi ne, %1, %c0_i32_0 : i32
    scf.if %2 {
      %cst_10 = arith.constant 0.000000e+00 : f32
      %12 = vector.broadcast %cst_10 : f32 to vector<104x128xf32>
      %c0_11 = arith.constant 0 : index
      %c0_12 = arith.constant 0 : index
      %13 = vector.load %arg8[%c0_11, %c0_12] : memref<104x128xf32, #tpu.memory_space<vmem>>, vector<104x128xf32>
      tpu.vector_store %arg8[%c0_11, %c0_12], %12 {strides = array<i32>} : memref<104x128xf32, #tpu.memory_space<vmem>>, vector<104x128xf32>,
    } else {
    }
    %c0 = arith.constant 0 : index
    %c0_1 = arith.constant 0 : index
    %3 = vector.load %arg8[%c0, %c0_1] : memref<104x128xf32, #tpu.memory_space<vmem>>, vector<104x128xf32>
    %c0_2 = arith.constant 0 : index
    %c0_3 = arith.constant 0 : index
    %4 = vector.load %arg3[%c0_2, %c0_3] : memref<104x128xbf16, #tpu.memory_space<vmem>>, vector<104x128xbf16>
    %c0_4 = arith.constant 0 : index
    %c0_5 = arith.constant 0 : index
    %5 = vector.load %arg4[%c0_4, %c0_5] : memref<128x128xbf16, #tpu.memory_space<vmem>>, vector<128x128xbf16>
    %cst = arith.constant dense<0.000000e+00> : vector<104x128xf32>
    %6 = tpu.matmul %4, %5, %cst {dimension_numbers = #tpu.dot_dimension_numbers<[1], [0], [0], [1], [0, 0, 1, 1], [], []>} : vector<104x128xbf16>, vector<128x128xbf16>, vector<104x128xf32> -> vector<104x128xf32>
    %7 = arith.addf %3, %6 : vector<104x128xf32>
    %c0_6 = arith.constant 0 : index
    %c0_7 = arith.constant 0 : index
    %8 = vector.load %arg8[%c0_6, %c0_7] : memref<104x128xf32, #tpu.memory_space<vmem>>, vector<104x128xf32>
    tpu.vector_store %arg8[%c0_6, %c0_7], %7 {strides = array<i32>} : memref<104x128xf32, #tpu.memory_space<vmem>>, vector<104x128xf32>,
    %c0_i32_8 = arith.constant 0 : i32
    %9 = arith.cmpi eq, %arg2, %c0_i32_8 : i32
    %10 = arith.extui %9 : i1 to i32
    %c0_i32_9 = arith.constant 0 : i32
    %11 = arith.cmpi ne, %10, %c0_i32_9 : i32
    scf.if %11 {
      %c0_10 = arith.constant 0 : index
      %c0_11 = arith.constant 0 : index
      %12 = vector.load %arg8[%c0_10, %c0_11] : memref<104x128xf32, #tpu.memory_space<vmem>>, vector<104x128xf32>
      %c0_12 = arith.constant 0 : index
      %c0_13 = arith.constant 0 : index
      %13 = vector.load %arg5[%c0_12, %c0_13] : memref<1x128xf32, #tpu.memory_space<vmem>>, vector<1x128xf32>
      %14 = vector.broadcast %13 : vector<1x128xf32> to vector<104x128xf32>
      %15 = arith.mulf %12, %14 : vector<104x128xf32>
      %c0_14 = arith.constant 0 : index
      %c0_15 = arith.constant 0 : index
      %16 = vector.load %arg6[%c0_14, %c0_15] : memref<1x128xf32, #tpu.memory_space<vmem>>, vector<1x128xf32>
      %17 = vector.broadcast %16 : vector<1x128xf32> to vector<104x128xf32>
      %18 = arith.addf %15, %17 : vector<104x128xf32>
      %cst_16 = arith.constant 0.000000e+00 : f32
      %19 = vector.broadcast %cst_16 : f32 to vector<104x128xf32>
      %20 = arith.maximumf %18, %19 : vector<104x128xf32>
      %c0_17 = arith.constant 0 : index
      %c0_18 = arith.constant 0 : index
      %21 = vector.load %arg7[%c0_17, %c0_18] : memref<104x128xf32, #tpu.memory_space<vmem>>, vector<104x128xf32>
      tpu.vector_store %arg7[%c0_17, %c0_18], %20 {strides = array<i32>} : memref<104x128xf32, #tpu.memory_space<vmem>>, vector<104x128xf32>,
    } else {
    }
    return
  }
  func.func @transform_0(%arg0: i32, %arg1: i32, %arg2: i32) -> (i32, i32) {
    %c0_i32 = arith.constant 0 : i32
    return %arg0, %arg2 : i32, i32
  }
  func.func @transform_1(%arg0: i32, %arg1: i32, %arg2: i32) -> (i32, i32) {
    %c0_i32 = arith.constant 0 : i32
    return %arg2, %arg1 : i32, i32
  }
  func.func @transform_2(%arg0: i32, %arg1: i32, %arg2: i32) -> (i32, i32) {
    %c0_i32 = arith.constant 0 : i32
    %c0_i32_0 = arith.constant 0 : i32
    return %c0_i32, %arg1 : i32, i32
  }
  func.func @transform_3(%arg0: i32, %arg1: i32, %arg2: i32) -> (i32, i32) {
    %c0_i32 = arith.constant 0 : i32
    %c0_i32_0 = arith.constant 0 : i32
    return %c0_i32, %arg1 : i32, i32
  }
  func.func @transform_4(%arg0: i32, %arg1: i32, %arg2: i32) -> (i32, i32) {
    %c0_i32 = arith.constant 0 : i32
    return %arg0, %arg1 : i32, i32
  }
}

module attributes {stable_mosaic.version = 11 : i64} {
  func.func @_matmul_bn_relu_kernel(%arg0: i32, %arg1: i32, %arg2: i32, %arg3: memref<256x128xbf16, #tpu.memory_space<vmem>>, %arg4: memref<128x128xbf16, #tpu.memory_space<vmem>>, %arg5: memref<1x128xf32, #tpu.memory_space<vmem>>, %arg6: memref<1x128xf32, #tpu.memory_space<vmem>>, %arg7: memref<256x128xf32, #tpu.memory_space<vmem>>, %arg8: memref<256x128xf32, #tpu.memory_space<vmem>>) attributes {dimension_semantics = [#tpu.dimension_semantics<parallel>, #tpu.dimension_semantics<parallel>, #tpu.dimension_semantics<arbitrary>], iteration_bounds = array<i64: 2, 1, 1>, scalar_prefetch = 0 : i64, scratch_operands = 1 : i64, tpu.core_type = #tpu.core_type<tc>, window_params = [{transform_indices = @transform_0, window_bounds = array<i64: 256, 128>}, {transform_indices = @transform_1, window_bounds = array<i64: 128, 128>}, {transform_indices = @transform_2, window_bounds = array<i64: 1, 128>}, {transform_indices = @transform_3, window_bounds = array<i64: 1, 128>}, {transform_indices = @transform_4, window_bounds = array<i64: 256, 128>}]} {
    %c0_i32 = arith.constant 0 : i32
    %0 = arith.cmpi eq, %arg2, %c0_i32 : i32
    %1 = arith.extui %0 : i1 to i32
    %c0_i32_0 = arith.constant 0 : i32
    %2 = arith.cmpi ne, %1, %c0_i32_0 : i32
    scf.if %2 {
      %cst_10 = arith.constant 0.000000e+00 : f32
      %12 = vector.broadcast %cst_10 : f32 to vector<256x128xf32>
      %c0_11 = arith.constant 0 : index
      %c0_12 = arith.constant 0 : index
      %13 = vector.load %arg8[%c0_11, %c0_12] : memref<256x128xf32, #tpu.memory_space<vmem>>, vector<256x128xf32>
      tpu.vector_store %arg8[%c0_11, %c0_12], %12 {strides = array<i32>} : memref<256x128xf32, #tpu.memory_space<vmem>>, vector<256x128xf32>,
    } else {
    }
    %c0 = arith.constant 0 : index
    %c0_1 = arith.constant 0 : index
    %3 = vector.load %arg8[%c0, %c0_1] : memref<256x128xf32, #tpu.memory_space<vmem>>, vector<256x128xf32>
    %c0_2 = arith.constant 0 : index
    %c0_3 = arith.constant 0 : index
    %4 = vector.load %arg3[%c0_2, %c0_3] : memref<256x128xbf16, #tpu.memory_space<vmem>>, vector<256x128xbf16>
    %c0_4 = arith.constant 0 : index
    %c0_5 = arith.constant 0 : index
    %5 = vector.load %arg4[%c0_4, %c0_5] : memref<128x128xbf16, #tpu.memory_space<vmem>>, vector<128x128xbf16>
    %cst = arith.constant dense<0.000000e+00> : vector<256x128xf32>
    %6 = tpu.matmul %4, %5, %cst {dimension_numbers = #tpu.dot_dimension_numbers<[1], [0], [0], [1], [0, 0, 1, 1], [], []>} : vector<256x128xbf16>, vector<128x128xbf16>, vector<256x128xf32> -> vector<256x128xf32>
    %7 = arith.addf %3, %6 : vector<256x128xf32>
    %c0_6 = arith.constant 0 : index
    %c0_7 = arith.constant 0 : index
    %8 = vector.load %arg8[%c0_6, %c0_7] : memref<256x128xf32, #tpu.memory_space<vmem>>, vector<256x128xf32>
    tpu.vector_store %arg8[%c0_6, %c0_7], %7 {strides = array<i32>} : memref<256x128xf32, #tpu.memory_space<vmem>>, vector<256x128xf32>,
    %c0_i32_8 = arith.constant 0 : i32
    %9 = arith.cmpi eq, %arg2, %c0_i32_8 : i32
    %10 = arith.extui %9 : i1 to i32
    %c0_i32_9 = arith.constant 0 : i32
    %11 = arith.cmpi ne, %10, %c0_i32_9 : i32
    scf.if %11 {
      %c0_10 = arith.constant 0 : index
      %c0_11 = arith.constant 0 : index
      %12 = vector.load %arg8[%c0_10, %c0_11] : memref<256x128xf32, #tpu.memory_space<vmem>>, vector<256x128xf32>
      %c0_12 = arith.constant 0 : index
      %c0_13 = arith.constant 0 : index
      %13 = vector.load %arg5[%c0_12, %c0_13] : memref<1x128xf32, #tpu.memory_space<vmem>>, vector<1x128xf32>
      %14 = vector.broadcast %13 : vector<1x128xf32> to vector<256x128xf32>
      %15 = arith.mulf %12, %14 : vector<256x128xf32>
      %c0_14 = arith.constant 0 : index
      %c0_15 = arith.constant 0 : index
      %16 = vector.load %arg6[%c0_14, %c0_15] : memref<1x128xf32, #tpu.memory_space<vmem>>, vector<1x128xf32>
      %17 = vector.broadcast %16 : vector<1x128xf32> to vector<256x128xf32>
      %18 = arith.addf %15, %17 : vector<256x128xf32>
      %cst_16 = arith.constant 0.000000e+00 : f32
      %19 = vector.broadcast %cst_16 : f32 to vector<256x128xf32>
      %20 = arith.maximumf %18, %19 : vector<256x128xf32>
      %c0_17 = arith.constant 0 : index
      %c0_18 = arith.constant 0 : index
      %21 = vector.load %arg7[%c0_17, %c0_18] : memref<256x128xf32, #tpu.memory_space<vmem>>, vector<256x128xf32>
      tpu.vector_store %arg7[%c0_17, %c0_18], %20 {strides = array<i32>} : memref<256x128xf32, #tpu.memory_space<vmem>>, vector<256x128xf32>,
    } else {
    }
    return
  }
  func.func @transform_0(%arg0: i32, %arg1: i32, %arg2: i32) -> (i32, i32) {
    %c0_i32 = arith.constant 0 : i32
    return %arg0, %arg2 : i32, i32
  }
  func.func @transform_1(%arg0: i32, %arg1: i32, %arg2: i32) -> (i32, i32) {
    %c0_i32 = arith.constant 0 : i32
    return %arg2, %arg1 : i32, i32
  }
  func.func @transform_2(%arg0: i32, %arg1: i32, %arg2: i32) -> (i32, i32) {
    %c0_i32 = arith.constant 0 : i32
    %c0_i32_0 = arith.constant 0 : i32
    return %c0_i32, %arg1 : i32, i32
  }
  func.func @transform_3(%arg0: i32, %arg1: i32, %arg2: i32) -> (i32, i32) {
    %c0_i32 = arith.constant 0 : i32
    %c0_i32_0 = arith.constant 0 : i32
    return %c0_i32, %arg1 : i32, i32
  }
  func.func @transform_4(%arg0: i32, %arg1: i32, %arg2: i32) -> (i32, i32) {
    %c0_i32 = arith.constant 0 : i32
    return %arg0, %arg1 : i32, i32
  }
}

module attributes {stable_mosaic.version = 11 : i64} {
  func.func @_maxpool_kernel(%arg0: i32, %arg1: memref<104x9x4xf32, #tpu.memory_space<vmem>>, %arg2: memref<104x4xf32, #tpu.memory_space<vmem>>) attributes {dimension_semantics = [#tpu.dimension_semantics<parallel>], iteration_bounds = array<i64: 1>, scalar_prefetch = 0 : i64, scratch_operands = 0 : i64, tpu.core_type = #tpu.core_type<tc>, window_params = [{transform_indices = @transform_0, window_bounds = array<i64: 104, 9, 4>}, {transform_indices = @transform_1, window_bounds = array<i64: 104, 4>}]} {
    %c0 = arith.constant 0 : index
    %c0_0 = arith.constant 0 : index
    %c0_1 = arith.constant 0 : index
    %0 = vector.load %arg1[%c0, %c0_0, %c0_1] : memref<104x9x4xf32, #tpu.memory_space<vmem>>, vector<104x9x4xf32>
    %1 = vector.extract_strided_slice %0 {offsets = [0, 0, 0], sizes = [104, 1, 4], strides = [1, 1, 1]} : vector<104x9x4xf32> to vector<104x1x4xf32>
    %2 = vector.shape_cast %1 : vector<104x1x4xf32> to vector<104x4xf32>
    %3 = vector.extract_strided_slice %0 {offsets = [0, 1, 0], sizes = [104, 1, 4], strides = [1, 1, 1]} : vector<104x9x4xf32> to vector<104x1x4xf32>
    %4 = vector.shape_cast %3 : vector<104x1x4xf32> to vector<104x4xf32>
    %5 = arith.maximumf %2, %4 : vector<104x4xf32>
    %6 = vector.extract_strided_slice %0 {offsets = [0, 2, 0], sizes = [104, 1, 4], strides = [1, 1, 1]} : vector<104x9x4xf32> to vector<104x1x4xf32>
    %7 = vector.shape_cast %6 : vector<104x1x4xf32> to vector<104x4xf32>
    %8 = arith.maximumf %5, %7 : vector<104x4xf32>
    %9 = vector.extract_strided_slice %0 {offsets = [0, 3, 0], sizes = [104, 1, 4], strides = [1, 1, 1]} : vector<104x9x4xf32> to vector<104x1x4xf32>
    %10 = vector.shape_cast %9 : vector<104x1x4xf32> to vector<104x4xf32>
    %11 = arith.maximumf %8, %10 : vector<104x4xf32>
    %12 = vector.extract_strided_slice %0 {offsets = [0, 4, 0], sizes = [104, 1, 4], strides = [1, 1, 1]} : vector<104x9x4xf32> to vector<104x1x4xf32>
    %13 = vector.shape_cast %12 : vector<104x1x4xf32> to vector<104x4xf32>
    %14 = arith.maximumf %11, %13 : vector<104x4xf32>
    %15 = vector.extract_strided_slice %0 {offsets = [0, 5, 0], sizes = [104, 1, 4], strides = [1, 1, 1]} : vector<104x9x4xf32> to vector<104x1x4xf32>
    %16 = vector.shape_cast %15 : vector<104x1x4xf32> to vector<104x4xf32>
    %17 = arith.maximumf %14, %16 : vector<104x4xf32>
    %18 = vector.extract_strided_slice %0 {offsets = [0, 6, 0], sizes = [104, 1, 4], strides = [1, 1, 1]} : vector<104x9x4xf32> to vector<104x1x4xf32>
    %19 = vector.shape_cast %18 : vector<104x1x4xf32> to vector<104x4xf32>
    %20 = arith.maximumf %17, %19 : vector<104x4xf32>
    %21 = vector.extract_strided_slice %0 {offsets = [0, 7, 0], sizes = [104, 1, 4], strides = [1, 1, 1]} : vector<104x9x4xf32> to vector<104x1x4xf32>
    %22 = vector.shape_cast %21 : vector<104x1x4xf32> to vector<104x4xf32>
    %23 = arith.maximumf %20, %22 : vector<104x4xf32>
    %24 = vector.extract_strided_slice %0 {offsets = [0, 8, 0], sizes = [104, 1, 4], strides = [1, 1, 1]} : vector<104x9x4xf32> to vector<104x1x4xf32>
    %25 = vector.shape_cast %24 : vector<104x1x4xf32> to vector<104x4xf32>
    %26 = arith.maximumf %23, %25 : vector<104x4xf32>
    %c0_2 = arith.constant 0 : index
    %c0_3 = arith.constant 0 : index
    %27 = vector.load %arg2[%c0_2, %c0_3] : memref<104x4xf32, #tpu.memory_space<vmem>>, vector<104x4xf32>
    tpu.vector_store %arg2[%c0_2, %c0_3], %26 {strides = array<i32>} : memref<104x4xf32, #tpu.memory_space<vmem>>, vector<104x4xf32>,
    return
  }
  func.func @transform_0(%arg0: i32) -> (i32, i32, i32) {
    %c0_i32 = arith.constant 0 : i32
    %c0_i32_0 = arith.constant 0 : i32
    %c0_i32_1 = arith.constant 0 : i32
    return %arg0, %c0_i32, %c0_i32_0 : i32, i32, i32
  }
  func.func @transform_1(%arg0: i32) -> (i32, i32) {
    %c0_i32 = arith.constant 0 : i32
    %c0_i32_0 = arith.constant 0 : i32
    return %arg0, %c0_i32 : i32, i32
  }
}

</mosaic_0001>

<llo_original>
// kernel: reduction_a.8
$region0: #{reduction_a.8}
  #allocation0 [shape = 'u32[]', space=smem, size = 0x4, offset = 0x4, fixed_abs, tag = 'smem constant byte address 0x4 - core index']
  #allocation1 [shape = 'u32[144,128]{1,0:T(1,128)}', space=vmem, size = 0x12000, scoped, tag = 'internal scratch']
  #allocation2 [shape = 'f32[104,128]{1,0:T(8,128)}', space=vmem, size = 0xd000, scoped, tag = 'scratch operand']
  %s0 = inlined_call_operand.vmem [shape: bf16[104,128], index: 0, kind: input, shape index: {}]
  %s1 = inlined_call_operand.vmem [shape: bf16[128,128], index: 1, kind: input, shape index: {}]
  %s2 = inlined_call_operand.vmem [shape: f32[1,128], index: 2, kind: input, shape index: {}]
  %s3 = inlined_call_operand.vmem [shape: f32[1,128], index: 3, kind: input, shape index: {}]
  %s4 = inlined_call_operand.vmem [shape: f32[104,128], index: 4, kind: output, shape index: {}]
  %s5 = sld [smem:[#allocation0]]
  $region34: #{reduction_a.8} parent=0
    _
  %s7 = ssub.s32 1, %s5
  %s8 = scalar_select 0, %s7, %s5
  // Predicated region
  $region2: #{reduction_a.8} parent=0 // pred_check
    _
  $region3: #{reduction_a.8} parent=0 // pred_check_branch
    %10 = sbr.rel (0) target = $region5
  $region4: #{reduction_a.8} parent=0 // pred_region
    _
  $region5: #{reduction_a.8} parent=0 // pred_fallthru
    _
  // Predicated region
  $region6: #{reduction_a.8} parent=0 // pred_check
    _
  $region7: #{reduction_a.8} parent=0 // pred_check_branch
    %12 = sbr.rel (0) target = $region9
  $region8: #{reduction_a.8} parent=0 // pred_region
    _
  $region9: #{reduction_a.8} parent=0 // pred_fallthru
    _
  // Predicated region
  $region10: #{reduction_a.8} parent=0 // pred_check
    _
  $region11: #{reduction_a.8} parent=0 // pred_check_branch
    %14 = sbr.rel (0) target = $region13
  $region12: #{reduction_a.8} parent=0 // pred_region
    _
  $region13: #{reduction_a.8} parent=0 // pred_fallthru
    _
  // Predicated region
  $region14: #{reduction_a.8} parent=0 // pred_check
    _
  $region15: #{reduction_a.8} parent=0 // pred_check_branch
    %16 = sbr.rel (0) target = $region17
  $region16: #{reduction_a.8} parent=0 // pred_region
    _
  $region17: #{reduction_a.8} parent=0 // pred_fallthru
    _
  %p18 = scmp.eq.s32.totalorder 0, 0
  // Predicated region
  $region18: #{reduction_a.8} parent=0 // pred_check
    %p19 = pneg %p18
  $region19: #{reduction_a.8} parent=0 // pred_check_branch
    %21 = sbr.rel (%p19) target = $region21
  $region20: #{reduction_a.8} parent=0 // pred_region
    %22 = vst [vmem:[#allocation2] sm:$0xff] 0.0
    %23 = vst [vmem:[#allocation2 + $0x8] sm:$0xff] 0.0
    %24 = vst [vmem:[#allocation2 + $0x10] sm:$0xff] 0.0
    %25 = vst [vmem:[#allocation2 + $0x18] sm:$0xff] 0.0
    %26 = vst [vmem:[#allocation2 + $0x20] sm:$0xff] 0.0
    %27 = vst [vmem:[#allocation2 + $0x28] sm:$0xff] 0.0
    %28 = vst [vmem:[#allocation2 + $0x30] sm:$0xff] 0.0
    %29 = vst [vmem:[#allocation2 + $0x38] sm:$0xff] 0.0
    %30 = vst [vmem:[#allocation2 + $0x40] sm:$0xff] 0.0
    %31 = vst [vmem:[#allocation2 + $0x48] sm:$0xff] 0.0
    %32 = vst [vmem:[#allocation2 + $0x50] sm:$0xff] 0.0
    %33 = vst [vmem:[#allocation2 + $0x58] sm:$0xff] 0.0
    %34 = vst [vmem:[#allocation2 + $0x60] sm:$0xff] 0.0
  $region21: #{reduction_a.8} parent=0 // pred_fallthru
    _
  %v35 = vld [vmem:[#allocation2] sm:$0xff]
  %v36 = vld [vmem:[#allocation2 + $0x8] sm:$0xff]
  %v37 = vld [vmem:[#allocation2 + $0x10] sm:$0xff]
  %v38 = vld [vmem:[#allocation2 + $0x18] sm:$0xff]
  %v39 = vld [vmem:[#allocation2 + $0x20] sm:$0xff]
  %v40 = vld [vmem:[#allocation2 + $0x28] sm:$0xff]
  %v41 = vld [vmem:[#allocation2 + $0x30] sm:$0xff]
  %v42 = vld [vmem:[#allocation2 + $0x38] sm:$0xff]
  %v43 = vld [vmem:[#allocation2 + $0x40] sm:$0xff]
  %v44 = vld [vmem:[#allocation2 + $0x48] sm:$0xff]
  %v45 = vld [vmem:[#allocation2 + $0x50] sm:$0xff]
  %v46 = vld [vmem:[#allocation2 + $0x58] sm:$0xff]
  %v47 = vld [vmem:[#allocation2 + $0x60] sm:$0xff]
  %v48 = vld [vmem:[%s0] sm:$0xf]
  %v49 = vld [vmem:[%s0 + $0x4] sm:$0xf]
  %v50 = vld [vmem:[%s0 + $0x8] sm:$0xf]
  %v51 = vld [vmem:[%s0 + $0xc] sm:$0xf]
  %v52 = vld [vmem:[%s0 + $0x10] sm:$0xf]
  %v53 = vld [vmem:[%s0 + $0x14] sm:$0xf]
  %v54 = vld [vmem:[%s0 + $0x18] sm:$0xf]
  %v55 = vld [vmem:[%s0 + $0x1c] sm:$0xf]
  %v56 = vld [vmem:[%s0 + $0x20] sm:$0xf]
  %v57 = vld [vmem:[%s0 + $0x24] sm:$0xf]
  %v58 = vld [vmem:[%s0 + $0x28] sm:$0xf]
  %v59 = vld [vmem:[%s0 + $0x2c] sm:$0xf]
  %v60 = vld [vmem:[%s0 + $0x30] sm:$0xf]
  %v61 = vld [vmem:[%s1] sm:$0xf]
  %v62 = vld [vmem:[%s1 + $0x4] sm:$0xf]
  %v63 = vld [vmem:[%s1 + $0x8] sm:$0xf]
  %v64 = vld [vmem:[%s1 + $0xc] sm:$0xf]
  %v65 = vld [vmem:[%s1 + $0x10] sm:$0xf]
  %v66 = vld [vmem:[%s1 + $0x14] sm:$0xf]
  %v67 = vld [vmem:[%s1 + $0x18] sm:$0xf]
  %v68 = vld [vmem:[%s1 + $0x1c] sm:$0xf]
  %v69 = vld [vmem:[%s1 + $0x20] sm:$0xf]
  %v70 = vld [vmem:[%s1 + $0x24] sm:$0xf]
  %v71 = vld [vmem:[%s1 + $0x28] sm:$0xf]
  %v72 = vld [vmem:[%s1 + $0x2c] sm:$0xf]
  %v73 = vld [vmem:[%s1 + $0x30] sm:$0xf]
  %v74 = vld [vmem:[%s1 + $0x34] sm:$0xf]
  %v75 = vld [vmem:[%s1 + $0x38] sm:$0xf]
  %v76 = vld [vmem:[%s1 + $0x3c] sm:$0xf]
  %v90 = vunpack.c.l.b16 %v48
  %v91 = vunpack.c.l.b16 %v49
  %v92 = vunpack.c.l.b16 %v50
  %v93 = vunpack.c.l.b16 %v51
  %v94 = vunpack.c.l.b16 %v52
  %v95 = vunpack.c.l.b16 %v53
  %v96 = vunpack.c.l.b16 %v54
  %v97 = vunpack.c.l.b16 %v55
  %v98 = vunpack.c.l.b16 %v56
  %v99 = vunpack.c.l.b16 %v57
  %v100 = vunpack.c.l.b16 %v58
  %v101 = vunpack.c.l.b16 %v59
  %v102 = vunpack.c.l.b16 %v60
  %v103 = vpack.c.b16 %v91, %v90
  %v104 = vpack.c.b16 %v93, %v92
  %v105 = vpack.c.b16 %v95, %v94
  %v106 = vpack.c.b16 %v97, %v96
  %v107 = vpack.c.b16 %v99, %v98
  %v108 = vpack.c.b16 %v101, %v100
  %v109 = vpack.c.b16 %v102, %v102
  %v133 = vunpack.c.l.b16 %v61
  %v134 = vunpack.c.l.b16 %v62
  %v135 = vunpack.c.l.b16 %v63
  %v136 = vunpack.c.l.b16 %v64
  %v137 = vunpack.c.l.b16 %v65
  %v138 = vunpack.c.l.b16 %v66
  %v139 = vunpack.c.l.b16 %v67
  %v140 = vunpack.c.l.b16 %v68
  %v141 = vunpack.c.l.b16 %v69
  %v142 = vunpack.c.l.b16 %v70
  %v143 = vunpack.c.l.b16 %v71
  %v144 = vunpack.c.l.b16 %v72
  %v145 = vunpack.c.l.b16 %v73
  %v146 = vunpack.c.l.b16 %v74
  %v147 = vunpack.c.l.b16 %v75
  %v148 = vunpack.c.l.b16 %v76
  %v149 = vpack.c.b16 %v134, %v133
  %v150 = vpack.c.b16 %v136, %v135
  %v151 = vpack.c.b16 %v138, %v137
  %v152 = vpack.c.b16 %v140, %v139
  %v153 = vpack.c.b16 %v142, %v141
  %v154 = vpack.c.b16 %v144, %v143
  %v155 = vpack.c.b16 %v146, %v145
  %v156 = vpack.c.b16 %v148, %v147
  %165 = vmatprep.subr.bf16.mxu0 0
  %166 = vmatpush1.bf16.msra.mxu0 %v149
  %167 = vmatprep.subr.bf16.mxu0 0
  %168 = vmatpush1.bf16.msra.mxu0 %v150
  %169 = vmatprep.subr.bf16.mxu0 0
  %170 = vmatpush1.bf16.msra.mxu0 %v151
  %171 = vmatprep.subr.bf16.mxu0 0
  %172 = vmatpush1.bf16.msra.mxu0 %v152
  %173 = vmatprep.subr.bf16.mxu0 0
  %174 = vmatpush1.bf16.msra.mxu0 %v153
  %175 = vmatprep.subr.bf16.mxu0 0
  %176 = vmatpush1.bf16.msra.mxu0 %v154
  %177 = vmatprep.subr.bf16.mxu0 0
  %178 = vmatpush1.bf16.msra.mxu0 %v155
  %179 = vmatprep.subr.bf16.mxu0 0
  %180 = vmatpush1.bf16.msra.mxu0 %v156
  %181 = vmatprep.subr.bf16.mxu0 0
  %182 = vmatpush1.bf16.msra.mxu0 0
  %183 = vmatprep.subr.bf16.mxu0 0
  %184 = vmatpush1.bf16.msra.mxu0 0
  %185 = vmatprep.subr.bf16.mxu0 0
  %186 = vmatpush1.bf16.msra.mxu0 0
  %187 = vmatprep.subr.bf16.mxu0 0
  %188 = vmatpush1.bf16.msra.mxu0 0
  %189 = vmatprep.subr.bf16.mxu0 0
  %190 = vmatpush1.bf16.msra.mxu0 0
  %191 = vmatprep.subr.bf16.mxu0 0
  %192 = vmatpush1.bf16.msra.mxu0 0
  %193 = vmatprep.subr.bf16.mxu0 0
  %194 = vmatpush1.bf16.msra.mxu0 0
  %195 = vmatprep.subr.bf16.mxu0 0
  %196 = vmatpush1.bf16.msra.mxu0 0
  %197 = vmatprep.mubr.bf16.mxu0 0
  %198 = vmatmul.mubr.bf16.gmra.mrb[0].mxu0 %v103
  %v199 = vpop.f32.mrb[0].mxu0
  %v200 = vadd.f32 0.0, %v199
  %v201 = vpop.f32.mrb[0].mxu0
  %v202 = vpop.f32.mrb[0].mxu0
  %v203 = vadd.f32 0.0, %v202
  %v204 = vpop.f32.mrb[0].mxu0
  %205 = vmatprep.mubr.bf16.mxu0 0
  %206 = vmatmul.mubr.bf16.gmra.mrb[0].mxu0 %v104
  %v207 = vpop.f32.mrb[0].mxu0
  %v208 = vadd.f32 0.0, %v207
  %v209 = vpop.f32.mrb[0].mxu0
  %v210 = vpop.f32.mrb[0].mxu0
  %v211 = vadd.f32 0.0, %v210
  %v212 = vpop.f32.mrb[0].mxu0
  %213 = vmatprep.mubr.bf16.mxu0 0
  %214 = vmatmul.mubr.bf16.gmra.mrb[0].mxu0 %v105
  %v215 = vpop.f32.mrb[0].mxu0
  %v216 = vadd.f32 0.0, %v215
  %v217 = vpop.f32.mrb[0].mxu0
  %v218 = vpop.f32.mrb[0].mxu0
  %v219 = vadd.f32 0.0, %v218
  %v220 = vpop.f32.mrb[0].mxu0
  %221 = vmatprep.mubr.bf16.mxu0 0
  %222 = vmatmul.mubr.bf16.gmra.mrb[0].mxu0 %v106
  %v223 = vpop.f32.mrb[0].mxu0
  %v224 = vadd.f32 0.0, %v223
  %v225 = vpop.f32.mrb[0].mxu0
  %v226 = vpop.f32.mrb[0].mxu0
  %v227 = vadd.f32 0.0, %v226
  %v228 = vpop.f32.mrb[0].mxu0
  %229 = vmatprep.mubr.bf16.mxu0 0
  %230 = vmatmul.mubr.bf16.gmra.mrb[0].mxu0 %v107
  %v231 = vpop.f32.mrb[0].mxu0
  %v232 = vadd.f32 0.0, %v231
  %v233 = vpop.f32.mrb[0].mxu0
  %v234 = vpop.f32.mrb[0].mxu0
  %v235 = vadd.f32 0.0, %v234
  %v236 = vpop.f32.mrb[0].mxu0
  %237 = vmatprep.mubr.bf16.mxu0 0
  %238 = vmatmul.mubr.bf16.gmra.mrb[0].mxu0 %v108
  %v239 = vpop.f32.mrb[0].mxu0
  %v240 = vadd.f32 0.0, %v239
  %v241 = vpop.f32.mrb[0].mxu0
  %v242 = vpop.f32.mrb[0].mxu0
  %v243 = vadd.f32 0.0, %v242
  %v244 = vpop.f32.mrb[0].mxu0
  %245 = vmatprep.mubr.bf16.mxu0 0
  %246 = vmatmul.mubr.bf16.gmra.mrb[0].mxu0 %v109
  %v247 = vpop.f32.mrb[0].mxu0
  %v248 = vadd.f32 0.0, %v247
  %v249 = vpop.f32.mrb[0].mxu0
  %v250 = vpop.f32.mrb[0].mxu0
  %v251 = vpop.f32.mrb[0].mxu0
  %252 = vdwg.mxu0
  %v253 = vadd.f32 %v35, %v200
  %v254 = vadd.f32 %v36, %v203
  %v255 = vadd.f32 %v37, %v208
  %v256 = vadd.f32 %v38, %v211
  %v257 = vadd.f32 %v39, %v216
  %v258 = vadd.f32 %v40, %v219
  %v259 = vadd.f32 %v41, %v224
  %v260 = vadd.f32 %v42, %v227
  %v261 = vadd.f32 %v43, %v232
  %v262 = vadd.f32 %v44, %v235
  %v263 = vadd.f32 %v45, %v240
  %v264 = vadd.f32 %v46, %v243
  %v265 = vadd.f32 %v47, %v248
  %266 = vst [vmem:[#allocation2] sm:$0xff] %v253
  %267 = vst [vmem:[#allocation2 + $0x8] sm:$0xff] %v254
  %268 = vst [vmem:[#allocation2 + $0x10] sm:$0xff] %v255
  %269 = vst [vmem:[#allocation2 + $0x18] sm:$0xff] %v256
  %270 = vst [vmem:[#allocation2 + $0x20] sm:$0xff] %v257
  %271 = vst [vmem:[#allocation2 + $0x28] sm:$0xff] %v258
  %272 = vst [vmem:[#allocation2 + $0x30] sm:$0xff] %v259
  %273 = vst [vmem:[#allocation2 + $0x38] sm:$0xff] %v260
  %274 = vst [vmem:[#allocation2 + $0x40] sm:$0xff] %v261
  %275 = vst [vmem:[#allocation2 + $0x48] sm:$0xff] %v262
  %276 = vst [vmem:[#allocation2 + $0x50] sm:$0xff] %v263
  %277 = vst [vmem:[#allocation2 + $0x58] sm:$0xff] %v264
  %278 = vst [vmem:[#allocation2 + $0x60] sm:$0xff] %v265
  // Predicated region
  $region22: #{reduction_a.8} parent=0 // pred_check
    %p279 = pneg %p18
  $region23: #{reduction_a.8} parent=0 // pred_check_branch
    %281 = sbr.rel (%p279) target = $region25
  $region24: #{reduction_a.8} parent=0 // pred_region
    %v282 = vld [vmem:[#allocation2] sm:$0xff]
    %v283 = vld [vmem:[#allocation2 + $0x8] sm:$0xff]
    %v284 = vld [vmem:[#allocation2 + $0x10] sm:$0xff]
    %v285 = vld [vmem:[#allocation2 + $0x18] sm:$0xff]
    %v286 = vld [vmem:[#allocation2 + $0x20] sm:$0xff]
    %v287 = vld [vmem:[#allocation2 + $0x28] sm:$0xff]
    %v288 = vld [vmem:[#allocation2 + $0x30] sm:$0xff]
    %v289 = vld [vmem:[#allocation2 + $0x38] sm:$0xff]
    %v290 = vld [vmem:[#allocation2 + $0x40] sm:$0xff]
    %v291 = vld [vmem:[#allocation2 + $0x48] sm:$0xff]
    %v292 = vld [vmem:[#allocation2 + $0x50] sm:$0xff]
    %v293 = vld [vmem:[#allocation2 + $0x58] sm:$0xff]
    %v294 = vld [vmem:[#allocation2 + $0x60] sm:$0xff]
    %v295 = vld [vmem:[%s2] sm:$0x1]
    %v297 = vlaneseq
    %v298 = vshrl.u32 %v297, 7
    %v299 = vsub.s32 0, %v298
    %v300 = vrot.slane %v295, %v299
    %v302 = vmul.f32 %v282, %v300
    %v303 = vmul.f32 %v283, %v300
    %v304 = vmul.f32 %v284, %v300
    %v305 = vmul.f32 %v285, %v300
    %v306 = vmul.f32 %v286, %v300
    %v307 = vmul.f32 %v287, %v300
    %v308 = vmul.f32 %v288, %v300
    %v309 = vmul.f32 %v289, %v300
    %v310 = vmul.f32 %v290, %v300
    %v311 = vmul.f32 %v291, %v300
    %v312 = vmul.f32 %v292, %v300
    %v313 = vmul.f32 %v293, %v300
    %v314 = vmul.f32 %v294, %v300
    %v315 = vld [vmem:[%s3] sm:$0x1]
    %v317 = vlaneseq
    %v318 = vshrl.u32 %v317, 7
    %v319 = vsub.s32 0, %v318
    %v320 = vrot.slane %v315, %v319
    %v322 = vadd.f32 %v302, %v320
    %v323 = vadd.f32 %v303, %v320
    %v324 = vadd.f32 %v304, %v320
    %v325 = vadd.f32 %v305, %v320
    %v326 = vadd.f32 %v306, %v320
    %v327 = vadd.f32 %v307, %v320
    %v328 = vadd.f32 %v308, %v320
    %v329 = vadd.f32 %v309, %v320
    %v330 = vadd.f32 %v310, %v320
    %v331 = vadd.f32 %v311, %v320
    %v332 = vadd.f32 %v312, %v320
    %v333 = vadd.f32 %v313, %v320
    %v334 = vadd.f32 %v314, %v320
    %v335 = vmax.f32 %v322, 0.0
    %v336 = vmax.f32 %v323, 0.0
    %v337 = vmax.f32 %v324, 0.0
    %v338 = vmax.f32 %v325, 0.0
    %v339 = vmax.f32 %v326, 0.0
    %v340 = vmax.f32 %v327, 0.0
    %v341 = vmax.f32 %v328, 0.0
    %v342 = vmax.f32 %v329, 0.0
    %v343 = vmax.f32 %v330, 0.0
    %v344 = vmax.f32 %v331, 0.0
    %v345 = vmax.f32 %v332, 0.0
    %v346 = vmax.f32 %v333, 0.0
    %v347 = vmax.f32 %v334, 0.0
    %348 = vst [vmem:[%s4] sm:$0xff] %v335
    %349 = vst [vmem:[%s4 + $0x8] sm:$0xff] %v336
    %350 = vst [vmem:[%s4 + $0x10] sm:$0xff] %v337
    %351 = vst [vmem:[%s4 + $0x18] sm:$0xff] %v338
    %352 = vst [vmem:[%s4 + $0x20] sm:$0xff] %v339
    %353 = vst [vmem:[%s4 + $0x28] sm:$0xff] %v340
    %354 = vst [vmem:[%s4 + $0x30] sm:$0xff] %v341
    %355 = vst [vmem:[%s4 + $0x38] sm:$0xff] %v342
    %356 = vst [vmem:[%s4 + $0x40] sm:$0xff] %v343
    %357 = vst [vmem:[%s4 + $0x48] sm:$0xff] %v344
    %358 = vst [vmem:[%s4 + $0x50] sm:$0xff] %v345
    %359 = vst [vmem:[%s4 + $0x58] sm:$0xff] %v346
    %360 = vst [vmem:[%s4 + $0x60] sm:$0xff] %v347
  $region25: #{reduction_a.8} parent=0 // pred_fallthru
    _
  // Predicated region
  $region26: #{reduction_a.8} parent=0 // pred_check
    _
  $region27: #{reduction_a.8} parent=0 // pred_check_branch
    %362 = sbr.rel (0) target = $region29
  $region28: #{reduction_a.8} parent=0 // pred_region
    _
  $region29: #{reduction_a.8} parent=0 // pred_fallthru
    _
  // Predicated region
  $region30: #{reduction_a.8} parent=0 // pred_check
    _
  $region31: #{reduction_a.8} parent=0 // pred_check_branch
    %364 = sbr.rel (0) target = $region33
  $region32: #{reduction_a.8} parent=0 // pred_region
    _
  $region33: #{reduction_a.8} parent=0 // pred_fallthru
    _

// kernel: reduction_a.5
$region0: #{reduction_a.5}
  #allocation0 [shape = 'u32[]', space=smem, size = 0x4, offset = 0x4, fixed_abs, tag = 'smem constant byte address 0x4 - core index']
  #allocation1 [shape = 'u32[144,128]{1,0:T(1,128)}', space=vmem, size = 0x12000, scoped, tag = 'internal scratch']
  #allocation2 [shape = 'f32[256,128]{1,0:T(8,128)}', space=vmem, size = 0x20000, scoped, tag = 'scratch operand']
  %s0 = inlined_call_operand.vmem [shape: bf16[512,128], index: 0, kind: input, shape index: {}]
  %s1 = inlined_call_operand.vmem [shape: bf16[128,128], index: 1, kind: input, shape index: {}]
  %s2 = inlined_call_operand.vmem [shape: f32[1,128], index: 2, kind: input, shape index: {}]
  %s3 = inlined_call_operand.vmem [shape: f32[1,128], index: 3, kind: input, shape index: {}]
  %s4 = inlined_call_operand.vmem [shape: f32[512,128], index: 4, kind: output, shape index: {}]
  %s5 = sld [smem:[#allocation0]]
  $region57: #{reduction_a.5} parent=0
    _
  %s7 = ssub.s32 1, %s5
  %s8 = scalar_select 0, %s7, %s5
  loop: start=0, step=1, limit=4
  $region2: #{reduction_a.5} parent=0 // loop_pre_header
    _
  $region3: #{reduction_a.5} parent=0 // loop_header
    %s10 = sphi 0, %s14
    %p11 = scmp.ge.s32.totalorder %s10, 4
    %s17 = sphi 0, %s36
    %s18 = sphi 0, %s32
    %s19 = sphi 0, %s28
    %s20 = sphi 0, %s17
    %s21 = sphi 0, %s18
    %s22 = sphi 0, %s19
    %s23 = sphi 0, %s20
    %s24 = sphi 0, %s21
    %s25 = sphi 0, %s22
    %s41 = sphi 0, %s43
    %s44 = sphi 0, %s41
    %s45 = sphi 0, %s44
    %s61 = sphi 0, %s45
    %s69 = sphi 0, %s71
    %s72 = sphi 0, %s69
    %s73 = sphi 0, %s72
    %s89 = sphi 0, %s73
    %s95 = sphi 0, %s97
    %s98 = sphi 0, %s95
    %s99 = sphi 0, %s98
    %s115 = sphi 0, %s99
    %s121 = sphi 0, %s123
    %s124 = sphi 0, %s121
    %s125 = sphi 0, %s124
    %s141 = sphi 0, %s125
    %s149 = sphi 0, %s151
    %s152 = sphi 0, %s149
    %s153 = sphi 0, %s152
    %s169 = sphi 0, %s153
  $region4: #{reduction_a.5} parent=0 // loop_header_branch
    %13 = sbr.rel (%p11) target = $region8
  $region5: #{reduction_a.5} parent=0 // loop_body
    %s15 = ssub.s32 %s10, 1
    %s16 = ssub.s32 %s10, 2
    %s26 = sadd.s32 1, %s19
    %p27 = scmp.ge.s32.totalorder %s26, 1
    %s28 = scalar_select %p27, 0, %s26
    %s29 = sadd.s32 1, %s18
    %s30 = scalar_select %p27, %s29, %s18
    %p31 = scmp.ge.s32.totalorder %s30, 1
    %s32 = scalar_select %p31, 0, %s30
    %s33 = sadd.s32 1, %s17
    %s34 = scalar_select %p31, %s33, %s17
    %p35 = scmp.ge.s32.totalorder %s34, 2
    %s36 = scalar_select %p35, 0, %s34
    %s37 = ssub.s32 %s17, %s36
    %s38 = ssub.s32 %s19, %s28
    %s39 = sor.u32 %s37, %s38
    %p40 = scmp.eq.s32.totalorder %s39, 0
    %s42 = sadd.s32 %s41, 1
    %s43 = scalar_select %p40, %s41, %s42
    %p46 = pneg %p40
    %p47 = scmp.eq.s32.totalorder %s10, 1
    %p48 = por %p46, %p47
    %p49 = scmp.ne.s32.totalorder %s41, %s44
    %p50 = scmp.eq.s32.totalorder %s10, 0
    %p51 = por %p49, %p50
    %p52 = scmp.ne.s32.totalorder %s41, %s44
    %p53 = scmp.eq.s32.totalorder %s15, 1
    %p54 = por %p52, %p53
    %p55 = scmp.ne.s32.totalorder %s44, %s45
    %p56 = scmp.eq.s32.totalorder %s15, 0
    %p57 = por %p55, %p56
    %p58 = scmp.ne.s32.totalorder %s44, %s45
    %p59 = scmp.eq.s32.totalorder %s16, 1
    %p60 = por %p58, %p59
    %p62 = scmp.ne.s32.totalorder %s45, %s61
    %p63 = scmp.eq.s32.totalorder %s16, 0
    %p64 = por %p62, %p63
    %s65 = ssub.s32 %s19, %s28
    %s66 = ssub.s32 %s18, %s32
    %s67 = sor.u32 %s65, %s66
    %p68 = scmp.eq.s32.totalorder %s67, 0
    %s70 = sadd.s32 %s69, 1
    %s71 = scalar_select %p68, %s69, %s70
    %p74 = pneg %p68
    %p75 = scmp.eq.s32.totalorder %s10, 1
    %p76 = por %p74, %p75
    %p77 = scmp.ne.s32.totalorder %s69, %s72
    %p78 = scmp.eq.s32.totalorder %s10, 0
    %p79 = por %p77, %p78
    %p80 = scmp.ne.s32.totalorder %s69, %s72
    %p81 = scmp.eq.s32.totalorder %s15, 1
    %p82 = por %p80, %p81
    %p83 = scmp.ne.s32.totalorder %s72, %s73
    %p84 = scmp.eq.s32.totalorder %s15, 0
    %p85 = por %p83, %p84
    %p86 = scmp.ne.s32.totalorder %s72, %s73
    %p87 = scmp.eq.s32.totalorder %s16, 1
    %p88 = por %p86, %p87
    %p90 = scmp.ne.s32.totalorder %s73, %s89
    %p91 = scmp.eq.s32.totalorder %s16, 0
    %p92 = por %p90, %p91
    %s93 = ssub.s32 %s18, %s32
    %p94 = scmp.eq.s32.totalorder %s93, 0
    %s96 = sadd.s32 %s95, 1
    %s97 = scalar_select %p94, %s95, %s96
    %p100 = pneg %p94
    %p101 = scmp.eq.s32.totalorder %s10, 1
    %p102 = por %p100, %p101
    %p103 = scmp.ne.s32.totalorder %s95, %s98
    %p104 = scmp.eq.s32.totalorder %s10, 0
    %p105 = por %p103, %p104
    %p106 = scmp.ne.s32.totalorder %s95, %s98
    %p107 = scmp.eq.s32.totalorder %s15, 1
    %p108 = por %p106, %p107
    %p109 = scmp.ne.s32.totalorder %s98, %s99
    %p110 = scmp.eq.s32.totalorder %s15, 0
    %p111 = por %p109, %p110
    %p112 = scmp.ne.s32.totalorder %s98, %s99
    %p113 = scmp.eq.s32.totalorder %s16, 1
    %p114 = por %p112, %p113
    %p116 = scmp.ne.s32.totalorder %s99, %s115
    %p117 = scmp.eq.s32.totalorder %s16, 0
    %p118 = por %p116, %p117
    %s119 = ssub.s32 %s18, %s32
    %p120 = scmp.eq.s32.totalorder %s119, 0
    %s122 = sadd.s32 %s121, 1
    %s123 = scalar_select %p120, %s121, %s122
    %p126 = pneg %p120
    %p127 = scmp.eq.s32.totalorder %s10, 1
    %p128 = por %p126, %p127
    %p129 = scmp.ne.s32.totalorder %s121, %s124
    %p130 = scmp.eq.s32.totalorder %s10, 0
    %p131 = por %p129, %p130
    %p132 = scmp.ne.s32.totalorder %s121, %s124
    %p133 = scmp.eq.s32.totalorder %s15, 1
    %p134 = por %p132, %p133
    %p135 = scmp.ne.s32.totalorder %s124, %s125
    %p136 = scmp.eq.s32.totalorder %s15, 0
    %p137 = por %p135, %p136
    %p138 = scmp.ne.s32.totalorder %s124, %s125
    %p139 = scmp.eq.s32.totalorder %s16, 1
    %p140 = por %p138, %p139
    %p142 = scmp.ne.s32.totalorder %s125, %s141
    %p143 = scmp.eq.s32.totalorder %s16, 0
    %p144 = por %p142, %p143
    %s145 = ssub.s32 %s17, %s36
    %s146 = ssub.s32 %s18, %s32
    %s147 = sor.u32 %s145, %s146
    %p148 = scmp.eq.s32.totalorder %s147, 0
    %s150 = sadd.s32 %s149, 1
    %s151 = scalar_select %p148, %s149, %s150
    %p154 = pneg %p148
    %p155 = scmp.eq.s32.totalorder %s10, 1
    %p156 = por %p154, %p155
    %p157 = scmp.ne.s32.totalorder %s149, %s152
    %p158 = scmp.eq.s32.totalorder %s10, 0
    %p159 = por %p157, %p158
    %p160 = scmp.ne.s32.totalorder %s149, %s152
    %p161 = scmp.eq.s32.totalorder %s15, 1
    %p162 = por %p160, %p161
    %p163 = scmp.ne.s32.totalorder %s152, %s153
    %p164 = scmp.eq.s32.totalorder %s15, 0
    %p165 = por %p163, %p164
    %p166 = scmp.ne.s32.totalorder %s152, %s153
    %p167 = scmp.eq.s32.totalorder %s16, 1
    %p168 = por %p166, %p167
    %p170 = scmp.ne.s32.totalorder %s153, %s169
    %p171 = scmp.eq.s32.totalorder %s16, 0
    %p172 = por %p170, %p171
    %p173 = scmp.le.s32.totalorder 1, %s10
    %p174 = scmp.lt.s32.totalorder %s10, 3
    %p175 = pnand %p173, %p174
    %p176 = pneg %p175
    // Predicated region
    $region9: #{reduction_a.5} parent=5 // pred_check
      _
    $region10: #{reduction_a.5} parent=5 // pred_check_branch
      %178 = sbr.rel (%p175) target = $region12
    $region11: #{reduction_a.5} parent=5 // pred_region
      %s179 = ssub.s32 %s10, 1
      // Predicated region
      $region13: #{reduction_a.5} parent=11 // pred_check
        %p180 = pneg %p85
      $region14: #{reduction_a.5} parent=11 // pred_check_branch
        %182 = sbr.rel (%p180) target = $region16
      $region15: #{reduction_a.5} parent=11 // pred_region
        %s183 = smul.u32 16, %s22
        %p184 = scmp.lt.s32.totalorder %s183, 15
        %s185 = scalar_select %p184, %s183, 15
        %p186 = scmp.lt.s32.totalorder %s21, 0
        %s187 = scalar_select %p186, %s21, 0
        %s188 = sadd.s32 %s187, %s185
        %s189 = smul.addr %s188, 4
        %s190 = scalar_lea.vmem %s1, %s189
        %s191 = smul.u32 16, %s22
      $region16: #{reduction_a.5} parent=11 // pred_fallthru
        _
      // Predicated region
      $region17: #{reduction_a.5} parent=11 // pred_check
        %p192 = pneg %p111
      $region18: #{reduction_a.5} parent=11 // pred_check_branch
        %194 = sbr.rel (%p192) target = $region20
      $region19: #{reduction_a.5} parent=11 // pred_region
        %p195 = scmp.lt.s32.totalorder %s21, 0
        %s196 = scalar_select %p195, %s21, 0
        %s197 = scalar_lea.vmem %s2, %s196
      $region20: #{reduction_a.5} parent=11 // pred_fallthru
        _
      // Predicated region
      $region21: #{reduction_a.5} parent=11 // pred_check
        %p198 = pneg %p137
      $region22: #{reduction_a.5} parent=11 // pred_check_branch
        %200 = sbr.rel (%p198) target = $region24
      $region23: #{reduction_a.5} parent=11 // pred_region
        %p201 = scmp.lt.s32.totalorder %s21, 0
        %s202 = scalar_select %p201, %s21, 0
        %s203 = scalar_lea.vmem %s3, %s202
      $region24: #{reduction_a.5} parent=11 // pred_fallthru
        _
    $region12: #{reduction_a.5} parent=5 // pred_fallthru
      _
    %p204 = scmp.lt.s32.totalorder %s10, 2
    // Predicated region
    $region25: #{reduction_a.5} parent=5 // pred_check
      %p205 = pneg %p204
    $region26: #{reduction_a.5} parent=5 // pred_check_branch
      %207 = sbr.rel (%p205) target = $region28
    $region27: #{reduction_a.5} parent=5 // pred_region
      // Predicated region
      $region29: #{reduction_a.5} parent=27 // pred_check
        %p208 = pneg %p51
      $region30: #{reduction_a.5} parent=27 // pred_check_branch
        %210 = sbr.rel (%p208) target = $region32
      $region31: #{reduction_a.5} parent=27 // pred_region
        %s211 = smul.u32 32, %s17
        %p212 = scmp.lt.s32.totalorder %s211, 63
        %s213 = scalar_select %p212, %s211, 63
        %p214 = scmp.lt.s32.totalorder %s19, 0
        %s215 = scalar_select %p214, %s19, 0
        %s216 = sadd.s32 %s215, %s213
        %s217 = smul.addr %s216, 4
        %s218 = scalar_lea.vmem %s0, %s217
        %s219 = smul.u32 32, %s17
      $region32: #{reduction_a.5} parent=27 // pred_fallthru
        _
    $region28: #{reduction_a.5} parent=5 // pred_fallthru
      _
    %p220 = scmp.le.s32.totalorder 1, %s10
    %p221 = scmp.lt.s32.totalorder %s10, 3
    %p222 = pnand %p220, %p221
    %p223 = pneg %p222
    // Predicated region
    $region33: #{reduction_a.5} parent=5 // pred_check
      _
    $region34: #{reduction_a.5} parent=5 // pred_check_branch
      %225 = sbr.rel (%p222) target = $region36
    $region35: #{reduction_a.5} parent=5 // pred_region
      %s226 = ssub.s32 %s10, 1
      %s227 = smul.u32 32, %s20
      %p228 = scmp.lt.s32.totalorder %s227, 63
      %s229 = scalar_select %p228, %s227, 63
      %p230 = scmp.lt.s32.totalorder %s22, 0
      %s231 = scalar_select %p230, %s22, 0
      %s232 = sadd.s32 %s231, %s229
      %s233 = smul.addr %s232, 4
      %s234 = scalar_lea.vmem %s0, %s233
      %p235 = pneg %p57
      %p236 = pneg %p54
      %s237 = smul.u32 16, %s22
      %p238 = scmp.lt.s32.totalorder %s237, 15
      %s239 = scalar_select %p238, %s237, 15
      %p240 = scmp.lt.s32.totalorder %s21, 0
      %s241 = scalar_select %p240, %s21, 0
      %s242 = sadd.s32 %s241, %s239
      %s243 = smul.addr %s242, 4
      %s244 = scalar_lea.vmem %s1, %s243
      %p245 = pneg %p85
      %p246 = pneg %p82
      %p247 = scmp.lt.s32.totalorder %s21, 0
      %s248 = scalar_select %p247, %s21, 0
      %s249 = scalar_lea.vmem %s2, %s248
      %p250 = pneg %p111
      %p251 = pneg %p108
      %p252 = scmp.lt.s32.totalorder %s21, 0
      %s253 = scalar_select %p252, %s21, 0
      %s254 = scalar_lea.vmem %s3, %s253
      %p255 = pneg %p137
      %p256 = pneg %p134
      %p257 = pneg %p165
      %p258 = pneg %p162
      %s259 = smul.u32 32, %s20
      %p260 = scmp.lt.s32.totalorder %s259, 63
      %s261 = scalar_select %p260, %s259, 63
      %p262 = scmp.lt.s32.totalorder %s21, 0
      %s263 = scalar_select %p262, %s21, 0
      %s264 = sadd.s32 %s263, %s261
      %s265 = smul.addr %s264, 8
      %s266 = scalar_lea.vmem %s4, %s265
      %s267 = smul.u32 32, %s20
      %p268 = scmp.lt.s32.totalorder %s267, 63
      %s269 = scalar_select %p268, %s267, 63
      %p270 = scmp.lt.s32.totalorder %s22, 0
      %s271 = scalar_select %p270, %s22, 0
      %s272 = sadd.s32 %s271, %s269
      %s273 = smul.addr %s272, 4
      %s274 = scalar_lea.vmem %s0, %s273
      %s275 = smul.u32 32, %s20
      %s276 = smul.u32 16, %s22
      %p277 = scmp.lt.s32.totalorder %s276, 15
      %s278 = scalar_select %p277, %s276, 15
      %p279 = scmp.lt.s32.totalorder %s21, 0
      %s280 = scalar_select %p279, %s21, 0
      %s281 = sadd.s32 %s280, %s278
      %s282 = smul.addr %s281, 4
      %s283 = scalar_lea.vmem %s1, %s282
      %s284 = smul.u32 16, %s22
      %p285 = scmp.lt.s32.totalorder %s21, 0
      %s286 = scalar_select %p285, %s21, 0
      %s287 = scalar_lea.vmem %s2, %s286
      %p288 = scmp.lt.s32.totalorder %s21, 0
      %s289 = scalar_select %p288, %s21, 0
      %s290 = scalar_lea.vmem %s3, %s289
      %s291 = smul.u32 32, %s20
      %p292 = scmp.lt.s32.totalorder %s291, 63
      %s293 = scalar_select %p292, %s291, 63
      %p294 = scmp.lt.s32.totalorder %s21, 0
      %s295 = scalar_select %p294, %s21, 0
      %s296 = sadd.s32 %s295, %s293
      %s297 = smul.addr %s296, 8
      %s298 = scalar_lea.vmem %s4, %s297
      %s299 = smul.u32 32, %s20
      %p301 = scmp.eq.s32.totalorder %s22, 0
      // Predicated region
      $region37: #{reduction_a.5} parent=35 // pred_check
        %p302 = pneg %p301
      $region38: #{reduction_a.5} parent=35 // pred_check_branch
        %304 = sbr.rel (%p302) target = $region40
      $region39: #{reduction_a.5} parent=35 // pred_region
        %305 = vst [vmem:[#allocation2] sm:$0xff] 0.0
        %306 = vst [vmem:[#allocation2 + $0x8] sm:$0xff] 0.0
        %307 = vst [vmem:[#allocation2 + $0x10] sm:$0xff] 0.0
        %308 = vst [vmem:[#allocation2 + $0x18] sm:$0xff] 0.0
        %309 = vst [vmem:[#allocation2 + $0x20] sm:$0xff] 0.0
        %310 = vst [vmem:[#allocation2 + $0x28] sm:$0xff] 0.0
        %311 = vst [vmem:[#allocation2 + $0x30] sm:$0xff] 0.0
        %312 = vst [vmem:[#allocation2 + $0x38] sm:$0xff] 0.0
        %313 = vst [vmem:[#allocation2 + $0x40] sm:$0xff] 0.0
        %314 = vst [vmem:[#allocation2 + $0x48] sm:$0xff] 0.0
        %315 = vst [vmem:[#allocation2 + $0x50] sm:$0xff] 0.0
        %316 = vst [vmem:[#allocation2 + $0x58] sm:$0xff] 0.0
        %317 = vst [vmem:[#allocation2 + $0x60] sm:$0xff] 0.0
        %318 = vst [vmem:[#allocation2 + $0x68] sm:$0xff] 0.0
        %319 = vst [vmem:[#allocation2 + $0x70] sm:$0xff] 0.0
        %320 = vst [vmem:[#allocation2 + $0x78] sm:$0xff] 0.0
        %321 = vst [vmem:[#allocation2 + $0x80] sm:$0xff] 0.0
        %322 = vst [vmem:[#allocation2 + $0x88] sm:$0xff] 0.0
        %323 = vst [vmem:[#allocation2 + $0x90] sm:$0xff] 0.0
        %324 = vst [vmem:[#allocation2 + $0x98] sm:$0xff] 0.0
        %325 = vst [vmem:[#allocation2 + $0xa0] sm:$0xff] 0.0
        %326 = vst [vmem:[#allocation2 + $0xa8] sm:$0xff] 0.0
        %327 = vst [vmem:[#allocation2 + $0xb0] sm:$0xff] 0.0
        %328 = vst [vmem:[#allocation2 + $0xb8] sm:$0xff] 0.0
        %329 = vst [vmem:[#allocation2 + $0xc0] sm:$0xff] 0.0
        %330 = vst [vmem:[#allocation2 + $0xc8] sm:$0xff] 0.0
        %331 = vst [vmem:[#allocation2 + $0xd0] sm:$0xff] 0.0
        %332 = vst [vmem:[#allocation2 + $0xd8] sm:$0xff] 0.0
        %333 = vst [vmem:[#allocation2 + $0xe0] sm:$0xff] 0.0
        %334 = vst [vmem:[#allocation2 + $0xe8] sm:$0xff] 0.0
        %335 = vst [vmem:[#allocation2 + $0xf0] sm:$0xff] 0.0
        %336 = vst [vmem:[#allocation2 + $0xf8] sm:$0xff] 0.0
      $region40: #{reduction_a.5} parent=35 // pred_fallthru
        _
      %v337 = vld [vmem:[#allocation2] sm:$0xff]
      %v338 = vld [vmem:[#allocation2 + $0x8] sm:$0xff]
      %v339 = vld [vmem:[#allocation2 + $0x10] sm:$0xff]
      %v340 = vld [vmem:[#allocation2 + $0x18] sm:$0xff]
      %v341 = vld [vmem:[#allocation2 + $0x20] sm:$0xff]
      %v342 = vld [vmem:[#allocation2 + $0x28] sm:$0xff]
      %v343 = vld [vmem:[#allocation2 + $0x30] sm:$0xff]
      %v344 = vld [vmem:[#allocation2 + $0x38] sm:$0xff]
      %v345 = vld [vmem:[#allocation2 + $0x40] sm:$0xff]
      %v346 = vld [vmem:[#allocation2 + $0x48] sm:$0xff]
      %v347 = vld [vmem:[#allocation2 + $0x50] sm:$0xff]
      %v348 = vld [vmem:[#allocation2 + $0x58] sm:$0xff]
      %v349 = vld [vmem:[#allocation2 + $0x60] sm:$0xff]
      %v350 = vld [vmem:[#allocation2 + $0x68] sm:$0xff]
      %v351 = vld [vmem:[#allocation2 + $0x70] sm:$0xff]
      %v352 = vld [vmem:[#allocation2 + $0x78] sm:$0xff]
      %v353 = vld [vmem:[#allocation2 + $0x80] sm:$0xff]
      %v354 = vld [vmem:[#allocation2 + $0x88] sm:$0xff]
      %v355 = vld [vmem:[#allocation2 + $0x90] sm:$0xff]
      %v356 = vld [vmem:[#allocation2 + $0x98] sm:$0xff]
      %v357 = vld [vmem:[#allocation2 + $0xa0] sm:$0xff]
      %v358 = vld [vmem:[#allocation2 + $0xa8] sm:$0xff]
      %v359 = vld [vmem:[#allocation2 + $0xb0] sm:$0xff]
      %v360 = vld [vmem:[#allocation2 + $0xb8] sm:$0xff]
      %v361 = vld [vmem:[#allocation2 + $0xc0] sm:$0xff]
      %v362 = vld [vmem:[#allocation2 + $0xc8] sm:$0xff]
      %v363 = vld [vmem:[#allocation2 + $0xd0] sm:$0xff]
      %v364 = vld [vmem:[#allocation2 + $0xd8] sm:$0xff]
      %v365 = vld [vmem:[#allocation2 + $0xe0] sm:$0xff]
      %v366 = vld [vmem:[#allocation2 + $0xe8] sm:$0xff]
      %v367 = vld [vmem:[#allocation2 + $0xf0] sm:$0xff]
      %v368 = vld [vmem:[#allocation2 + $0xf8] sm:$0xff]
      %v369 = vld [vmem:[%s274] sm:$0xf]
      %v370 = vld [vmem:[%s274 + $0x4] sm:$0xf]
      %v371 = vld [vmem:[%s274 + $0x8] sm:$0xf]
      %v372 = vld [vmem:[%s274 + $0xc] sm:$0xf]
      %v373 = vld [vmem:[%s274 + $0x10] sm:$0xf]
      %v374 = vld [vmem:[%s274 + $0x14] sm:$0xf]
      %v375 = vld [vmem:[%s274 + $0x18] sm:$0xf]
      %v376 = vld [vmem:[%s274 + $0x1c] sm:$0xf]
      %v377 = vld [vmem:[%s274 + $0x20] sm:$0xf]
      %v378 = vld [vmem:[%s274 + $0x24] sm:$0xf]
      %v379 = vld [vmem:[%s274 + $0x28] sm:$0xf]
      %v380 = vld [vmem:[%s274 + $0x2c] sm:$0xf]
      %v381 = vld [vmem:[%s274 + $0x30] sm:$0xf]
      %v382 = vld [vmem:[%s274 + $0x34] sm:$0xf]
      %v383 = vld [vmem:[%s274 + $0x38] sm:$0xf]
      %v384 = vld [vmem:[%s274 + $0x3c] sm:$0xf]
      %v385 = vld [vmem:[%s274 + $0x40] sm:$0xf]
      %v386 = vld [vmem:[%s274 + $0x44] sm:$0xf]
      %v387 = vld [vmem:[%s274 + $0x48] sm:$0xf]
      %v388 = vld [vmem:[%s274 + $0x4c] sm:$0xf]
      %v389 = vld [vmem:[%s274 + $0x50] sm:$0xf]
      %v390 = vld [vmem:[%s274 + $0x54] sm:$0xf]
      %v391 = vld [vmem:[%s274 + $0x58] sm:$0xf]
      %v392 = vld [vmem:[%s274 + $0x5c] sm:$0xf]
      %v393 = vld [vmem:[%s274 + $0x60] sm:$0xf]
      %v394 = vld [vmem:[%s274 + $0x64] sm:$0xf]
      %v395 = vld [vmem:[%s274 + $0x68] sm:$0xf]
      %v396 = vld [vmem:[%s274 + $0x6c] sm:$0xf]
      %v397 = vld [vmem:[%s274 + $0x70] sm:$0xf]
      %v398 = vld [vmem:[%s274 + $0x74] sm:$0xf]
      %v399 = vld [vmem:[%s274 + $0x78] sm:$0xf]
      %v400 = vld [vmem:[%s274 + $0x7c] sm:$0xf]
      %v401 = vld [vmem:[%s283] sm:$0xf]
      %v402 = vld [vmem:[%s283 + $0x4] sm:$0xf]
      %v403 = vld [vmem:[%s283 + $0x8] sm:$0xf]
      %v404 = vld [vmem:[%s283 + $0xc] sm:$0xf]
      %v405 = vld [vmem:[%s283 + $0x10] sm:$0xf]
      %v406 = vld [vmem:[%s283 + $0x14] sm:$0xf]
      %v407 = vld [vmem:[%s283 + $0x18] sm:$0xf]
      %v408 = vld [vmem:[%s283 + $0x1c] sm:$0xf]
      %v409 = vld [vmem:[%s283 + $0x20] sm:$0xf]
      %v410 = vld [vmem:[%s283 + $0x24] sm:$0xf]
      %v411 = vld [vmem:[%s283 + $0x28] sm:$0xf]
      %v412 = vld [vmem:[%s283 + $0x2c] sm:$0xf]
      %v413 = vld [vmem:[%s283 + $0x30] sm:$0xf]
      %v414 = vld [vmem:[%s283 + $0x34] sm:$0xf]
      %v415 = vld [vmem:[%s283 + $0x38] sm:$0xf]
      %v416 = vld [vmem:[%s283 + $0x3c] sm:$0xf]
      %v449 = vunpack.c.l.b16 %v369
      %v450 = vunpack.c.l.b16 %v370
      %v451 = vunpack.c.l.b16 %v371
      %v452 = vunpack.c.l.b16 %v372
      %v453 = vunpack.c.l.b16 %v373
      %v454 = vunpack.c.l.b16 %v374
      %v455 = vunpack.c.l.b16 %v375
      %v456 = vunpack.c.l.b16 %v376
      %v457 = vunpack.c.l.b16 %v377
      %v458 = vunpack.c.l.b16 %v378
      %v459 = vunpack.c.l.b16 %v379
      %v460 = vunpack.c.l.b16 %v380
      %v461 = vunpack.c.l.b16 %v381
      %v462 = vunpack.c.l.b16 %v382
      %v463 = vunpack.c.l.b16 %v383
      %v464 = vunpack.c.l.b16 %v384
      %v465 = vunpack.c.l.b16 %v385
      %v466 = vunpack.c.l.b16 %v386
      %v467 = vunpack.c.l.b16 %v387
      %v468 = vunpack.c.l.b16 %v388
      %v469 = vunpack.c.l.b16 %v389
      %v470 = vunpack.c.l.b16 %v390
      %v471 = vunpack.c.l.b16 %v391
      %v472 = vunpack.c.l.b16 %v392
      %v473 = vunpack.c.l.b16 %v393
      %v474 = vunpack.c.l.b16 %v394
      %v475 = vunpack.c.l.b16 %v395
      %v476 = vunpack.c.l.b16 %v396
      %v477 = vunpack.c.l.b16 %v397
      %v478 = vunpack.c.l.b16 %v398
      %v479 = vunpack.c.l.b16 %v399
      %v480 = vunpack.c.l.b16 %v400
      %v481 = vpack.c.b16 %v450, %v449
      %v482 = vpack.c.b16 %v452, %v451
      %v483 = vpack.c.b16 %v454, %v453
      %v484 = vpack.c.b16 %v456, %v455
      %v485 = vpack.c.b16 %v458, %v457
      %v486 = vpack.c.b16 %v460, %v459
      %v487 = vpack.c.b16 %v462, %v461
      %v488 = vpack.c.b16 %v464, %v463
      %v489 = vpack.c.b16 %v466, %v465
      %v490 = vpack.c.b16 %v468, %v467
      %v491 = vpack.c.b16 %v470, %v469
      %v492 = vpack.c.b16 %v472, %v471
      %v493 = vpack.c.b16 %v474, %v473
      %v494 = vpack.c.b16 %v476, %v475
      %v495 = vpack.c.b16 %v478, %v477
      %v496 = vpack.c.b16 %v480, %v479
      %v529 = vunpack.c.l.b16 %v401
      %v530 = vunpack.c.l.b16 %v402
      %v531 = vunpack.c.l.b16 %v403
      %v532 = vunpack.c.l.b16 %v404
      %v533 = vunpack.c.l.b16 %v405
      %v534 = vunpack.c.l.b16 %v406
      %v535 = vunpack.c.l.b16 %v407
      %v536 = vunpack.c.l.b16 %v408
      %v537 = vunpack.c.l.b16 %v409
      %v538 = vunpack.c.l.b16 %v410
      %v539 = vunpack.c.l.b16 %v411
      %v540 = vunpack.c.l.b16 %v412
      %v541 = vunpack.c.l.b16 %v413
      %v542 = vunpack.c.l.b16 %v414
      %v543 = vunpack.c.l.b16 %v415
      %v544 = vunpack.c.l.b16 %v416
      %v545 = vpack.c.b16 %v530, %v529
      %v546 = vpack.c.b16 %v532, %v531
      %v547 = vpack.c.b16 %v534, %v533
      %v548 = vpack.c.b16 %v536, %v535
      %v549 = vpack.c.b16 %v538, %v537
      %v550 = vpack.c.b16 %v540, %v539
      %v551 = vpack.c.b16 %v542, %v541
      %v552 = vpack.c.b16 %v544, %v543
      %561 = vmatprep.subr.bf16.mxu0 0
      %562 = vmatpush1.bf16.msra.mxu0 %v545
      %563 = vmatprep.subr.bf16.mxu0 0
      %564 = vmatpush1.bf16.msra.mxu0 %v546
      %565 = vmatprep.subr.bf16.mxu0 0
      %566 = vmatpush1.bf16.msra.mxu0 %v547
      %567 = vmatprep.subr.bf16.mxu0 0
      %568 = vmatpush1.bf16.msra.mxu0 %v548
      %569 = vmatprep.subr.bf16.mxu0 0
      %570 = vmatpush1.bf16.msra.mxu0 %v549
      %571 = vmatprep.subr.bf16.mxu0 0
      %572 = vmatpush1.bf16.msra.mxu0 %v550
      %573 = vmatprep.subr.bf16.mxu0 0
      %574 = vmatpush1.bf16.msra.mxu0 %v551
      %575 = vmatprep.subr.bf16.mxu0 0
      %576 = vmatpush1.bf16.msra.mxu0 %v552
      %577 = vmatprep.subr.bf16.mxu0 0
      %578 = vmatpush1.bf16.msra.mxu0 0
      %579 = vmatprep.subr.bf16.mxu0 0
      %580 = vmatpush1.bf16.msra.mxu0 0
      %581 = vmatprep.subr.bf16.mxu0 0
      %582 = vmatpush1.bf16.msra.mxu0 0
      %583 = vmatprep.subr.bf16.mxu0 0
      %584 = vmatpush1.bf16.msra.mxu0 0
      %585 = vmatprep.subr.bf16.mxu0 0
      %586 = vmatpush1.bf16.msra.mxu0 0
      %587 = vmatprep.subr.bf16.mxu0 0
      %588 = vmatpush1.bf16.msra.mxu0 0
      %589 = vmatprep.subr.bf16.mxu0 0
      %590 = vmatpush1.bf16.msra.mxu0 0
      %591 = vmatprep.subr.bf16.mxu0 0
      %592 = vmatpush1.bf16.msra.mxu0 0
      %593 = vmatprep.mubr.bf16.mxu0 0
      %594 = vmatmul.mubr.bf16.gmra.mrb[0].mxu0 %v481
      %v595 = vpop.f32.mrb[0].mxu0
      %v596 = vadd.f32 0.0, %v595
      %v597 = vpop.f32.mrb[0].mxu0
      %v598 = vpop.f32.mrb[0].mxu0
      %v599 = vadd.f32 0.0, %v598
      %v600 = vpop.f32.mrb[0].mxu0
      %601 = vmatprep.mubr.bf16.mxu0 0
      %602 = vmatmul.mubr.bf16.gmra.mrb[0].mxu0 %v482
      %v603 = vpop.f32.mrb[0].mxu0
      %v604 = vadd.f32 0.0, %v603
      %v605 = vpop.f32.mrb[0].mxu0
      %v606 = vpop.f32.mrb[0].mxu0
      %v607 = vadd.f32 0.0, %v606
      %v608 = vpop.f32.mrb[0].mxu0
      %609 = vmatprep.mubr.bf16.mxu0 0
      %610 = vmatmul.mubr.bf16.gmra.mrb[0].mxu0 %v483
      %v611 = vpop.f32.mrb[0].mxu0
      %v612 = vadd.f32 0.0, %v611
      %v613 = vpop.f32.mrb[0].mxu0
      %v614 = vpop.f32.mrb[0].mxu0
      %v615 = vadd.f32 0.0, %v614
      %v616 = vpop.f32.mrb[0].mxu0
      %617 = vmatprep.mubr.bf16.mxu0 0
      %618 = vmatmul.mubr.bf16.gmra.mrb[0].mxu0 %v484
      %v619 = vpop.f32.mrb[0].mxu0
      %v620 = vadd.f32 0.0, %v619
      %v621 = vpop.f32.mrb[0].mxu0
      %v622 = vpop.f32.mrb[0].mxu0
      %v623 = vadd.f32 0.0, %v622
      %v624 = vpop.f32.mrb[0].mxu0
      %625 = vmatprep.mubr.bf16.mxu0 0
      %626 = vmatmul.mubr.bf16.gmra.mrb[0].mxu0 %v485
      %v627 = vpop.f32.mrb[0].mxu0
      %v628 = vadd.f32 0.0, %v627
      %v629 = vpop.f32.mrb[0].mxu0
      %v630 = vpop.f32.mrb[0].mxu0
      %v631 = vadd.f32 0.0, %v630
      %v632 = vpop.f32.mrb[0].mxu0
      %633 = vmatprep.mubr.bf16.mxu0 0
      %634 = vmatmul.mubr.bf16.gmra.mrb[0].mxu0 %v486
      %v635 = vpop.f32.mrb[0].mxu0
      %v636 = vadd.f32 0.0, %v635
      %v637 = vpop.f32.mrb[0].mxu0
      %v638 = vpop.f32.mrb[0].mxu0
      %v639 = vadd.f32 0.0, %v638
      %v640 = vpop.f32.mrb[0].mxu0
      %641 = vmatprep.mubr.bf16.mxu0 0
      %642 = vmatmul.mubr.bf16.gmra.mrb[0].mxu0 %v487
      %v643 = vpop.f32.mrb[0].mxu0
      %v644 = vadd.f32 0.0, %v643
      %v645 = vpop.f32.mrb[0].mxu0
      %v646 = vpop.f32.mrb[0].mxu0
      %v647 = vadd.f32 0.0, %v646
      %v648 = vpop.f32.mrb[0].mxu0
      %649 = vmatprep.mubr.bf16.mxu0 0
      %650 = vmatmul.mubr.bf16.gmra.mrb[0].mxu0 %v488
      %v651 = vpop.f32.mrb[0].mxu0
      %v652 = vadd.f32 0.0, %v651
      %v653 = vpop.f32.mrb[0].mxu0
      %v654 = vpop.f32.mrb[0].mxu0
      %v655 = vadd.f32 0.0, %v654
      %v656 = vpop.f32.mrb[0].mxu0
      %657 = vmatprep.mubr.bf16.mxu0 0
      %658 = vmatmul.mubr.bf16.gmra.mrb[0].mxu0 %v489
      %v659 = vpop.f32.mrb[0].mxu0
      %v660 = vadd.f32 0.0, %v659
      %v661 = vpop.f32.mrb[0].mxu0
      %v662 = vpop.f32.mrb[0].mxu0
      %v663 = vadd.f32 0.0, %v662
      %v664 = vpop.f32.mrb[0].mxu0
      %665 = vmatprep.mubr.bf16.mxu0 0
      %666 = vmatmul.mubr.bf16.gmra.mrb[0].mxu0 %v490
      %v667 = vpop.f32.mrb[0].mxu0
      %v668 = vadd.f32 0.0, %v667
      %v669 = vpop.f32.mrb[0].mxu0
      %v670 = vpop.f32.mrb[0].mxu0
      %v671 = vadd.f32 0.0, %v670
      %v672 = vpop.f32.mrb[0].mxu0
      %673 = vmatprep.mubr.bf16.mxu0 0
      %674 = vmatmul.mubr.bf16.gmra.mrb[0].mxu0 %v491
      %v675 = vpop.f32.mrb[0].mxu0
      %v676 = vadd.f32 0.0, %v675
      %v677 = vpop.f32.mrb[0].mxu0
      %v678 = vpop.f32.mrb[0].mxu0
      %v679 = vadd.f32 0.0, %v678
      %v680 = vpop.f32.mrb[0].mxu0
      %681 = vmatprep.mubr.bf16.mxu0 0
      %682 = vmatmul.mubr.bf16.gmra.mrb[0].mxu0 %v492
      %v683 = vpop.f32.mrb[0].mxu0
      %v684 = vadd.f32 0.0, %v683
      %v685 = vpop.f32.mrb[0].mxu0
      %v686 = vpop.f32.mrb[0].mxu0
      %v687 = vadd.f32 0.0, %v686
      %v688 = vpop.f32.mrb[0].mxu0
      %689 = vmatprep.mubr.bf16.mxu0 0
      %690 = vmatmul.mubr.bf16.gmra.mrb[0].mxu0 %v493
      %v691 = vpop.f32.mrb[0].mxu0
      %v692 = vadd.f32 0.0, %v691
      %v693 = vpop.f32.mrb[0].mxu0
      %v694 = vpop.f32.mrb[0].mxu0
      %v695 = vadd.f32 0.0, %v694
      %v696 = vpop.f32.mrb[0].mxu0
      %697 = vmatprep.mubr.bf16.mxu0 0
      %698 = vmatmul.mubr.bf16.gmra.mrb[0].mxu0 %v494
      %v699 = vpop.f32.mrb[0].mxu0
      %v700 = vadd.f32 0.0, %v699
      %v701 = vpop.f32.mrb[0].mxu0
      %v702 = vpop.f32.mrb[0].mxu0
      %v703 = vadd.f32 0.0, %v702
      %v704 = vpop.f32.mrb[0].mxu0
      %705 = vmatprep.mubr.bf16.mxu0 0
      %706 = vmatmul.mubr.bf16.gmra.mrb[0].mxu0 %v495
      %v707 = vpop.f32.mrb[0].mxu0
      %v708 = vadd.f32 0.0, %v707
      %v709 = vpop.f32.mrb[0].mxu0
      %v710 = vpop.f32.mrb[0].mxu0
      %v711 = vadd.f32 0.0, %v710
      %v712 = vpop.f32.mrb[0].mxu0
      %713 = vmatprep.mubr.bf16.mxu0 0
      %714 = vmatmul.mubr.bf16.gmra.mrb[0].mxu0 %v496
      %v715 = vpop.f32.mrb[0].mxu0
      %v716 = vadd.f32 0.0, %v715
      %v717 = vpop.f32.mrb[0].mxu0
      %v718 = vpop.f32.mrb[0].mxu0
      %v719 = vadd.f32 0.0, %v718
      %v720 = vpop.f32.mrb[0].mxu0
      %721 = vdwg.mxu0
      %v722 = vadd.f32 %v337, %v596
      %v723 = vadd.f32 %v338, %v599
      %v724 = vadd.f32 %v339, %v604
      %v725 = vadd.f32 %v340, %v607
      %v726 = vadd.f32 %v341, %v612
      %v727 = vadd.f32 %v342, %v615
      %v728 = vadd.f32 %v343, %v620
      %v729 = vadd.f32 %v344, %v623
      %v730 = vadd.f32 %v345, %v628
      %v731 = vadd.f32 %v346, %v631
      %v732 = vadd.f32 %v347, %v636
      %v733 = vadd.f32 %v348, %v639
      %v734 = vadd.f32 %v349, %v644
      %v735 = vadd.f32 %v350, %v647
      %v736 = vadd.f32 %v351, %v652
      %v737 = vadd.f32 %v352, %v655
      %v738 = vadd.f32 %v353, %v660
      %v739 = vadd.f32 %v354, %v663
      %v740 = vadd.f32 %v355, %v668
      %v741 = vadd.f32 %v356, %v671
      %v742 = vadd.f32 %v357, %v676
      %v743 = vadd.f32 %v358, %v679
      %v744 = vadd.f32 %v359, %v684
      %v745 = vadd.f32 %v360, %v687
      %v746 = vadd.f32 %v361, %v692
      %v747 = vadd.f32 %v362, %v695
      %v748 = vadd.f32 %v363, %v700
      %v749 = vadd.f32 %v364, %v703
      %v750 = vadd.f32 %v365, %v708
      %v751 = vadd.f32 %v366, %v711
      %v752 = vadd.f32 %v367, %v716
      %v753 = vadd.f32 %v368, %v719
      %754 = vst [vmem:[#allocation2] sm:$0xff] %v722
      %755 = vst [vmem:[#allocation2 + $0x8] sm:$0xff] %v723
      %756 = vst [vmem:[#allocation2 + $0x10] sm:$0xff] %v724
      %757 = vst [vmem:[#allocation2 + $0x18] sm:$0xff] %v725
      %758 = vst [vmem:[#allocation2 + $0x20] sm:$0xff] %v726
      %759 = vst [vmem:[#allocation2 + $0x28] sm:$0xff] %v727
      %760 = vst [vmem:[#allocation2 + $0x30] sm:$0xff] %v728
      %761 = vst [vmem:[#allocation2 + $0x38] sm:$0xff] %v729
      %762 = vst [vmem:[#allocation2 + $0x40] sm:$0xff] %v730
      %763 = vst [vmem:[#allocation2 + $0x48] sm:$0xff] %v731
      %764 = vst [vmem:[#allocation2 + $0x50] sm:$0xff] %v732
      %765 = vst [vmem:[#allocation2 + $0x58] sm:$0xff] %v733
      %766 = vst [vmem:[#allocation2 + $0x60] sm:$0xff] %v734
      %767 = vst [vmem:[#allocation2 + $0x68] sm:$0xff] %v735
      %768 = vst [vmem:[#allocation2 + $0x70] sm:$0xff] %v736
      %769 = vst [vmem:[#allocation2 + $0x78] sm:$0xff] %v737
      %770 = vst [vmem:[#allocation2 + $0x80] sm:$0xff] %v738
      %771 = vst [vmem:[#allocation2 + $0x88] sm:$0xff] %v739
      %772 = vst [vmem:[#allocation2 + $0x90] sm:$0xff] %v740
      %773 = vst [vmem:[#allocation2 + $0x98] sm:$0xff] %v741
      %774 = vst [vmem:[#allocation2 + $0xa0] sm:$0xff] %v742
      %775 = vst [vmem:[#allocation2 + $0xa8] sm:$0xff] %v743
      %776 = vst [vmem:[#allocation2 + $0xb0] sm:$0xff] %v744
      %777 = vst [vmem:[#allocation2 + $0xb8] sm:$0xff] %v745
      %778 = vst [vmem:[#allocation2 + $0xc0] sm:$0xff] %v746
      %779 = vst [vmem:[#allocation2 + $0xc8] sm:$0xff] %v747
      %780 = vst [vmem:[#allocation2 + $0xd0] sm:$0xff] %v748
      %781 = vst [vmem:[#allocation2 + $0xd8] sm:$0xff] %v749
      %782 = vst [vmem:[#allocation2 + $0xe0] sm:$0xff] %v750
      %783 = vst [vmem:[#allocation2 + $0xe8] sm:$0xff] %v751
      %784 = vst [vmem:[#allocation2 + $0xf0] sm:$0xff] %v752
      %785 = vst [vmem:[#allocation2 + $0xf8] sm:$0xff] %v753
      // Predicated region
      $region41: #{reduction_a.5} parent=35 // pred_check
        %p786 = pneg %p301
      $region42: #{reduction_a.5} parent=35 // pred_check_branch
        %788 = sbr.rel (%p786) target = $region44
      $region43: #{reduction_a.5} parent=35 // pred_region
        %v789 = vld [vmem:[#allocation2] sm:$0xff]
        %v790 = vld [vmem:[#allocation2 + $0x8] sm:$0xff]
        %v791 = vld [vmem:[#allocation2 + $0x10] sm:$0xff]
        %v792 = vld [vmem:[#allocation2 + $0x18] sm:$0xff]
        %v793 = vld [vmem:[#allocation2 + $0x20] sm:$0xff]
        %v794 = vld [vmem:[#allocation2 + $0x28] sm:$0xff]
        %v795 = vld [vmem:[#allocation2 + $0x30] sm:$0xff]
        %v796 = vld [vmem:[#allocation2 + $0x38] sm:$0xff]
        %v797 = vld [vmem:[#allocation2 + $0x40] sm:$0xff]
        %v798 = vld [vmem:[#allocation2 + $0x48] sm:$0xff]
        %v799 = vld [vmem:[#allocation2 + $0x50] sm:$0xff]
        %v800 = vld [vmem:[#allocation2 + $0x58] sm:$0xff]
        %v801 = vld [vmem:[#allocation2 + $0x60] sm:$0xff]
        %v802 = vld [vmem:[#allocation2 + $0x68] sm:$0xff]
        %v803 = vld [vmem:[#allocation2 + $0x70] sm:$0xff]
        %v804 = vld [vmem:[#allocation2 + $0x78] sm:$0xff]
        %v805 = vld [vmem:[#allocation2 + $0x80] sm:$0xff]
        %v806 = vld [vmem:[#allocation2 + $0x88] sm:$0xff]
        %v807 = vld [vmem:[#allocation2 + $0x90] sm:$0xff]
        %v808 = vld [vmem:[#allocation2 + $0x98] sm:$0xff]
        %v809 = vld [vmem:[#allocation2 + $0xa0] sm:$0xff]
        %v810 = vld [vmem:[#allocation2 + $0xa8] sm:$0xff]
        %v811 = vld [vmem:[#allocation2 + $0xb0] sm:$0xff]
        %v812 = vld [vmem:[#allocation2 + $0xb8] sm:$0xff]
        %v813 = vld [vmem:[#allocation2 + $0xc0] sm:$0xff]
        %v814 = vld [vmem:[#allocation2 + $0xc8] sm:$0xff]
        %v815 = vld [vmem:[#allocation2 + $0xd0] sm:$0xff]
        %v816 = vld [vmem:[#allocation2 + $0xd8] sm:$0xff]
        %v817 = vld [vmem:[#allocation2 + $0xe0] sm:$0xff]
        %v818 = vld [vmem:[#allocation2 + $0xe8] sm:$0xff]
        %v819 = vld [vmem:[#allocation2 + $0xf0] sm:$0xff]
        %v820 = vld [vmem:[#allocation2 + $0xf8] sm:$0xff]
        %v821 = vld [vmem:[%s287] sm:$0x1]
        %v823 = vlaneseq
        %v824 = vshrl.u32 %v823, 7
        %v825 = vsub.s32 0, %v824
        %v826 = vrot.slane %v821, %v825
        %v828 = vmul.f32 %v789, %v826
        %v829 = vmul.f32 %v790, %v826
        %v830 = vmul.f32 %v791, %v826
        %v831 = vmul.f32 %v792, %v826
        %v832 = vmul.f32 %v793, %v826
        %v833 = vmul.f32 %v794, %v826
        %v834 = vmul.f32 %v795, %v826
        %v835 = vmul.f32 %v796, %v826
        %v836 = vmul.f32 %v797, %v826
        %v837 = vmul.f32 %v798, %v826
        %v838 = vmul.f32 %v799, %v826
        %v839 = vmul.f32 %v800, %v826
        %v840 = vmul.f32 %v801, %v826
        %v841 = vmul.f32 %v802, %v826
        %v842 = vmul.f32 %v803, %v826
        %v843 = vmul.f32 %v804, %v826
        %v844 = vmul.f32 %v805, %v826
        %v845 = vmul.f32 %v806, %v826
        %v846 = vmul.f32 %v807, %v826
        %v847 = vmul.f32 %v808, %v826
        %v848 = vmul.f32 %v809, %v826
        %v849 = vmul.f32 %v810, %v826
        %v850 = vmul.f32 %v811, %v826
        %v851 = vmul.f32 %v812, %v826
        %v852 = vmul.f32 %v813, %v826
        %v853 = vmul.f32 %v814, %v826
        %v854 = vmul.f32 %v815, %v826
        %v855 = vmul.f32 %v816, %v826
        %v856 = vmul.f32 %v817, %v826
        %v857 = vmul.f32 %v818, %v826
        %v858 = vmul.f32 %v819, %v826
        %v859 = vmul.f32 %v820, %v826
        %v860 = vld [vmem:[%s290] sm:$0x1]
        %v862 = vlaneseq
        %v863 = vshrl.u32 %v862, 7
        %v864 = vsub.s32 0, %v863
        %v865 = vrot.slane %v860, %v864
        %v867 = vadd.f32 %v828, %v865
        %v868 = vadd.f32 %v829, %v865
        %v869 = vadd.f32 %v830, %v865
        %v870 = vadd.f32 %v831, %v865
        %v871 = vadd.f32 %v832, %v865
        %v872 = vadd.f32 %v833, %v865
        %v873 = vadd.f32 %v834, %v865
        %v874 = vadd.f32 %v835, %v865
        %v875 = vadd.f32 %v836, %v865
        %v876 = vadd.f32 %v837, %v865
        %v877 = vadd.f32 %v838, %v865
        %v878 = vadd.f32 %v839, %v865
        %v879 = vadd.f32 %v840, %v865
        %v880 = vadd.f32 %v841, %v865
        %v881 = vadd.f32 %v842, %v865
        %v882 = vadd.f32 %v843, %v865
        %v883 = vadd.f32 %v844, %v865
        %v884 = vadd.f32 %v845, %v865
        %v885 = vadd.f32 %v846, %v865
        %v886 = vadd.f32 %v847, %v865
        %v887 = vadd.f32 %v848, %v865
        %v888 = vadd.f32 %v849, %v865
        %v889 = vadd.f32 %v850, %v865
        %v890 = vadd.f32 %v851, %v865
        %v891 = vadd.f32 %v852, %v865
        %v892 = vadd.f32 %v853, %v865
        %v893 = vadd.f32 %v854, %v865
        %v894 = vadd.f32 %v855, %v865
        %v895 = vadd.f32 %v856, %v865
        %v896 = vadd.f32 %v857, %v865
        %v897 = vadd.f32 %v858, %v865
        %v898 = vadd.f32 %v859, %v865
        %v899 = vmax.f32 %v867, 0.0
        %v900 = vmax.f32 %v868, 0.0
        %v901 = vmax.f32 %v869, 0.0
        %v902 = vmax.f32 %v870, 0.0
        %v903 = vmax.f32 %v871, 0.0
        %v904 = vmax.f32 %v872, 0.0
        %v905 = vmax.f32 %v873, 0.0
        %v906 = vmax.f32 %v874, 0.0
        %v907 = vmax.f32 %v875, 0.0
        %v908 = vmax.f32 %v876, 0.0
        %v909 = vmax.f32 %v877, 0.0
        %v910 = vmax.f32 %v878, 0.0
        %v911 = vmax.f32 %v879, 0.0
        %v912 = vmax.f32 %v880, 0.0
        %v913 = vmax.f32 %v881, 0.0
        %v914 = vmax.f32 %v882, 0.0
        %v915 = vmax.f32 %v883, 0.0
        %v916 = vmax.f32 %v884, 0.0
        %v917 = vmax.f32 %v885, 0.0
        %v918 = vmax.f32 %v886, 0.0
        %v919 = vmax.f32 %v887, 0.0
        %v920 = vmax.f32 %v888, 0.0
        %v921 = vmax.f32 %v889, 0.0
        %v922 = vmax.f32 %v890, 0.0
        %v923 = vmax.f32 %v891, 0.0
        %v924 = vmax.f32 %v892, 0.0
        %v925 = vmax.f32 %v893, 0.0
        %v926 = vmax.f32 %v894, 0.0
        %v927 = vmax.f32 %v895, 0.0
        %v928 = vmax.f32 %v896, 0.0
        %v929 = vmax.f32 %v897, 0.0
        %v930 = vmax.f32 %v898, 0.0
        %931 = vst [vmem:[%s298] sm:$0xff] %v899
        %932 = vst [vmem:[%s298 + $0x8] sm:$0xff] %v900
        %933 = vst [vmem:[%s298 + $0x10] sm:$0xff] %v901
        %934 = vst [vmem:[%s298 + $0x18] sm:$0xff] %v902
        %935 = vst [vmem:[%s298 + $0x20] sm:$0xff] %v903
        %936 = vst [vmem:[%s298 + $0x28] sm:$0xff] %v904
        %937 = vst [vmem:[%s298 + $0x30] sm:$0xff] %v905
        %938 = vst [vmem:[%s298 + $0x38] sm:$0xff] %v906
        %939 = vst [vmem:[%s298 + $0x40] sm:$0xff] %v907
        %940 = vst [vmem:[%s298 + $0x48] sm:$0xff] %v908
        %941 = vst [vmem:[%s298 + $0x50] sm:$0xff] %v909
        %942 = vst [vmem:[%s298 + $0x58] sm:$0xff] %v910
        %943 = vst [vmem:[%s298 + $0x60] sm:$0xff] %v911
        %944 = vst [vmem:[%s298 + $0x68] sm:$0xff] %v912
        %945 = vst [vmem:[%s298 + $0x70] sm:$0xff] %v913
        %946 = vst [vmem:[%s298 + $0x78] sm:$0xff] %v914
        %947 = vst [vmem:[%s298 + $0x80] sm:$0xff] %v915
        %948 = vst [vmem:[%s298 + $0x88] sm:$0xff] %v916
        %949 = vst [vmem:[%s298 + $0x90] sm:$0xff] %v917
        %950 = vst [vmem:[%s298 + $0x98] sm:$0xff] %v918
        %951 = vst [vmem:[%s298 + $0xa0] sm:$0xff] %v919
        %952 = vst [vmem:[%s298 + $0xa8] sm:$0xff] %v920
        %953 = vst [vmem:[%s298 + $0xb0] sm:$0xff] %v921
        %954 = vst [vmem:[%s298 + $0xb8] sm:$0xff] %v922
        %955 = vst [vmem:[%s298 + $0xc0] sm:$0xff] %v923
        %956 = vst [vmem:[%s298 + $0xc8] sm:$0xff] %v924
        %957 = vst [vmem:[%s298 + $0xd0] sm:$0xff] %v925
        %958 = vst [vmem:[%s298 + $0xd8] sm:$0xff] %v926
        %959 = vst [vmem:[%s298 + $0xe0] sm:$0xff] %v927
        %960 = vst [vmem:[%s298 + $0xe8] sm:$0xff] %v928
        %961 = vst [vmem:[%s298 + $0xf0] sm:$0xff] %v929
        %962 = vst [vmem:[%s298 + $0xf8] sm:$0xff] %v930
      $region44: #{reduction_a.5} parent=35 // pred_fallthru
        _
      %s963 = smul.u32 32, %s20
      %p964 = scmp.lt.s32.totalorder %s963, 63
      %s965 = scalar_select %p964, %s963, 63
      %p966 = scmp.lt.s32.totalorder %s21, 0
      %s967 = scalar_select %p966, %s21, 0
      %s968 = sadd.s32 %s967, %s965
      %s969 = smul.addr %s968, 8
      %s970 = scalar_lea.vmem %s4, %s969
      // Predicated region
      $region45: #{reduction_a.5} parent=35 // pred_check
        %p971 = pneg %p162
      $region46: #{reduction_a.5} parent=35 // pred_check_branch
        %973 = sbr.rel (%p971) target = $region48
      $region47: #{reduction_a.5} parent=35 // pred_region
        %s974 = smul.u32 32, %s20
      $region48: #{reduction_a.5} parent=35 // pred_fallthru
        _
    $region36: #{reduction_a.5} parent=5 // pred_fallthru
      _
    %p975 = scmp.le.s32.totalorder 2, %s10
    // Predicated region
    $region49: #{reduction_a.5} parent=5 // pred_check
      %p976 = pneg %p975
    $region50: #{reduction_a.5} parent=5 // pred_check_branch
      %978 = sbr.rel (%p976) target = $region52
    $region51: #{reduction_a.5} parent=5 // pred_region
      %s979 = ssub.s32 %s10, 2
      // Predicated region
      $region53: #{reduction_a.5} parent=51 // pred_check
        %p980 = pneg %p168
      $region54: #{reduction_a.5} parent=51 // pred_check_branch
        %982 = sbr.rel (%p980) target = $region56
      $region55: #{reduction_a.5} parent=51 // pred_region
        %s983 = smul.u32 32, %s23
        %p984 = scmp.lt.s32.totalorder %s983, 63
        %s985 = scalar_select %p984, %s983, 63
        %p986 = scmp.lt.s32.totalorder %s24, 0
        %s987 = scalar_select %p986, %s24, 0
        %s988 = sadd.s32 %s987, %s985
        %s989 = smul.addr %s988, 8
        %s990 = scalar_lea.vmem %s4, %s989
      $region56: #{reduction_a.5} parent=51 // pred_fallthru
        _
    $region52: #{reduction_a.5} parent=5 // pred_fallthru
      _
  $region6: #{reduction_a.5} parent=0 // loop_footer
    %s14 = sadd.s32 1, %s10
  $region7: #{reduction_a.5} parent=0 // loop_footer_branch
    %9 = sbr.rel target = $region3
  $region8: #{reduction_a.5} parent=0 // loop_exit
    _

// kernel: reduction_a.9
$region0: #{reduction_a.9}
  #allocation0 [shape = 'u32[]', space=smem, size = 0x4, offset = 0x4, fixed_abs, tag = 'smem constant byte address 0x4 - core index']
  #allocation1 [shape = 'u32[144,128]{1,0:T(1,128)}', space=vmem, size = 0x12000, scoped, tag = 'internal scratch']
  %s0 = inlined_call_operand.vmem [shape: f32[104,9,4], index: 0, kind: input, shape index: {}]
  %s1 = inlined_call_operand.vmem [shape: f32[104,4], index: 1, kind: output, shape index: {}]
  %s2 = sld [smem:[#allocation0]]
  $region14: #{reduction_a.9} parent=0
    _
  %s4 = ssub.s32 1, %s2
  %s5 = scalar_select 0, %s4, %s2
  // Predicated region
  $region2: #{reduction_a.9} parent=0 // pred_check
    _
  $region3: #{reduction_a.9} parent=0 // pred_check_branch
    %7 = sbr.rel (0) target = $region5
  $region4: #{reduction_a.9} parent=0 // pred_region
    _
  $region5: #{reduction_a.9} parent=0 // pred_fallthru
    _
  %v8 = vld [vmem:[%s0] sm:$0xff]
  %v9 = vld [vmem:[%s0 + $0x8] sm:$0x1]
  %v10 = vld [vmem:[%s0 + $0x10] sm:$0xff]
  %v11 = vld [vmem:[%s0 + $0x18] sm:$0x1]
  %v12 = vld [vmem:[%s0 + $0x20] sm:$0xff]
  %v13 = vld [vmem:[%s0 + $0x28] sm:$0x1]
  %v14 = vld [vmem:[%s0 + $0x30] sm:$0xff]
  %v15 = vld [vmem:[%s0 + $0x38] sm:$0x1]
  %v16 = vld [vmem:[%s0 + $0x40] sm:$0xff]
  %v17 = vld [vmem:[%s0 + $0x48] sm:$0x1]
  %v18 = vld [vmem:[%s0 + $0x50] sm:$0xff]
  %v19 = vld [vmem:[%s0 + $0x58] sm:$0x1]
  %v20 = vld [vmem:[%s0 + $0x60] sm:$0xff]
  %v21 = vld [vmem:[%s0 + $0x68] sm:$0x1]
  %v22 = vld [vmem:[%s0 + $0x70] sm:$0xff]
  %v23 = vld [vmem:[%s0 + $0x78] sm:$0x1]
  %v24 = vld [vmem:[%s0 + $0x80] sm:$0xff]
  %v25 = vld [vmem:[%s0 + $0x88] sm:$0x1]
  %v26 = vld [vmem:[%s0 + $0x90] sm:$0xff]
  %v27 = vld [vmem:[%s0 + $0x98] sm:$0x1]
  %v28 = vld [vmem:[%s0 + $0xa0] sm:$0xff]
  %v29 = vld [vmem:[%s0 + $0xa8] sm:$0x1]
  %v30 = vld [vmem:[%s0 + $0xb0] sm:$0xff]
  %v31 = vld [vmem:[%s0 + $0xb8] sm:$0x1]
  %v32 = vld [vmem:[%s0 + $0xc0] sm:$0xff]
  %v33 = vld [vmem:[%s0 + $0xc8] sm:$0x1]
  %v34 = vld [vmem:[%s0 + $0xd0] sm:$0xff]
  %v35 = vld [vmem:[%s0 + $0xd8] sm:$0x1]
  %v36 = vld [vmem:[%s0 + $0xe0] sm:$0xff]
  %v37 = vld [vmem:[%s0 + $0xe8] sm:$0x1]
  %v38 = vld [vmem:[%s0 + $0xf0] sm:$0xff]
  %v39 = vld [vmem:[%s0 + $0xf8] sm:$0x1]
  %v40 = vld [vmem:[%s0 + $0x100] sm:$0xff]
  %v41 = vld [vmem:[%s0 + $0x108] sm:$0x1]
  %v42 = vld [vmem:[%s0 + $0x110] sm:$0xff]
  %v43 = vld [vmem:[%s0 + $0x118] sm:$0x1]
  %v44 = vld [vmem:[%s0 + $0x120] sm:$0xff]
  %v45 = vld [vmem:[%s0 + $0x128] sm:$0x1]
  %v46 = vld [vmem:[%s0 + $0x130] sm:$0xff]
  %v47 = vld [vmem:[%s0 + $0x138] sm:$0x1]
  %v48 = vld [vmem:[%s0 + $0x140] sm:$0xff]
  %v49 = vld [vmem:[%s0 + $0x148] sm:$0x1]
  %v50 = vld [vmem:[%s0 + $0x150] sm:$0xff]
  %v51 = vld [vmem:[%s0 + $0x158] sm:$0x1]
  %v52 = vld [vmem:[%s0 + $0x160] sm:$0xff]
  %v53 = vld [vmem:[%s0 + $0x168] sm:$0x1]
  %v54 = vld [vmem:[%s0 + $0x170] sm:$0xff]
  %v55 = vld [vmem:[%s0 + $0x178] sm:$0x1]
  %v56 = vld [vmem:[%s0 + $0x180] sm:$0xff]
  %v57 = vld [vmem:[%s0 + $0x188] sm:$0x1]
  %v58 = vld [vmem:[%s0 + $0x190] sm:$0xff]
  %v59 = vld [vmem:[%s0 + $0x198] sm:$0x1]
  %v60 = vld [vmem:[%s0 + $0x1a0] sm:$0xff]
  %v61 = vld [vmem:[%s0 + $0x1a8] sm:$0x1]
  %v62 = vld [vmem:[%s0 + $0x1b0] sm:$0xff]
  %v63 = vld [vmem:[%s0 + $0x1b8] sm:$0x1]
  %v64 = vld [vmem:[%s0 + $0x1c0] sm:$0xff]
  %v65 = vld [vmem:[%s0 + $0x1c8] sm:$0x1]
  %v66 = vld [vmem:[%s0 + $0x1d0] sm:$0xff]
  %v67 = vld [vmem:[%s0 + $0x1d8] sm:$0x1]
  %v68 = vld [vmem:[%s0 + $0x1e0] sm:$0xff]
  %v69 = vld [vmem:[%s0 + $0x1e8] sm:$0x1]
  %v70 = vld [vmem:[%s0 + $0x1f0] sm:$0xff]
  %v71 = vld [vmem:[%s0 + $0x1f8] sm:$0x1]
  %v72 = vld [vmem:[%s0 + $0x200] sm:$0xff]
  %v73 = vld [vmem:[%s0 + $0x208] sm:$0x1]
  %v74 = vld [vmem:[%s0 + $0x210] sm:$0xff]
  %v75 = vld [vmem:[%s0 + $0x218] sm:$0x1]
  %v76 = vld [vmem:[%s0 + $0x220] sm:$0xff]
  %v77 = vld [vmem:[%s0 + $0x228] sm:$0x1]
  %v78 = vld [vmem:[%s0 + $0x230] sm:$0xff]
  %v79 = vld [vmem:[%s0 + $0x238] sm:$0x1]
  %v80 = vld [vmem:[%s0 + $0x240] sm:$0xff]
  %v81 = vld [vmem:[%s0 + $0x248] sm:$0x1]
  %v82 = vld [vmem:[%s0 + $0x250] sm:$0xff]
  %v83 = vld [vmem:[%s0 + $0x258] sm:$0x1]
  %v84 = vld [vmem:[%s0 + $0x260] sm:$0xff]
  %v85 = vld [vmem:[%s0 + $0x268] sm:$0x1]
  %v86 = vld [vmem:[%s0 + $0x270] sm:$0xff]
  %v87 = vld [vmem:[%s0 + $0x278] sm:$0x1]
  %v88 = vld [vmem:[%s0 + $0x280] sm:$0xff]
  %v89 = vld [vmem:[%s0 + $0x288] sm:$0x1]
  %v90 = vld [vmem:[%s0 + $0x290] sm:$0xff]
  %v91 = vld [vmem:[%s0 + $0x298] sm:$0x1]
  %v92 = vld [vmem:[%s0 + $0x2a0] sm:$0xff]
  %v93 = vld [vmem:[%s0 + $0x2a8] sm:$0x1]
  %v94 = vld [vmem:[%s0 + $0x2b0] sm:$0xff]
  %v95 = vld [vmem:[%s0 + $0x2b8] sm:$0x1]
  %v96 = vld [vmem:[%s0 + $0x2c0] sm:$0xff]
  %v97 = vld [vmem:[%s0 + $0x2c8] sm:$0x1]
  %v98 = vld [vmem:[%s0 + $0x2d0] sm:$0xff]
  %v99 = vld [vmem:[%s0 + $0x2d8] sm:$0x1]
  %v100 = vld [vmem:[%s0 + $0x2e0] sm:$0xff]
  %v101 = vld [vmem:[%s0 + $0x2e8] sm:$0x1]
  %v102 = vld [vmem:[%s0 + $0x2f0] sm:$0xff]
  %v103 = vld [vmem:[%s0 + $0x2f8] sm:$0x1]
  %v104 = vld [vmem:[%s0 + $0x300] sm:$0xff]
  %v105 = vld [vmem:[%s0 + $0x308] sm:$0x1]
  %v106 = vld [vmem:[%s0 + $0x310] sm:$0xff]
  %v107 = vld [vmem:[%s0 + $0x318] sm:$0x1]
  %v108 = vld [vmem:[%s0 + $0x320] sm:$0xff]
  %v109 = vld [vmem:[%s0 + $0x328] sm:$0x1]
  %v110 = vld [vmem:[%s0 + $0x330] sm:$0xff]
  %v111 = vld [vmem:[%s0 + $0x338] sm:$0x1]
  %v112 = vld [vmem:[%s0 + $0x340] sm:$0xff]
  %v113 = vld [vmem:[%s0 + $0x348] sm:$0x1]
  %v114 = vld [vmem:[%s0 + $0x350] sm:$0xff]
  %v115 = vld [vmem:[%s0 + $0x358] sm:$0x1]
  %v116 = vld [vmem:[%s0 + $0x360] sm:$0xff]
  %v117 = vld [vmem:[%s0 + $0x368] sm:$0x1]
  %v118 = vld [vmem:[%s0 + $0x370] sm:$0xff]
  %v119 = vld [vmem:[%s0 + $0x378] sm:$0x1]
  %v120 = vld [vmem:[%s0 + $0x380] sm:$0xff]
  %v121 = vld [vmem:[%s0 + $0x388] sm:$0x1]
  %v122 = vld [vmem:[%s0 + $0x390] sm:$0xff]
  %v123 = vld [vmem:[%s0 + $0x398] sm:$0x1]
  %v124 = vld [vmem:[%s0 + $0x3a0] sm:$0xff]
  %v125 = vld [vmem:[%s0 + $0x3a8] sm:$0x1]
  %v126 = vld [vmem:[%s0 + $0x3b0] sm:$0xff]
  %v127 = vld [vmem:[%s0 + $0x3b8] sm:$0x1]
  %v128 = vld [vmem:[%s0 + $0x3c0] sm:$0xff]
  %v129 = vld [vmem:[%s0 + $0x3c8] sm:$0x1]
  %v130 = vld [vmem:[%s0 + $0x3d0] sm:$0xff]
  %v131 = vld [vmem:[%s0 + $0x3d8] sm:$0x1]
  %v132 = vld [vmem:[%s0 + $0x3e0] sm:$0xff]
  %v133 = vld [vmem:[%s0 + $0x3e8] sm:$0x1]
  %v134 = vld [vmem:[%s0 + $0x3f0] sm:$0xff]
  %v135 = vld [vmem:[%s0 + $0x3f8] sm:$0x1]
  %v136 = vld [vmem:[%s0 + $0x400] sm:$0xff]
  %v137 = vld [vmem:[%s0 + $0x408] sm:$0x1]
  %v138 = vld [vmem:[%s0 + $0x410] sm:$0xff]
  %v139 = vld [vmem:[%s0 + $0x418] sm:$0x1]
  %v140 = vld [vmem:[%s0 + $0x420] sm:$0xff]
  %v141 = vld [vmem:[%s0 + $0x428] sm:$0x1]
  %v142 = vld [vmem:[%s0 + $0x430] sm:$0xff]
  %v143 = vld [vmem:[%s0 + $0x438] sm:$0x1]
  %v144 = vld [vmem:[%s0 + $0x440] sm:$0xff]
  %v145 = vld [vmem:[%s0 + $0x448] sm:$0x1]
  %v146 = vld [vmem:[%s0 + $0x450] sm:$0xff]
  %v147 = vld [vmem:[%s0 + $0x458] sm:$0x1]
  %v148 = vld [vmem:[%s0 + $0x460] sm:$0xff]
  %v149 = vld [vmem:[%s0 + $0x468] sm:$0x1]
  %v150 = vld [vmem:[%s0 + $0x470] sm:$0xff]
  %v151 = vld [vmem:[%s0 + $0x478] sm:$0x1]
  %v152 = vld [vmem:[%s0 + $0x480] sm:$0xff]
  %v153 = vld [vmem:[%s0 + $0x488] sm:$0x1]
  %v154 = vld [vmem:[%s0 + $0x490] sm:$0xff]
  %v155 = vld [vmem:[%s0 + $0x498] sm:$0x1]
  %v156 = vld [vmem:[%s0 + $0x4a0] sm:$0xff]
  %v157 = vld [vmem:[%s0 + $0x4a8] sm:$0x1]
  %v158 = vld [vmem:[%s0 + $0x4b0] sm:$0xff]
  %v159 = vld [vmem:[%s0 + $0x4b8] sm:$0x1]
  %v160 = vld [vmem:[%s0 + $0x4c0] sm:$0xff]
  %v161 = vld [vmem:[%s0 + $0x4c8] sm:$0x1]
  %v162 = vld [vmem:[%s0 + $0x4d0] sm:$0xff]
  %v163 = vld [vmem:[%s0 + $0x4d8] sm:$0x1]
  %v164 = vld [vmem:[%s0 + $0x4e0] sm:$0xff]
  %v165 = vld [vmem:[%s0 + $0x4e8] sm:$0x1]
  %v166 = vld [vmem:[%s0 + $0x4f0] sm:$0xff]
  %v167 = vld [vmem:[%s0 + $0x4f8] sm:$0x1]
  %v168 = vld [vmem:[%s0 + $0x500] sm:$0xff]
  %v169 = vld [vmem:[%s0 + $0x508] sm:$0x1]
  %v170 = vld [vmem:[%s0 + $0x510] sm:$0xff]
  %v171 = vld [vmem:[%s0 + $0x518] sm:$0x1]
  %v172 = vld [vmem:[%s0 + $0x520] sm:$0xff]
  %v173 = vld [vmem:[%s0 + $0x528] sm:$0x1]
  %v174 = vld [vmem:[%s0 + $0x530] sm:$0xff]
  %v175 = vld [vmem:[%s0 + $0x538] sm:$0x1]
  %v176 = vld [vmem:[%s0 + $0x540] sm:$0xff]
  %v177 = vld [vmem:[%s0 + $0x548] sm:$0x1]
  %v178 = vld [vmem:[%s0 + $0x550] sm:$0xff]
  %v179 = vld [vmem:[%s0 + $0x558] sm:$0x1]
  %v180 = vld [vmem:[%s0 + $0x560] sm:$0xff]
  %v181 = vld [vmem:[%s0 + $0x568] sm:$0x1]
  %v182 = vld [vmem:[%s0 + $0x570] sm:$0xff]
  %v183 = vld [vmem:[%s0 + $0x578] sm:$0x1]
  %v184 = vld [vmem:[%s0 + $0x580] sm:$0xff]
  %v185 = vld [vmem:[%s0 + $0x588] sm:$0x1]
  %v186 = vld [vmem:[%s0 + $0x590] sm:$0xff]
  %v187 = vld [vmem:[%s0 + $0x598] sm:$0x1]
  %v188 = vld [vmem:[%s0 + $0x5a0] sm:$0xff]
  %v189 = vld [vmem:[%s0 + $0x5a8] sm:$0x1]
  %v190 = vld [vmem:[%s0 + $0x5b0] sm:$0xff]
  %v191 = vld [vmem:[%s0 + $0x5b8] sm:$0x1]
  %v192 = vld [vmem:[%s0 + $0x5c0] sm:$0xff]
  %v193 = vld [vmem:[%s0 + $0x5c8] sm:$0x1]
  %v194 = vld [vmem:[%s0 + $0x5d0] sm:$0xff]
  %v195 = vld [vmem:[%s0 + $0x5d8] sm:$0x1]
  %v196 = vld [vmem:[%s0 + $0x5e0] sm:$0xff]
  %v197 = vld [vmem:[%s0 + $0x5e8] sm:$0x1]
  %v198 = vld [vmem:[%s0 + $0x5f0] sm:$0xff]
  %v199 = vld [vmem:[%s0 + $0x5f8] sm:$0x1]
  %v200 = vld [vmem:[%s0 + $0x600] sm:$0xff]
  %v201 = vld [vmem:[%s0 + $0x608] sm:$0x1]
  %v202 = vld [vmem:[%s0 + $0x610] sm:$0xff]
  %v203 = vld [vmem:[%s0 + $0x618] sm:$0x1]
  %v204 = vld [vmem:[%s0 + $0x620] sm:$0xff]
  %v205 = vld [vmem:[%s0 + $0x628] sm:$0x1]
  %v206 = vld [vmem:[%s0 + $0x630] sm:$0xff]
  %v207 = vld [vmem:[%s0 + $0x638] sm:$0x1]
  %v208 = vld [vmem:[%s0 + $0x640] sm:$0xff]
  %v209 = vld [vmem:[%s0 + $0x648] sm:$0x1]
  %v210 = vld [vmem:[%s0 + $0x650] sm:$0xff]
  %v211 = vld [vmem:[%s0 + $0x658] sm:$0x1]
  %v212 = vld [vmem:[%s0 + $0x660] sm:$0xff]
  %v213 = vld [vmem:[%s0 + $0x668] sm:$0x1]
  %v214 = vld [vmem:[%s0 + $0x670] sm:$0xff]
  %v215 = vld [vmem:[%s0 + $0x678] sm:$0x1]
  %v320 = vrot.slane %v8, 1
  %v321 = vrot.slane %v10, 1
  %v322 = vrot.slane %v12, 1
  %v323 = vrot.slane %v14, 1
  %v324 = vrot.slane %v16, 1
  %v325 = vrot.slane %v18, 1
  %v326 = vrot.slane %v20, 1
  %v327 = vrot.slane %v22, 1
  %v328 = vrot.slane %v24, 1
  %v329 = vrot.slane %v26, 1
  %v330 = vrot.slane %v28, 1
  %v331 = vrot.slane %v30, 1
  %v332 = vrot.slane %v32, 1
  %v333 = vrot.slane %v34, 1
  %v334 = vrot.slane %v36, 1
  %v335 = vrot.slane %v38, 1
  %v336 = vrot.slane %v40, 1
  %v337 = vrot.slane %v42, 1
  %v338 = vrot.slane %v44, 1
  %v339 = vrot.slane %v46, 1
  %v340 = vrot.slane %v48, 1
  %v341 = vrot.slane %v50, 1
  %v342 = vrot.slane %v52, 1
  %v343 = vrot.slane %v54, 1
  %v344 = vrot.slane %v56, 1
  %v345 = vrot.slane %v58, 1
  %v346 = vrot.slane %v60, 1
  %v347 = vrot.slane %v62, 1
  %v348 = vrot.slane %v64, 1
  %v349 = vrot.slane %v66, 1
  %v350 = vrot.slane %v68, 1
  %v351 = vrot.slane %v70, 1
  %v352 = vrot.slane %v72, 1
  %v353 = vrot.slane %v74, 1
  %v354 = vrot.slane %v76, 1
  %v355 = vrot.slane %v78, 1
  %v356 = vrot.slane %v80, 1
  %v357 = vrot.slane %v82, 1
  %v358 = vrot.slane %v84, 1
  %v359 = vrot.slane %v86, 1
  %v360 = vrot.slane %v88, 1
  %v361 = vrot.slane %v90, 1
  %v362 = vrot.slane %v92, 1
  %v363 = vrot.slane %v94, 1
  %v364 = vrot.slane %v96, 1
  %v365 = vrot.slane %v98, 1
  %v366 = vrot.slane %v100, 1
  %v367 = vrot.slane %v102, 1
  %v368 = vrot.slane %v104, 1
  %v369 = vrot.slane %v106, 1
  %v370 = vrot.slane %v108, 1
  %v371 = vrot.slane %v110, 1
  %v372 = vrot.slane %v112, 1
  %v373 = vrot.slane %v114, 1
  %v374 = vrot.slane %v116, 1
  %v375 = vrot.slane %v118, 1
  %v376 = vrot.slane %v120, 1
  %v377 = vrot.slane %v122, 1
  %v378 = vrot.slane %v124, 1
  %v379 = vrot.slane %v126, 1
  %v380 = vrot.slane %v128, 1
  %v381 = vrot.slane %v130, 1
  %v382 = vrot.slane %v132, 1
  %v383 = vrot.slane %v134, 1
  %v384 = vrot.slane %v136, 1
  %v385 = vrot.slane %v138, 1
  %v386 = vrot.slane %v140, 1
  %v387 = vrot.slane %v142, 1
  %v388 = vrot.slane %v144, 1
  %v389 = vrot.slane %v146, 1
  %v390 = vrot.slane %v148, 1
  %v391 = vrot.slane %v150, 1
  %v392 = vrot.slane %v152, 1
  %v393 = vrot.slane %v154, 1
  %v394 = vrot.slane %v156, 1
  %v395 = vrot.slane %v158, 1
  %v396 = vrot.slane %v160, 1
  %v397 = vrot.slane %v162, 1
  %v398 = vrot.slane %v164, 1
  %v399 = vrot.slane %v166, 1
  %v400 = vrot.slane %v168, 1
  %v401 = vrot.slane %v170, 1
  %v402 = vrot.slane %v172, 1
  %v403 = vrot.slane %v174, 1
  %v404 = vrot.slane %v176, 1
  %v405 = vrot.slane %v178, 1
  %v406 = vrot.slane %v180, 1
  %v407 = vrot.slane %v182, 1
  %v408 = vrot.slane %v184, 1
  %v409 = vrot.slane %v186, 1
  %v410 = vrot.slane %v188, 1
  %v411 = vrot.slane %v190, 1
  %v412 = vrot.slane %v192, 1
  %v413 = vrot.slane %v194, 1
  %v414 = vrot.slane %v196, 1
  %v415 = vrot.slane %v198, 1
  %v416 = vrot.slane %v200, 1
  %v417 = vrot.slane %v202, 1
  %v418 = vrot.slane %v204, 1
  %v419 = vrot.slane %v206, 1
  %v420 = vrot.slane %v208, 1
  %v421 = vrot.slane %v210, 1
  %v422 = vrot.slane %v212, 1
  %v423 = vrot.slane %v214, 1
  %v528 = vmax.f32 %v8, %v320
  %v529 = vmax.f32 %v10, %v321
  %v530 = vmax.f32 %v12, %v322
  %v531 = vmax.f32 %v14, %v323
  %v532 = vmax.f32 %v16, %v324
  %v533 = vmax.f32 %v18, %v325
  %v534 = vmax.f32 %v20, %v326
  %v535 = vmax.f32 %v22, %v327
  %v536 = vmax.f32 %v24, %v328
  %v537 = vmax.f32 %v26, %v329
  %v538 = vmax.f32 %v28, %v330
  %v539 = vmax.f32 %v30, %v331
  %v540 = vmax.f32 %v32, %v332
  %v541 = vmax.f32 %v34, %v333
  %v542 = vmax.f32 %v36, %v334
  %v543 = vmax.f32 %v38, %v335
  %v544 = vmax.f32 %v40, %v336
  %v545 = vmax.f32 %v42, %v337
  %v546 = vmax.f32 %v44, %v338
  %v547 = vmax.f32 %v46, %v339
  %v548 = vmax.f32 %v48, %v340
  %v549 = vmax.f32 %v50, %v341
  %v550 = vmax.f32 %v52, %v342
  %v551 = vmax.f32 %v54, %v343
  %v552 = vmax.f32 %v56, %v344
  %v553 = vmax.f32 %v58, %v345
  %v554 = vmax.f32 %v60, %v346
  %v555 = vmax.f32 %v62, %v347
  %v556 = vmax.f32 %v64, %v348
  %v557 = vmax.f32 %v66, %v349
  %v558 = vmax.f32 %v68, %v350
  %v559 = vmax.f32 %v70, %v351
  %v560 = vmax.f32 %v72, %v352
  %v561 = vmax.f32 %v74, %v353
  %v562 = vmax.f32 %v76, %v354
  %v563 = vmax.f32 %v78, %v355
  %v564 = vmax.f32 %v80, %v356
  %v565 = vmax.f32 %v82, %v357
  %v566 = vmax.f32 %v84, %v358
  %v567 = vmax.f32 %v86, %v359
  %v568 = vmax.f32 %v88, %v360
  %v569 = vmax.f32 %v90, %v361
  %v570 = vmax.f32 %v92, %v362
  %v571 = vmax.f32 %v94, %v363
  %v572 = vmax.f32 %v96, %v364
  %v573 = vmax.f32 %v98, %v365
  %v574 = vmax.f32 %v100, %v366
  %v575 = vmax.f32 %v102, %v367
  %v576 = vmax.f32 %v104, %v368
  %v577 = vmax.f32 %v106, %v369
  %v578 = vmax.f32 %v108, %v370
  %v579 = vmax.f32 %v110, %v371
  %v580 = vmax.f32 %v112, %v372
  %v581 = vmax.f32 %v114, %v373
  %v582 = vmax.f32 %v116, %v374
  %v583 = vmax.f32 %v118, %v375
  %v584 = vmax.f32 %v120, %v376
  %v585 = vmax.f32 %v122, %v377
  %v586 = vmax.f32 %v124, %v378
  %v587 = vmax.f32 %v126, %v379
  %v588 = vmax.f32 %v128, %v380
  %v589 = vmax.f32 %v130, %v381
  %v590 = vmax.f32 %v132, %v382
  %v591 = vmax.f32 %v134, %v383
  %v592 = vmax.f32 %v136, %v384
  %v593 = vmax.f32 %v138, %v385
  %v594 = vmax.f32 %v140, %v386
  %v595 = vmax.f32 %v142, %v387
  %v596 = vmax.f32 %v144, %v388
  %v597 = vmax.f32 %v146, %v389
  %v598 = vmax.f32 %v148, %v390
  %v599 = vmax.f32 %v150, %v391
  %v600 = vmax.f32 %v152, %v392
  %v601 = vmax.f32 %v154, %v393
  %v602 = vmax.f32 %v156, %v394
  %v603 = vmax.f32 %v158, %v395
  %v604 = vmax.f32 %v160, %v396
  %v605 = vmax.f32 %v162, %v397
  %v606 = vmax.f32 %v164, %v398
  %v607 = vmax.f32 %v166, %v399
  %v608 = vmax.f32 %v168, %v400
  %v609 = vmax.f32 %v170, %v401
  %v610 = vmax.f32 %v172, %v402
  %v611 = vmax.f32 %v174, %v403
  %v612 = vmax.f32 %v176, %v404
  %v613 = vmax.f32 %v178, %v405
  %v614 = vmax.f32 %v180, %v406
  %v615 = vmax.f32 %v182, %v407
  %v616 = vmax.f32 %v184, %v408
  %v617 = vmax.f32 %v186, %v409
  %v618 = vmax.f32 %v188, %v410
  %v619 = vmax.f32 %v190, %v411
  %v620 = vmax.f32 %v192, %v412
  %v621 = vmax.f32 %v194, %v413
  %v622 = vmax.f32 %v196, %v414
  %v623 = vmax.f32 %v198, %v415
  %v624 = vmax.f32 %v200, %v416
  %v625 = vmax.f32 %v202, %v417
  %v626 = vmax.f32 %v204, %v418
  %v627 = vmax.f32 %v206, %v419
  %v628 = vmax.f32 %v208, %v420
  %v629 = vmax.f32 %v210, %v421
  %v630 = vmax.f32 %v212, %v422
  %v631 = vmax.f32 %v214, %v423
  %v632 = vrot.slane %v8, 2
  %v633 = vrot.slane %v10, 2
  %v634 = vrot.slane %v12, 2
  %v635 = vrot.slane %v14, 2
  %v636 = vrot.slane %v16, 2
  %v637 = vrot.slane %v18, 2
  %v638 = vrot.slane %v20, 2
  %v639 = vrot.slane %v22, 2
  %v640 = vrot.slane %v24, 2
  %v641 = vrot.slane %v26, 2
  %v642 = vrot.slane %v28, 2
  %v643 = vrot.slane %v30, 2
  %v644 = vrot.slane %v32, 2
  %v645 = vrot.slane %v34, 2
  %v646 = vrot.slane %v36, 2
  %v647 = vrot.slane %v38, 2
  %v648 = vrot.slane %v40, 2
  %v649 = vrot.slane %v42, 2
  %v650 = vrot.slane %v44, 2
  %v651 = vrot.slane %v46, 2
  %v652 = vrot.slane %v48, 2
  %v653 = vrot.slane %v50, 2
  %v654 = vrot.slane %v52, 2
  %v655 = vrot.slane %v54, 2
  %v656 = vrot.slane %v56, 2
  %v657 = vrot.slane %v58, 2
  %v658 = vrot.slane %v60, 2
  %v659 = vrot.slane %v62, 2
  %v660 = vrot.slane %v64, 2
  %v661 = vrot.slane %v66, 2
  %v662 = vrot.slane %v68, 2
  %v663 = vrot.slane %v70, 2
  %v664 = vrot.slane %v72, 2
  %v665 = vrot.slane %v74, 2
  %v666 = vrot.slane %v76, 2
  %v667 = vrot.slane %v78, 2
  %v668 = vrot.slane %v80, 2
  %v669 = vrot.slane %v82, 2
  %v670 = vrot.slane %v84, 2
  %v671 = vrot.slane %v86, 2
  %v672 = vrot.slane %v88, 2
  %v673 = vrot.slane %v90, 2
  %v674 = vrot.slane %v92, 2
  %v675 = vrot.slane %v94, 2
  %v676 = vrot.slane %v96, 2
  %v677 = vrot.slane %v98, 2
  %v678 = vrot.slane %v100, 2
  %v679 = vrot.slane %v102, 2
  %v680 = vrot.slane %v104, 2
  %v681 = vrot.slane %v106, 2
  %v682 = vrot.slane %v108, 2
  %v683 = vrot.slane %v110, 2
  %v684 = vrot.slane %v112, 2
  %v685 = vrot.slane %v114, 2
  %v686 = vrot.slane %v116, 2
  %v687 = vrot.slane %v118, 2
  %v688 = vrot.slane %v120, 2
  %v689 = vrot.slane %v122, 2
  %v690 = vrot.slane %v124, 2
  %v691 = vrot.slane %v126, 2
  %v692 = vrot.slane %v128, 2
  %v693 = vrot.slane %v130, 2
  %v694 = vrot.slane %v132, 2
  %v695 = vrot.slane %v134, 2
  %v696 = vrot.slane %v136, 2
  %v697 = vrot.slane %v138, 2
  %v698 = vrot.slane %v140, 2
  %v699 = vrot.slane %v142, 2
  %v700 = vrot.slane %v144, 2
  %v701 = vrot.slane %v146, 2
  %v702 = vrot.slane %v148, 2
  %v703 = vrot.slane %v150, 2
  %v704 = vrot.slane %v152, 2
  %v705 = vrot.slane %v154, 2
  %v706 = vrot.slane %v156, 2
  %v707 = vrot.slane %v158, 2
  %v708 = vrot.slane %v160, 2
  %v709 = vrot.slane %v162, 2
  %v710 = vrot.slane %v164, 2
  %v711 = vrot.slane %v166, 2
  %v712 = vrot.slane %v168, 2
  %v713 = vrot.slane %v170, 2
  %v714 = vrot.slane %v172, 2
  %v715 = vrot.slane %v174, 2
  %v716 = vrot.slane %v176, 2
  %v717 = vrot.slane %v178, 2
  %v718 = vrot.slane %v180, 2
  %v719 = vrot.slane %v182, 2
  %v720 = vrot.slane %v184, 2
  %v721 = vrot.slane %v186, 2
  %v722 = vrot.slane %v188, 2
  %v723 = vrot.slane %v190, 2
  %v724 = vrot.slane %v192, 2
  %v725 = vrot.slane %v194, 2
  %v726 = vrot.slane %v196, 2
  %v727 = vrot.slane %v198, 2
  %v728 = vrot.slane %v200, 2
  %v729 = vrot.slane %v202, 2
  %v730 = vrot.slane %v204, 2
  %v731 = vrot.slane %v206, 2
  %v732 = vrot.slane %v208, 2
  %v733 = vrot.slane %v210, 2
  %v734 = vrot.slane %v212, 2
  %v735 = vrot.slane %v214, 2
  %v840 = vmax.f32 %v528, %v632
  %v841 = vmax.f32 %v529, %v633
  %v842 = vmax.f32 %v530, %v634
  %v843 = vmax.f32 %v531, %v635
  %v844 = vmax.f32 %v532, %v636
  %v845 = vmax.f32 %v533, %v637
  %v846 = vmax.f32 %v534, %v638
  %v847 = vmax.f32 %v535, %v639
  %v848 = vmax.f32 %v536, %v640
  %v849 = vmax.f32 %v537, %v641
  %v850 = vmax.f32 %v538, %v642
  %v851 = vmax.f32 %v539, %v643
  %v852 = vmax.f32 %v540, %v644
  %v853 = vmax.f32 %v541, %v645
  %v854 = vmax.f32 %v542, %v646
  %v855 = vmax.f32 %v543, %v647
  %v856 = vmax.f32 %v544, %v648
  %v857 = vmax.f32 %v545, %v649
  %v858 = vmax.f32 %v546, %v650
  %v859 = vmax.f32 %v547, %v651
  %v860 = vmax.f32 %v548, %v652
  %v861 = vmax.f32 %v549, %v653
  %v862 = vmax.f32 %v550, %v654
  %v863 = vmax.f32 %v551, %v655
  %v864 = vmax.f32 %v552, %v656
  %v865 = vmax.f32 %v553, %v657
  %v866 = vmax.f32 %v554, %v658
  %v867 = vmax.f32 %v555, %v659
  %v868 = vmax.f32 %v556, %v660
  %v869 = vmax.f32 %v557, %v661
  %v870 = vmax.f32 %v558, %v662
  %v871 = vmax.f32 %v559, %v663
  %v872 = vmax.f32 %v560, %v664
  %v873 = vmax.f32 %v561, %v665
  %v874 = vmax.f32 %v562, %v666
  %v875 = vmax.f32 %v563, %v667
  %v876 = vmax.f32 %v564, %v668
  %v877 = vmax.f32 %v565, %v669
  %v878 = vmax.f32 %v566, %v670
  %v879 = vmax.f32 %v567, %v671
  %v880 = vmax.f32 %v568, %v672
  %v881 = vmax.f32 %v569, %v673
  %v882 = vmax.f32 %v570, %v674
  %v883 = vmax.f32 %v571, %v675
  %v884 = vmax.f32 %v572, %v676
  %v885 = vmax.f32 %v573, %v677
  %v886 = vmax.f32 %v574, %v678
  %v887 = vmax.f32 %v575, %v679
  %v888 = vmax.f32 %v576, %v680
  %v889 = vmax.f32 %v577, %v681
  %v890 = vmax.f32 %v578, %v682
  %v891 = vmax.f32 %v579, %v683
  %v892 = vmax.f32 %v580, %v684
  %v893 = vmax.f32 %v581, %v685
  %v894 = vmax.f32 %v582, %v686
  %v895 = vmax.f32 %v583, %v687
  %v896 = vmax.f32 %v584, %v688
  %v897 = vmax.f32 %v585, %v689
  %v898 = vmax.f32 %v586, %v690
  %v899 = vmax.f32 %v587, %v691
  %v900 = vmax.f32 %v588, %v692
  %v901 = vmax.f32 %v589, %v693
  %v902 = vmax.f32 %v590, %v694
  %v903 = vmax.f32 %v591, %v695
  %v904 = vmax.f32 %v592, %v696
  %v905 = vmax.f32 %v593, %v697
  %v906 = vmax.f32 %v594, %v698
  %v907 = vmax.f32 %v595, %v699
  %v908 = vmax.f32 %v596, %v700
  %v909 = vmax.f32 %v597, %v701
  %v910 = vmax.f32 %v598, %v702
  %v911 = vmax.f32 %v599, %v703
  %v912 = vmax.f32 %v600, %v704
  %v913 = vmax.f32 %v601, %v705
  %v914 = vmax.f32 %v602, %v706
  %v915 = vmax.f32 %v603, %v707
  %v916 = vmax.f32 %v604, %v708
  %v917 = vmax.f32 %v605, %v709
  %v918 = vmax.f32 %v606, %v710
  %v919 = vmax.f32 %v607, %v711
  %v920 = vmax.f32 %v608, %v712
  %v921 = vmax.f32 %v609, %v713
  %v922 = vmax.f32 %v610, %v714
  %v923 = vmax.f32 %v611, %v715
  %v924 = vmax.f32 %v612, %v716
  %v925 = vmax.f32 %v613, %v717
  %v926 = vmax.f32 %v614, %v718
  %v927 = vmax.f32 %v615, %v719
  %v928 = vmax.f32 %v616, %v720
  %v929 = vmax.f32 %v617, %v721
  %v930 = vmax.f32 %v618, %v722
  %v931 = vmax.f32 %v619, %v723
  %v932 = vmax.f32 %v620, %v724
  %v933 = vmax.f32 %v621, %v725
  %v934 = vmax.f32 %v622, %v726
  %v935 = vmax.f32 %v623, %v727
  %v936 = vmax.f32 %v624, %v728
  %v937 = vmax.f32 %v625, %v729
  %v938 = vmax.f32 %v626, %v730
  %v939 = vmax.f32 %v627, %v731
  %v940 = vmax.f32 %v628, %v732
  %v941 = vmax.f32 %v629, %v733
  %v942 = vmax.f32 %v630, %v734
  %v943 = vmax.f32 %v631, %v735
  %v944 = vrot.slane %v8, 3
  %v945 = vrot.slane %v10, 3
  %v946 = vrot.slane %v12, 3
  %v947 = vrot.slane %v14, 3
  %v948 = vrot.slane %v16, 3
  %v949 = vrot.slane %v18, 3
  %v950 = vrot.slane %v20, 3
  %v951 = vrot.slane %v22, 3
  %v952 = vrot.slane %v24, 3
  %v953 = vrot.slane %v26, 3
  %v954 = vrot.slane %v28, 3
  %v955 = vrot.slane %v30, 3
  %v956 = vrot.slane %v32, 3
  %v957 = vrot.slane %v34, 3
  %v958 = vrot.slane %v36, 3
  %v959 = vrot.slane %v38, 3
  %v960 = vrot.slane %v40, 3
  %v961 = vrot.slane %v42, 3
  %v962 = vrot.slane %v44, 3
  %v963 = vrot.slane %v46, 3
  %v964 = vrot.slane %v48, 3
  %v965 = vrot.slane %v50, 3
  %v966 = vrot.slane %v52, 3
  %v967 = vrot.slane %v54, 3
  %v968 = vrot.slane %v56, 3
  %v969 = vrot.slane %v58, 3
  %v970 = vrot.slane %v60, 3
  %v971 = vrot.slane %v62, 3
  %v972 = vrot.slane %v64, 3
  %v973 = vrot.slane %v66, 3
  %v974 = vrot.slane %v68, 3
  %v975 = vrot.slane %v70, 3
  %v976 = vrot.slane %v72, 3
  %v977 = vrot.slane %v74, 3
  %v978 = vrot.slane %v76, 3
  %v979 = vrot.slane %v78, 3
  %v980 = vrot.slane %v80, 3
  %v981 = vrot.slane %v82, 3
  %v982 = vrot.slane %v84, 3
  %v983 = vrot.slane %v86, 3
  %v984 = vrot.slane %v88, 3
  %v985 = vrot.slane %v90, 3
  %v986 = vrot.slane %v92, 3
  %v987 = vrot.slane %v94, 3
  %v988 = vrot.slane %v96, 3
  %v989 = vrot.slane %v98, 3
  %v990 = vrot.slane %v100, 3
  %v991 = vrot.slane %v102, 3
  %v992 = vrot.slane %v104, 3
  %v993 = vrot.slane %v106, 3
  %v994 = vrot.slane %v108, 3
  %v995 = vrot.slane %v110, 3
  %v996 = vrot.slane %v112, 3
  %v997 = vrot.slane %v114, 3
  %v998 = vrot.slane %v116, 3
  %v999 = vrot.slane %v118, 3
  %v1000 = vrot.slane %v120, 3
  %v1001 = vrot.slane %v122, 3
  %v1002 = vrot.slane %v124, 3
  %v1003 = vrot.slane %v126, 3
  %v1004 = vrot.slane %v128, 3
  %v1005 = vrot.slane %v130, 3
  %v1006 = vrot.slane %v132, 3
  %v1007 = vrot.slane %v134, 3
  %v1008 = vrot.slane %v136, 3
  %v1009 = vrot.slane %v138, 3
  %v1010 = vrot.slane %v140, 3
  %v1011 = vrot.slane %v142, 3
  %v1012 = vrot.slane %v144, 3
  %v1013 = vrot.slane %v146, 3
  %v1014 = vrot.slane %v148, 3
  %v1015 = vrot.slane %v150, 3
  %v1016 = vrot.slane %v152, 3
  %v1017 = vrot.slane %v154, 3
  %v1018 = vrot.slane %v156, 3
  %v1019 = vrot.slane %v158, 3
  %v1020 = vrot.slane %v160, 3
  %v1021 = vrot.slane %v162, 3
  %v1022 = vrot.slane %v164, 3
  %v1023 = vrot.slane %v166, 3
  %v1024 = vrot.slane %v168, 3
  %v1025 = vrot.slane %v170, 3
  %v1026 = vrot.slane %v172, 3
  %v1027 = vrot.slane %v174, 3
  %v1028 = vrot.slane %v176, 3
  %v1029 = vrot.slane %v178, 3
  %v1030 = vrot.slane %v180, 3
  %v1031 = vrot.slane %v182, 3
  %v1032 = vrot.slane %v184, 3
  %v1033 = vrot.slane %v186, 3
  %v1034 = vrot.slane %v188, 3
  %v1035 = vrot.slane %v190, 3
  %v1036 = vrot.slane %v192, 3
  %v1037 = vrot.slane %v194, 3
  %v1038 = vrot.slane %v196, 3
  %v1039 = vrot.slane %v198, 3
  %v1040 = vrot.slane %v200, 3
  %v1041 = vrot.slane %v202, 3
  %v1042 = vrot.slane %v204, 3
  %v1043 = vrot.slane %v206, 3
  %v1044 = vrot.slane %v208, 3
  %v1045 = vrot.slane %v210, 3
  %v1046 = vrot.slane %v212, 3
  %v1047 = vrot.slane %v214, 3
  %v1152 = vmax.f32 %v840, %v944
  %v1153 = vmax.f32 %v841, %v945
  %v1154 = vmax.f32 %v842, %v946
  %v1155 = vmax.f32 %v843, %v947
  %v1156 = vmax.f32 %v844, %v948
  %v1157 = vmax.f32 %v845, %v949
  %v1158 = vmax.f32 %v846, %v950
  %v1159 = vmax.f32 %v847, %v951
  %v1160 = vmax.f32 %v848, %v952
  %v1161 = vmax.f32 %v849, %v953
  %v1162 = vmax.f32 %v850, %v954
  %v1163 = vmax.f32 %v851, %v955
  %v1164 = vmax.f32 %v852, %v956
  %v1165 = vmax.f32 %v853, %v957
  %v1166 = vmax.f32 %v854, %v958
  %v1167 = vmax.f32 %v855, %v959
  %v1168 = vmax.f32 %v856, %v960
  %v1169 = vmax.f32 %v857, %v961
  %v1170 = vmax.f32 %v858, %v962
  %v1171 = vmax.f32 %v859, %v963
  %v1172 = vmax.f32 %v860, %v964
  %v1173 = vmax.f32 %v861, %v965
  %v1174 = vmax.f32 %v862, %v966
  %v1175 = vmax.f32 %v863, %v967
  %v1176 = vmax.f32 %v864, %v968
  %v1177 = vmax.f32 %v865, %v969
  %v1178 = vmax.f32 %v866, %v970
  %v1179 = vmax.f32 %v867, %v971
  %v1180 = vmax.f32 %v868, %v972
  %v1181 = vmax.f32 %v869, %v973
  %v1182 = vmax.f32 %v870, %v974
  %v1183 = vmax.f32 %v871, %v975
  %v1184 = vmax.f32 %v872, %v976
  %v1185 = vmax.f32 %v873, %v977
  %v1186 = vmax.f32 %v874, %v978
  %v1187 = vmax.f32 %v875, %v979
  %v1188 = vmax.f32 %v876, %v980
  %v1189 = vmax.f32 %v877, %v981
  %v1190 = vmax.f32 %v878, %v982
  %v1191 = vmax.f32 %v879, %v983
  %v1192 = vmax.f32 %v880, %v984
  %v1193 = vmax.f32 %v881, %v985
  %v1194 = vmax.f32 %v882, %v986
  %v1195 = vmax.f32 %v883, %v987
  %v1196 = vmax.f32 %v884, %v988
  %v1197 = vmax.f32 %v885, %v989
  %v1198 = vmax.f32 %v886, %v990
  %v1199 = vmax.f32 %v887, %v991
  %v1200 = vmax.f32 %v888, %v992
  %v1201 = vmax.f32 %v889, %v993
  %v1202 = vmax.f32 %v890, %v994
  %v1203 = vmax.f32 %v891, %v995
  %v1204 = vmax.f32 %v892, %v996
  %v1205 = vmax.f32 %v893, %v997
  %v1206 = vmax.f32 %v894, %v998
  %v1207 = vmax.f32 %v895, %v999
  %v1208 = vmax.f32 %v896, %v1000
  %v1209 = vmax.f32 %v897, %v1001
  %v1210 = vmax.f32 %v898, %v1002
  %v1211 = vmax.f32 %v899, %v1003
  %v1212 = vmax.f32 %v900, %v1004
  %v1213 = vmax.f32 %v901, %v1005
  %v1214 = vmax.f32 %v902, %v1006
  %v1215 = vmax.f32 %v903, %v1007
  %v1216 = vmax.f32 %v904, %v1008
  %v1217 = vmax.f32 %v905, %v1009
  %v1218 = vmax.f32 %v906, %v1010
  %v1219 = vmax.f32 %v907, %v1011
  %v1220 = vmax.f32 %v908, %v1012
  %v1221 = vmax.f32 %v909, %v1013
  %v1222 = vmax.f32 %v910, %v1014
  %v1223 = vmax.f32 %v911, %v1015
  %v1224 = vmax.f32 %v912, %v1016
  %v1225 = vmax.f32 %v913, %v1017
  %v1226 = vmax.f32 %v914, %v1018
  %v1227 = vmax.f32 %v915, %v1019
  %v1228 = vmax.f32 %v916, %v1020
  %v1229 = vmax.f32 %v917, %v1021
  %v1230 = vmax.f32 %v918, %v1022
  %v1231 = vmax.f32 %v919, %v1023
  %v1232 = vmax.f32 %v920, %v1024
  %v1233 = vmax.f32 %v921, %v1025
  %v1234 = vmax.f32 %v922, %v1026
  %v1235 = vmax.f32 %v923, %v1027
  %v1236 = vmax.f32 %v924, %v1028
  %v1237 = vmax.f32 %v925, %v1029
  %v1238 = vmax.f32 %v926, %v1030
  %v1239 = vmax.f32 %v927, %v1031
  %v1240 = vmax.f32 %v928, %v1032
  %v1241 = vmax.f32 %v929, %v1033
  %v1242 = vmax.f32 %v930, %v1034
  %v1243 = vmax.f32 %v931, %v1035
  %v1244 = vmax.f32 %v932, %v1036
  %v1245 = vmax.f32 %v933, %v1037
  %v1246 = vmax.f32 %v934, %v1038
  %v1247 = vmax.f32 %v935, %v1039
  %v1248 = vmax.f32 %v936, %v1040
  %v1249 = vmax.f32 %v937, %v1041
  %v1250 = vmax.f32 %v938, %v1042
  %v1251 = vmax.f32 %v939, %v1043
  %v1252 = vmax.f32 %v940, %v1044
  %v1253 = vmax.f32 %v941, %v1045
  %v1254 = vmax.f32 %v942, %v1046
  %v1255 = vmax.f32 %v943, %v1047
  %v1256 = vrot.slane %v8, 4
  %v1257 = vrot.slane %v10, 4
  %v1258 = vrot.slane %v12, 4
  %v1259 = vrot.slane %v14, 4
  %v1260 = vrot.slane %v16, 4
  %v1261 = vrot.slane %v18, 4
  %v1262 = vrot.slane %v20, 4
  %v1263 = vrot.slane %v22, 4
  %v1264 = vrot.slane %v24, 4
  %v1265 = vrot.slane %v26, 4
  %v1266 = vrot.slane %v28, 4
  %v1267 = vrot.slane %v30, 4
  %v1268 = vrot.slane %v32, 4
  %v1269 = vrot.slane %v34, 4
  %v1270 = vrot.slane %v36, 4
  %v1271 = vrot.slane %v38, 4
  %v1272 = vrot.slane %v40, 4
  %v1273 = vrot.slane %v42, 4
  %v1274 = vrot.slane %v44, 4
  %v1275 = vrot.slane %v46, 4
  %v1276 = vrot.slane %v48, 4
  %v1277 = vrot.slane %v50, 4
  %v1278 = vrot.slane %v52, 4
  %v1279 = vrot.slane %v54, 4
  %v1280 = vrot.slane %v56, 4
  %v1281 = vrot.slane %v58, 4
  %v1282 = vrot.slane %v60, 4
  %v1283 = vrot.slane %v62, 4
  %v1284 = vrot.slane %v64, 4
  %v1285 = vrot.slane %v66, 4
  %v1286 = vrot.slane %v68, 4
  %v1287 = vrot.slane %v70, 4
  %v1288 = vrot.slane %v72, 4
  %v1289 = vrot.slane %v74, 4
  %v1290 = vrot.slane %v76, 4
  %v1291 = vrot.slane %v78, 4
  %v1292 = vrot.slane %v80, 4
  %v1293 = vrot.slane %v82, 4
  %v1294 = vrot.slane %v84, 4
  %v1295 = vrot.slane %v86, 4
  %v1296 = vrot.slane %v88, 4
  %v1297 = vrot.slane %v90, 4
  %v1298 = vrot.slane %v92, 4
  %v1299 = vrot.slane %v94, 4
  %v1300 = vrot.slane %v96, 4
  %v1301 = vrot.slane %v98, 4
  %v1302 = vrot.slane %v100, 4
  %v1303 = vrot.slane %v102, 4
  %v1304 = vrot.slane %v104, 4
  %v1305 = vrot.slane %v106, 4
  %v1306 = vrot.slane %v108, 4
  %v1307 = vrot.slane %v110, 4
  %v1308 = vrot.slane %v112, 4
  %v1309 = vrot.slane %v114, 4
  %v1310 = vrot.slane %v116, 4
  %v1311 = vrot.slane %v118, 4
  %v1312 = vrot.slane %v120, 4
  %v1313 = vrot.slane %v122, 4
  %v1314 = vrot.slane %v124, 4
  %v1315 = vrot.slane %v126, 4
  %v1316 = vrot.slane %v128, 4
  %v1317 = vrot.slane %v130, 4
  %v1318 = vrot.slane %v132, 4
  %v1319 = vrot.slane %v134, 4
  %v1320 = vrot.slane %v136, 4
  %v1321 = vrot.slane %v138, 4
  %v1322 = vrot.slane %v140, 4
  %v1323 = vrot.slane %v142, 4
  %v1324 = vrot.slane %v144, 4
  %v1325 = vrot.slane %v146, 4
  %v1326 = vrot.slane %v148, 4
  %v1327 = vrot.slane %v150, 4
  %v1328 = vrot.slane %v152, 4
  %v1329 = vrot.slane %v154, 4
  %v1330 = vrot.slane %v156, 4
  %v1331 = vrot.slane %v158, 4
  %v1332 = vrot.slane %v160, 4
  %v1333 = vrot.slane %v162, 4
  %v1334 = vrot.slane %v164, 4
  %v1335 = vrot.slane %v166, 4
  %v1336 = vrot.slane %v168, 4
  %v1337 = vrot.slane %v170, 4
  %v1338 = vrot.slane %v172, 4
  %v1339 = vrot.slane %v174, 4
  %v1340 = vrot.slane %v176, 4
  %v1341 = vrot.slane %v178, 4
  %v1342 = vrot.slane %v180, 4
  %v1343 = vrot.slane %v182, 4
  %v1344 = vrot.slane %v184, 4
  %v1345 = vrot.slane %v186, 4
  %v1346 = vrot.slane %v188, 4
  %v1347 = vrot.slane %v190, 4
  %v1348 = vrot.slane %v192, 4
  %v1349 = vrot.slane %v194, 4
  %v1350 = vrot.slane %v196, 4
  %v1351 = vrot.slane %v198, 4
  %v1352 = vrot.slane %v200, 4
  %v1353 = vrot.slane %v202, 4
  %v1354 = vrot.slane %v204, 4
  %v1355 = vrot.slane %v206, 4
  %v1356 = vrot.slane %v208, 4
  %v1357 = vrot.slane %v210, 4
  %v1358 = vrot.slane %v212, 4
  %v1359 = vrot.slane %v214, 4
  %v1464 = vmax.f32 %v1152, %v1256
  %v1465 = vmax.f32 %v1153, %v1257
  %v1466 = vmax.f32 %v1154, %v1258
  %v1467 = vmax.f32 %v1155, %v1259
  %v1468 = vmax.f32 %v1156, %v1260
  %v1469 = vmax.f32 %v1157, %v1261
  %v1470 = vmax.f32 %v1158, %v1262
  %v1471 = vmax.f32 %v1159, %v1263
  %v1472 = vmax.f32 %v1160, %v1264
  %v1473 = vmax.f32 %v1161, %v1265
  %v1474 = vmax.f32 %v1162, %v1266
  %v1475 = vmax.f32 %v1163, %v1267
  %v1476 = vmax.f32 %v1164, %v1268
  %v1477 = vmax.f32 %v1165, %v1269
  %v1478 = vmax.f32 %v1166, %v1270
  %v1479 = vmax.f32 %v1167, %v1271
  %v1480 = vmax.f32 %v1168, %v1272
  %v1481 = vmax.f32 %v1169, %v1273
  %v1482 = vmax.f32 %v1170, %v1274
  %v1483 = vmax.f32 %v1171, %v1275
  %v1484 = vmax.f32 %v1172, %v1276
  %v1485 = vmax.f32 %v1173, %v1277
  %v1486 = vmax.f32 %v1174, %v1278
  %v1487 = vmax.f32 %v1175, %v1279
  %v1488 = vmax.f32 %v1176, %v1280
  %v1489 = vmax.f32 %v1177, %v1281
  %v1490 = vmax.f32 %v1178, %v1282
  %v1491 = vmax.f32 %v1179, %v1283
  %v1492 = vmax.f32 %v1180, %v1284
  %v1493 = vmax.f32 %v1181, %v1285
  %v1494 = vmax.f32 %v1182, %v1286
  %v1495 = vmax.f32 %v1183, %v1287
  %v1496 = vmax.f32 %v1184, %v1288
  %v1497 = vmax.f32 %v1185, %v1289
  %v1498 = vmax.f32 %v1186, %v1290
  %v1499 = vmax.f32 %v1187, %v1291
  %v1500 = vmax.f32 %v1188, %v1292
  %v1501 = vmax.f32 %v1189, %v1293
  %v1502 = vmax.f32 %v1190, %v1294
  %v1503 = vmax.f32 %v1191, %v1295
  %v1504 = vmax.f32 %v1192, %v1296
  %v1505 = vmax.f32 %v1193, %v1297
  %v1506 = vmax.f32 %v1194, %v1298
  %v1507 = vmax.f32 %v1195, %v1299
  %v1508 = vmax.f32 %v1196, %v1300
  %v1509 = vmax.f32 %v1197, %v1301
  %v1510 = vmax.f32 %v1198, %v1302
  %v1511 = vmax.f32 %v1199, %v1303
  %v1512 = vmax.f32 %v1200, %v1304
  %v1513 = vmax.f32 %v1201, %v1305
  %v1514 = vmax.f32 %v1202, %v1306
  %v1515 = vmax.f32 %v1203, %v1307
  %v1516 = vmax.f32 %v1204, %v1308
  %v1517 = vmax.f32 %v1205, %v1309
  %v1518 = vmax.f32 %v1206, %v1310
  %v1519 = vmax.f32 %v1207, %v1311
  %v1520 = vmax.f32 %v1208, %v1312
  %v1521 = vmax.f32 %v1209, %v1313
  %v1522 = vmax.f32 %v1210, %v1314
  %v1523 = vmax.f32 %v1211, %v1315
  %v1524 = vmax.f32 %v1212, %v1316
  %v1525 = vmax.f32 %v1213, %v1317
  %v1526 = vmax.f32 %v1214, %v1318
  %v1527 = vmax.f32 %v1215, %v1319
  %v1528 = vmax.f32 %v1216, %v1320
  %v1529 = vmax.f32 %v1217, %v1321
  %v1530 = vmax.f32 %v1218, %v1322
  %v1531 = vmax.f32 %v1219, %v1323
  %v1532 = vmax.f32 %v1220, %v1324
  %v1533 = vmax.f32 %v1221, %v1325
  %v1534 = vmax.f32 %v1222, %v1326
  %v1535 = vmax.f32 %v1223, %v1327
  %v1536 = vmax.f32 %v1224, %v1328
  %v1537 = vmax.f32 %v1225, %v1329
  %v1538 = vmax.f32 %v1226, %v1330
  %v1539 = vmax.f32 %v1227, %v1331
  %v1540 = vmax.f32 %v1228, %v1332
  %v1541 = vmax.f32 %v1229, %v1333
  %v1542 = vmax.f32 %v1230, %v1334
  %v1543 = vmax.f32 %v1231, %v1335
  %v1544 = vmax.f32 %v1232, %v1336
  %v1545 = vmax.f32 %v1233, %v1337
  %v1546 = vmax.f32 %v1234, %v1338
  %v1547 = vmax.f32 %v1235, %v1339
  %v1548 = vmax.f32 %v1236, %v1340
  %v1549 = vmax.f32 %v1237, %v1341
  %v1550 = vmax.f32 %v1238, %v1342
  %v1551 = vmax.f32 %v1239, %v1343
  %v1552 = vmax.f32 %v1240, %v1344
  %v1553 = vmax.f32 %v1241, %v1345
  %v1554 = vmax.f32 %v1242, %v1346
  %v1555 = vmax.f32 %v1243, %v1347
  %v1556 = vmax.f32 %v1244, %v1348
  %v1557 = vmax.f32 %v1245, %v1349
  %v1558 = vmax.f32 %v1246, %v1350
  %v1559 = vmax.f32 %v1247, %v1351
  %v1560 = vmax.f32 %v1248, %v1352
  %v1561 = vmax.f32 %v1249, %v1353
  %v1562 = vmax.f32 %v1250, %v1354
  %v1563 = vmax.f32 %v1251, %v1355
  %v1564 = vmax.f32 %v1252, %v1356
  %v1565 = vmax.f32 %v1253, %v1357
  %v1566 = vmax.f32 %v1254, %v1358
  %v1567 = vmax.f32 %v1255, %v1359
  %v1568 = vrot.slane %v8, 5
  %v1569 = vrot.slane %v10, 5
  %v1570 = vrot.slane %v12, 5
  %v1571 = vrot.slane %v14, 5
  %v1572 = vrot.slane %v16, 5
  %v1573 = vrot.slane %v18, 5
  %v1574 = vrot.slane %v20, 5
  %v1575 = vrot.slane %v22, 5
  %v1576 = vrot.slane %v24, 5
  %v1577 = vrot.slane %v26, 5
  %v1578 = vrot.slane %v28, 5
  %v1579 = vrot.slane %v30, 5
  %v1580 = vrot.slane %v32, 5
  %v1581 = vrot.slane %v34, 5
  %v1582 = vrot.slane %v36, 5
  %v1583 = vrot.slane %v38, 5
  %v1584 = vrot.slane %v40, 5
  %v1585 = vrot.slane %v42, 5
  %v1586 = vrot.slane %v44, 5
  %v1587 = vrot.slane %v46, 5
  %v1588 = vrot.slane %v48, 5
  %v1589 = vrot.slane %v50, 5
  %v1590 = vrot.slane %v52, 5
  %v1591 = vrot.slane %v54, 5
  %v1592 = vrot.slane %v56, 5
  %v1593 = vrot.slane %v58, 5
  %v1594 = vrot.slane %v60, 5
  %v1595 = vrot.slane %v62, 5
  %v1596 = vrot.slane %v64, 5
  %v1597 = vrot.slane %v66, 5
  %v1598 = vrot.slane %v68, 5
  %v1599 = vrot.slane %v70, 5
  %v1600 = vrot.slane %v72, 5
  %v1601 = vrot.slane %v74, 5
  %v1602 = vrot.slane %v76, 5
  %v1603 = vrot.slane %v78, 5
  %v1604 = vrot.slane %v80, 5
  %v1605 = vrot.slane %v82, 5
  %v1606 = vrot.slane %v84, 5
  %v1607 = vrot.slane %v86, 5
  %v1608 = vrot.slane %v88, 5
  %v1609 = vrot.slane %v90, 5
  %v1610 = vrot.slane %v92, 5
  %v1611 = vrot.slane %v94, 5
  %v1612 = vrot.slane %v96, 5
  %v1613 = vrot.slane %v98, 5
  %v1614 = vrot.slane %v100, 5
  %v1615 = vrot.slane %v102, 5
  %v1616 = vrot.slane %v104, 5
  %v1617 = vrot.slane %v106, 5
  %v1618 = vrot.slane %v108, 5
  %v1619 = vrot.slane %v110, 5
  %v1620 = vrot.slane %v112, 5
  %v1621 = vrot.slane %v114, 5
  %v1622 = vrot.slane %v116, 5
  %v1623 = vrot.slane %v118, 5
  %v1624 = vrot.slane %v120, 5
  %v1625 = vrot.slane %v122, 5
  %v1626 = vrot.slane %v124, 5
  %v1627 = vrot.slane %v126, 5
  %v1628 = vrot.slane %v128, 5
  %v1629 = vrot.slane %v130, 5
  %v1630 = vrot.slane %v132, 5
  %v1631 = vrot.slane %v134, 5
  %v1632 = vrot.slane %v136, 5
  %v1633 = vrot.slane %v138, 5
  %v1634 = vrot.slane %v140, 5
  %v1635 = vrot.slane %v142, 5
  %v1636 = vrot.slane %v144, 5
  %v1637 = vrot.slane %v146, 5
  %v1638 = vrot.slane %v148, 5
  %v1639 = vrot.slane %v150, 5
  %v1640 = vrot.slane %v152, 5
  %v1641 = vrot.slane %v154, 5
  %v1642 = vrot.slane %v156, 5
  %v1643 = vrot.slane %v158, 5
  %v1644 = vrot.slane %v160, 5
  %v1645 = vrot.slane %v162, 5
  %v1646 = vrot.slane %v164, 5
  %v1647 = vrot.slane %v166, 5
  %v1648 = vrot.slane %v168, 5
  %v1649 = vrot.slane %v170, 5
  %v1650 = vrot.slane %v172, 5
  %v1651 = vrot.slane %v174, 5
  %v1652 = vrot.slane %v176, 5
  %v1653 = vrot.slane %v178, 5
  %v1654 = vrot.slane %v180, 5
  %v1655 = vrot.slane %v182, 5
  %v1656 = vrot.slane %v184, 5
  %v1657 = vrot.slane %v186, 5
  %v1658 = vrot.slane %v188, 5
  %v1659 = vrot.slane %v190, 5
  %v1660 = vrot.slane %v192, 5
  %v1661 = vrot.slane %v194, 5
  %v1662 = vrot.slane %v196, 5
  %v1663 = vrot.slane %v198, 5
  %v1664 = vrot.slane %v200, 5
  %v1665 = vrot.slane %v202, 5
  %v1666 = vrot.slane %v204, 5
  %v1667 = vrot.slane %v206, 5
  %v1668 = vrot.slane %v208, 5
  %v1669 = vrot.slane %v210, 5
  %v1670 = vrot.slane %v212, 5
  %v1671 = vrot.slane %v214, 5
  %v1776 = vmax.f32 %v1464, %v1568
  %v1777 = vmax.f32 %v1465, %v1569
  %v1778 = vmax.f32 %v1466, %v1570
  %v1779 = vmax.f32 %v1467, %v1571
  %v1780 = vmax.f32 %v1468, %v1572
  %v1781 = vmax.f32 %v1469, %v1573
  %v1782 = vmax.f32 %v1470, %v1574
  %v1783 = vmax.f32 %v1471, %v1575
  %v1784 = vmax.f32 %v1472, %v1576
  %v1785 = vmax.f32 %v1473, %v1577
  %v1786 = vmax.f32 %v1474, %v1578
  %v1787 = vmax.f32 %v1475, %v1579
  %v1788 = vmax.f32 %v1476, %v1580
  %v1789 = vmax.f32 %v1477, %v1581
  %v1790 = vmax.f32 %v1478, %v1582
  %v1791 = vmax.f32 %v1479, %v1583
  %v1792 = vmax.f32 %v1480, %v1584
  %v1793 = vmax.f32 %v1481, %v1585
  %v1794 = vmax.f32 %v1482, %v1586
  %v1795 = vmax.f32 %v1483, %v1587
  %v1796 = vmax.f32 %v1484, %v1588
  %v1797 = vmax.f32 %v1485, %v1589
  %v1798 = vmax.f32 %v1486, %v1590
  %v1799 = vmax.f32 %v1487, %v1591
  %v1800 = vmax.f32 %v1488, %v1592
  %v1801 = vmax.f32 %v1489, %v1593
  %v1802 = vmax.f32 %v1490, %v1594
  %v1803 = vmax.f32 %v1491, %v1595
  %v1804 = vmax.f32 %v1492, %v1596
  %v1805 = vmax.f32 %v1493, %v1597
  %v1806 = vmax.f32 %v1494, %v1598
  %v1807 = vmax.f32 %v1495, %v1599
  %v1808 = vmax.f32 %v1496, %v1600
  %v1809 = vmax.f32 %v1497, %v1601
  %v1810 = vmax.f32 %v1498, %v1602
  %v1811 = vmax.f32 %v1499, %v1603
  %v1812 = vmax.f32 %v1500, %v1604
  %v1813 = vmax.f32 %v1501, %v1605
  %v1814 = vmax.f32 %v1502, %v1606
  %v1815 = vmax.f32 %v1503, %v1607
  %v1816 = vmax.f32 %v1504, %v1608
  %v1817 = vmax.f32 %v1505, %v1609
  %v1818 = vmax.f32 %v1506, %v1610
  %v1819 = vmax.f32 %v1507, %v1611
  %v1820 = vmax.f32 %v1508, %v1612
  %v1821 = vmax.f32 %v1509, %v1613
  %v1822 = vmax.f32 %v1510, %v1614
  %v1823 = vmax.f32 %v1511, %v1615
  %v1824 = vmax.f32 %v1512, %v1616
  %v1825 = vmax.f32 %v1513, %v1617
  %v1826 = vmax.f32 %v1514, %v1618
  %v1827 = vmax.f32 %v1515, %v1619
  %v1828 = vmax.f32 %v1516, %v1620
  %v1829 = vmax.f32 %v1517, %v1621
  %v1830 = vmax.f32 %v1518, %v1622
  %v1831 = vmax.f32 %v1519, %v1623
  %v1832 = vmax.f32 %v1520, %v1624
  %v1833 = vmax.f32 %v1521, %v1625
  %v1834 = vmax.f32 %v1522, %v1626
  %v1835 = vmax.f32 %v1523, %v1627
  %v1836 = vmax.f32 %v1524, %v1628
  %v1837 = vmax.f32 %v1525, %v1629
  %v1838 = vmax.f32 %v1526, %v1630
  %v1839 = vmax.f32 %v1527, %v1631
  %v1840 = vmax.f32 %v1528, %v1632
  %v1841 = vmax.f32 %v1529, %v1633
  %v1842 = vmax.f32 %v1530, %v1634
  %v1843 = vmax.f32 %v1531, %v1635
  %v1844 = vmax.f32 %v1532, %v1636
  %v1845 = vmax.f32 %v1533, %v1637
  %v1846 = vmax.f32 %v1534, %v1638
  %v1847 = vmax.f32 %v1535, %v1639
  %v1848 = vmax.f32 %v1536, %v1640
  %v1849 = vmax.f32 %v1537, %v1641
  %v1850 = vmax.f32 %v1538, %v1642
  %v1851 = vmax.f32 %v1539, %v1643
  %v1852 = vmax.f32 %v1540, %v1644
  %v1853 = vmax.f32 %v1541, %v1645
  %v1854 = vmax.f32 %v1542, %v1646
  %v1855 = vmax.f32 %v1543, %v1647
  %v1856 = vmax.f32 %v1544, %v1648
  %v1857 = vmax.f32 %v1545, %v1649
  %v1858 = vmax.f32 %v1546, %v1650
  %v1859 = vmax.f32 %v1547, %v1651
  %v1860 = vmax.f32 %v1548, %v1652
  %v1861 = vmax.f32 %v1549, %v1653
  %v1862 = vmax.f32 %v1550, %v1654
  %v1863 = vmax.f32 %v1551, %v1655
  %v1864 = vmax.f32 %v1552, %v1656
  %v1865 = vmax.f32 %v1553, %v1657
  %v1866 = vmax.f32 %v1554, %v1658
  %v1867 = vmax.f32 %v1555, %v1659
  %v1868 = vmax.f32 %v1556, %v1660
  %v1869 = vmax.f32 %v1557, %v1661
  %v1870 = vmax.f32 %v1558, %v1662
  %v1871 = vmax.f32 %v1559, %v1663
  %v1872 = vmax.f32 %v1560, %v1664
  %v1873 = vmax.f32 %v1561, %v1665
  %v1874 = vmax.f32 %v1562, %v1666
  %v1875 = vmax.f32 %v1563, %v1667
  %v1876 = vmax.f32 %v1564, %v1668
  %v1877 = vmax.f32 %v1565, %v1669
  %v1878 = vmax.f32 %v1566, %v1670
  %v1879 = vmax.f32 %v1567, %v1671
  %v1880 = vrot.slane %v8, 6
  %v1881 = vrot.slane %v10, 6
  %v1882 = vrot.slane %v12, 6
  %v1883 = vrot.slane %v14, 6
  %v1884 = vrot.slane %v16, 6
  %v1885 = vrot.slane %v18, 6
  %v1886 = vrot.slane %v20, 6
  %v1887 = vrot.slane %v22, 6
  %v1888 = vrot.slane %v24, 6
  %v1889 = vrot.slane %v26, 6
  %v1890 = vrot.slane %v28, 6
  %v1891 = vrot.slane %v30, 6
  %v1892 = vrot.slane %v32, 6
  %v1893 = vrot.slane %v34, 6
  %v1894 = vrot.slane %v36, 6
  %v1895 = vrot.slane %v38, 6
  %v1896 = vrot.slane %v40, 6
  %v1897 = vrot.slane %v42, 6
  %v1898 = vrot.slane %v44, 6
  %v1899 = vrot.slane %v46, 6
  %v1900 = vrot.slane %v48, 6
  %v1901 = vrot.slane %v50, 6
  %v1902 = vrot.slane %v52, 6
  %v1903 = vrot.slane %v54, 6
  %v1904 = vrot.slane %v56, 6
  %v1905 = vrot.slane %v58, 6
  %v1906 = vrot.slane %v60, 6
  %v1907 = vrot.slane %v62, 6
  %v1908 = vrot.slane %v64, 6
  %v1909 = vrot.slane %v66, 6
  %v1910 = vrot.slane %v68, 6
  %v1911 = vrot.slane %v70, 6
  %v1912 = vrot.slane %v72, 6
  %v1913 = vrot.slane %v74, 6
  %v1914 = vrot.slane %v76, 6
  %v1915 = vrot.slane %v78, 6
  %v1916 = vrot.slane %v80, 6
  %v1917 = vrot.slane %v82, 6
  %v1918 = vrot.slane %v84, 6
  %v1919 = vrot.slane %v86, 6
  %v1920 = vrot.slane %v88, 6
  %v1921 = vrot.slane %v90, 6
  %v1922 = vrot.slane %v92, 6
  %v1923 = vrot.slane %v94, 6
  %v1924 = vrot.slane %v96, 6
  %v1925 = vrot.slane %v98, 6
  %v1926 = vrot.slane %v100, 6
  %v1927 = vrot.slane %v102, 6
  %v1928 = vrot.slane %v104, 6
  %v1929 = vrot.slane %v106, 6
  %v1930 = vrot.slane %v108, 6
  %v1931 = vrot.slane %v110, 6
  %v1932 = vrot.slane %v112, 6
  %v1933 = vrot.slane %v114, 6
  %v1934 = vrot.slane %v116, 6
  %v1935 = vrot.slane %v118, 6
  %v1936 = vrot.slane %v120, 6
  %v1937 = vrot.slane %v122, 6
  %v1938 = vrot.slane %v124, 6
  %v1939 = vrot.slane %v126, 6
  %v1940 = vrot.slane %v128, 6
  %v1941 = vrot.slane %v130, 6
  %v1942 = vrot.slane %v132, 6
  %v1943 = vrot.slane %v134, 6
  %v1944 = vrot.slane %v136, 6
  %v1945 = vrot.slane %v138, 6
  %v1946 = vrot.slane %v140, 6
  %v1947 = vrot.slane %v142, 6
  %v1948 = vrot.slane %v144, 6
  %v1949 = vrot.slane %v146, 6
  %v1950 = vrot.slane %v148, 6
  %v1951 = vrot.slane %v150, 6
  %v1952 = vrot.slane %v152, 6
  %v1953 = vrot.slane %v154, 6
  %v1954 = vrot.slane %v156, 6
  %v1955 = vrot.slane %v158, 6
  %v1956 = vrot.slane %v160, 6
  %v1957 = vrot.slane %v162, 6
  %v1958 = vrot.slane %v164, 6
  %v1959 = vrot.slane %v166, 6
  %v1960 = vrot.slane %v168, 6
  %v1961 = vrot.slane %v170, 6
  %v1962 = vrot.slane %v172, 6
  %v1963 = vrot.slane %v174, 6
  %v1964 = vrot.slane %v176, 6
  %v1965 = vrot.slane %v178, 6
  %v1966 = vrot.slane %v180, 6
  %v1967 = vrot.slane %v182, 6
  %v1968 = vrot.slane %v184, 6
  %v1969 = vrot.slane %v186, 6
  %v1970 = vrot.slane %v188, 6
  %v1971 = vrot.slane %v190, 6
  %v1972 = vrot.slane %v192, 6
  %v1973 = vrot.slane %v194, 6
  %v1974 = vrot.slane %v196, 6
  %v1975 = vrot.slane %v198, 6
  %v1976 = vrot.slane %v200, 6
  %v1977 = vrot.slane %v202, 6
  %v1978 = vrot.slane %v204, 6
  %v1979 = vrot.slane %v206, 6
  %v1980 = vrot.slane %v208, 6
  %v1981 = vrot.slane %v210, 6
  %v1982 = vrot.slane %v212, 6
  %v1983 = vrot.slane %v214, 6
  %v2088 = vmax.f32 %v1776, %v1880
  %v2089 = vmax.f32 %v1777, %v1881
  %v2090 = vmax.f32 %v1778, %v1882
  %v2091 = vmax.f32 %v1779, %v1883
  %v2092 = vmax.f32 %v1780, %v1884
  %v2093 = vmax.f32 %v1781, %v1885
  %v2094 = vmax.f32 %v1782, %v1886
  %v2095 = vmax.f32 %v1783, %v1887
  %v2096 = vmax.f32 %v1784, %v1888
  %v2097 = vmax.f32 %v1785, %v1889
  %v2098 = vmax.f32 %v1786, %v1890
  %v2099 = vmax.f32 %v1787, %v1891
  %v2100 = vmax.f32 %v1788, %v1892
  %v2101 = vmax.f32 %v1789, %v1893
  %v2102 = vmax.f32 %v1790, %v1894
  %v2103 = vmax.f32 %v1791, %v1895
  %v2104 = vmax.f32 %v1792, %v1896
  %v2105 = vmax.f32 %v1793, %v1897
  %v2106 = vmax.f32 %v1794, %v1898
  %v2107 = vmax.f32 %v1795, %v1899
  %v2108 = vmax.f32 %v1796, %v1900
  %v2109 = vmax.f32 %v1797, %v1901
  %v2110 = vmax.f32 %v1798, %v1902
  %v2111 = vmax.f32 %v1799, %v1903
  %v2112 = vmax.f32 %v1800, %v1904
  %v2113 = vmax.f32 %v1801, %v1905
  %v2114 = vmax.f32 %v1802, %v1906
  %v2115 = vmax.f32 %v1803, %v1907
  %v2116 = vmax.f32 %v1804, %v1908
  %v2117 = vmax.f32 %v1805, %v1909
  %v2118 = vmax.f32 %v1806, %v1910
  %v2119 = vmax.f32 %v1807, %v1911
  %v2120 = vmax.f32 %v1808, %v1912
  %v2121 = vmax.f32 %v1809, %v1913
  %v2122 = vmax.f32 %v1810, %v1914
  %v2123 = vmax.f32 %v1811, %v1915
  %v2124 = vmax.f32 %v1812, %v1916
  %v2125 = vmax.f32 %v1813, %v1917
  %v2126 = vmax.f32 %v1814, %v1918
  %v2127 = vmax.f32 %v1815, %v1919
  %v2128 = vmax.f32 %v1816, %v1920
  %v2129 = vmax.f32 %v1817, %v1921
  %v2130 = vmax.f32 %v1818, %v1922
  %v2131 = vmax.f32 %v1819, %v1923
  %v2132 = vmax.f32 %v1820, %v1924
  %v2133 = vmax.f32 %v1821, %v1925
  %v2134 = vmax.f32 %v1822, %v1926
  %v2135 = vmax.f32 %v1823, %v1927
  %v2136 = vmax.f32 %v1824, %v1928
  %v2137 = vmax.f32 %v1825, %v1929
  %v2138 = vmax.f32 %v1826, %v1930
  %v2139 = vmax.f32 %v1827, %v1931
  %v2140 = vmax.f32 %v1828, %v1932
  %v2141 = vmax.f32 %v1829, %v1933
  %v2142 = vmax.f32 %v1830, %v1934
  %v2143 = vmax.f32 %v1831, %v1935
  %v2144 = vmax.f32 %v1832, %v1936
  %v2145 = vmax.f32 %v1833, %v1937
  %v2146 = vmax.f32 %v1834, %v1938
  %v2147 = vmax.f32 %v1835, %v1939
  %v2148 = vmax.f32 %v1836, %v1940
  %v2149 = vmax.f32 %v1837, %v1941
  %v2150 = vmax.f32 %v1838, %v1942
  %v2151 = vmax.f32 %v1839, %v1943
  %v2152 = vmax.f32 %v1840, %v1944
  %v2153 = vmax.f32 %v1841, %v1945
  %v2154 = vmax.f32 %v1842, %v1946
  %v2155 = vmax.f32 %v1843, %v1947
  %v2156 = vmax.f32 %v1844, %v1948
  %v2157 = vmax.f32 %v1845, %v1949
  %v2158 = vmax.f32 %v1846, %v1950
  %v2159 = vmax.f32 %v1847, %v1951
  %v2160 = vmax.f32 %v1848, %v1952
  %v2161 = vmax.f32 %v1849, %v1953
  %v2162 = vmax.f32 %v1850, %v1954
  %v2163 = vmax.f32 %v1851, %v1955
  %v2164 = vmax.f32 %v1852, %v1956
  %v2165 = vmax.f32 %v1853, %v1957
  %v2166 = vmax.f32 %v1854, %v1958
  %v2167 = vmax.f32 %v1855, %v1959
  %v2168 = vmax.f32 %v1856, %v1960
  %v2169 = vmax.f32 %v1857, %v1961
  %v2170 = vmax.f32 %v1858, %v1962
  %v2171 = vmax.f32 %v1859, %v1963
  %v2172 = vmax.f32 %v1860, %v1964
  %v2173 = vmax.f32 %v1861, %v1965
  %v2174 = vmax.f32 %v1862, %v1966
  %v2175 = vmax.f32 %v1863, %v1967
  %v2176 = vmax.f32 %v1864, %v1968
  %v2177 = vmax.f32 %v1865, %v1969
  %v2178 = vmax.f32 %v1866, %v1970
  %v2179 = vmax.f32 %v1867, %v1971
  %v2180 = vmax.f32 %v1868, %v1972
  %v2181 = vmax.f32 %v1869, %v1973
  %v2182 = vmax.f32 %v1870, %v1974
  %v2183 = vmax.f32 %v1871, %v1975
  %v2184 = vmax.f32 %v1872, %v1976
  %v2185 = vmax.f32 %v1873, %v1977
  %v2186 = vmax.f32 %v1874, %v1978
  %v2187 = vmax.f32 %v1875, %v1979
  %v2188 = vmax.f32 %v1876, %v1980
  %v2189 = vmax.f32 %v1877, %v1981
  %v2190 = vmax.f32 %v1878, %v1982
  %v2191 = vmax.f32 %v1879, %v1983
  %v2192 = vrot.slane %v8, 7
  %v2193 = vrot.slane %v10, 7
  %v2194 = vrot.slane %v12, 7
  %v2195 = vrot.slane %v14, 7
  %v2196 = vrot.slane %v16, 7
  %v2197 = vrot.slane %v18, 7
  %v2198 = vrot.slane %v20, 7
  %v2199 = vrot.slane %v22, 7
  %v2200 = vrot.slane %v24, 7
  %v2201 = vrot.slane %v26, 7
  %v2202 = vrot.slane %v28, 7
  %v2203 = vrot.slane %v30, 7
  %v2204 = vrot.slane %v32, 7
  %v2205 = vrot.slane %v34, 7
  %v2206 = vrot.slane %v36, 7
  %v2207 = vrot.slane %v38, 7
  %v2208 = vrot.slane %v40, 7
  %v2209 = vrot.slane %v42, 7
  %v2210 = vrot.slane %v44, 7
  %v2211 = vrot.slane %v46, 7
  %v2212 = vrot.slane %v48, 7
  %v2213 = vrot.slane %v50, 7
  %v2214 = vrot.slane %v52, 7
  %v2215 = vrot.slane %v54, 7
  %v2216 = vrot.slane %v56, 7
  %v2217 = vrot.slane %v58, 7
  %v2218 = vrot.slane %v60, 7
  %v2219 = vrot.slane %v62, 7
  %v2220 = vrot.slane %v64, 7
  %v2221 = vrot.slane %v66, 7
  %v2222 = vrot.slane %v68, 7
  %v2223 = vrot.slane %v70, 7
  %v2224 = vrot.slane %v72, 7
  %v2225 = vrot.slane %v74, 7
  %v2226 = vrot.slane %v76, 7
  %v2227 = vrot.slane %v78, 7
  %v2228 = vrot.slane %v80, 7
  %v2229 = vrot.slane %v82, 7
  %v2230 = vrot.slane %v84, 7
  %v2231 = vrot.slane %v86, 7
  %v2232 = vrot.slane %v88, 7
  %v2233 = vrot.slane %v90, 7
  %v2234 = vrot.slane %v92, 7
  %v2235 = vrot.slane %v94, 7
  %v2236 = vrot.slane %v96, 7
  %v2237 = vrot.slane %v98, 7
  %v2238 = vrot.slane %v100, 7
  %v2239 = vrot.slane %v102, 7
  %v2240 = vrot.slane %v104, 7
  %v2241 = vrot.slane %v106, 7
  %v2242 = vrot.slane %v108, 7
  %v2243 = vrot.slane %v110, 7
  %v2244 = vrot.slane %v112, 7
  %v2245 = vrot.slane %v114, 7
  %v2246 = vrot.slane %v116, 7
  %v2247 = vrot.slane %v118, 7
  %v2248 = vrot.slane %v120, 7
  %v2249 = vrot.slane %v122, 7
  %v2250 = vrot.slane %v124, 7
  %v2251 = vrot.slane %v126, 7
  %v2252 = vrot.slane %v128, 7
  %v2253 = vrot.slane %v130, 7
  %v2254 = vrot.slane %v132, 7
  %v2255 = vrot.slane %v134, 7
  %v2256 = vrot.slane %v136, 7
  %v2257 = vrot.slane %v138, 7
  %v2258 = vrot.slane %v140, 7
  %v2259 = vrot.slane %v142, 7
  %v2260 = vrot.slane %v144, 7
  %v2261 = vrot.slane %v146, 7
  %v2262 = vrot.slane %v148, 7
  %v2263 = vrot.slane %v150, 7
  %v2264 = vrot.slane %v152, 7
  %v2265 = vrot.slane %v154, 7
  %v2266 = vrot.slane %v156, 7
  %v2267 = vrot.slane %v158, 7
  %v2268 = vrot.slane %v160, 7
  %v2269 = vrot.slane %v162, 7
  %v2270 = vrot.slane %v164, 7
  %v2271 = vrot.slane %v166, 7
  %v2272 = vrot.slane %v168, 7
  %v2273 = vrot.slane %v170, 7
  %v2274 = vrot.slane %v172, 7
  %v2275 = vrot.slane %v174, 7
  %v2276 = vrot.slane %v176, 7
  %v2277 = vrot.slane %v178, 7
  %v2278 = vrot.slane %v180, 7
  %v2279 = vrot.slane %v182, 7
  %v2280 = vrot.slane %v184, 7
  %v2281 = vrot.slane %v186, 7
  %v2282 = vrot.slane %v188, 7
  %v2283 = vrot.slane %v190, 7
  %v2284 = vrot.slane %v192, 7
  %v2285 = vrot.slane %v194, 7
  %v2286 = vrot.slane %v196, 7
  %v2287 = vrot.slane %v198, 7
  %v2288 = vrot.slane %v200, 7
  %v2289 = vrot.slane %v202, 7
  %v2290 = vrot.slane %v204, 7
  %v2291 = vrot.slane %v206, 7
  %v2292 = vrot.slane %v208, 7
  %v2293 = vrot.slane %v210, 7
  %v2294 = vrot.slane %v212, 7
  %v2295 = vrot.slane %v214, 7
  %v2400 = vmax.f32 %v2088, %v2192
  %v2401 = vmax.f32 %v2089, %v2193
  %v2402 = vmax.f32 %v2090, %v2194
  %v2403 = vmax.f32 %v2091, %v2195
  %v2404 = vmax.f32 %v2092, %v2196
  %v2405 = vmax.f32 %v2093, %v2197
  %v2406 = vmax.f32 %v2094, %v2198
  %v2407 = vmax.f32 %v2095, %v2199
  %v2408 = vmax.f32 %v2096, %v2200
  %v2409 = vmax.f32 %v2097, %v2201
  %v2410 = vmax.f32 %v2098, %v2202
  %v2411 = vmax.f32 %v2099, %v2203
  %v2412 = vmax.f32 %v2100, %v2204
  %v2413 = vmax.f32 %v2101, %v2205
  %v2414 = vmax.f32 %v2102, %v2206
  %v2415 = vmax.f32 %v2103, %v2207
  %v2416 = vmax.f32 %v2104, %v2208
  %v2417 = vmax.f32 %v2105, %v2209
  %v2418 = vmax.f32 %v2106, %v2210
  %v2419 = vmax.f32 %v2107, %v2211
  %v2420 = vmax.f32 %v2108, %v2212
  %v2421 = vmax.f32 %v2109, %v2213
  %v2422 = vmax.f32 %v2110, %v2214
  %v2423 = vmax.f32 %v2111, %v2215
  %v2424 = vmax.f32 %v2112, %v2216
  %v2425 = vmax.f32 %v2113, %v2217
  %v2426 = vmax.f32 %v2114, %v2218
  %v2427 = vmax.f32 %v2115, %v2219
  %v2428 = vmax.f32 %v2116, %v2220
  %v2429 = vmax.f32 %v2117, %v2221
  %v2430 = vmax.f32 %v2118, %v2222
  %v2431 = vmax.f32 %v2119, %v2223
  %v2432 = vmax.f32 %v2120, %v2224
  %v2433 = vmax.f32 %v2121, %v2225
  %v2434 = vmax.f32 %v2122, %v2226
  %v2435 = vmax.f32 %v2123, %v2227
  %v2436 = vmax.f32 %v2124, %v2228
  %v2437 = vmax.f32 %v2125, %v2229
  %v2438 = vmax.f32 %v2126, %v2230
  %v2439 = vmax.f32 %v2127, %v2231
  %v2440 = vmax.f32 %v2128, %v2232
  %v2441 = vmax.f32 %v2129, %v2233
  %v2442 = vmax.f32 %v2130, %v2234
  %v2443 = vmax.f32 %v2131, %v2235
  %v2444 = vmax.f32 %v2132, %v2236
  %v2445 = vmax.f32 %v2133, %v2237
  %v2446 = vmax.f32 %v2134, %v2238
  %v2447 = vmax.f32 %v2135, %v2239
  %v2448 = vmax.f32 %v2136, %v2240
  %v2449 = vmax.f32 %v2137, %v2241
  %v2450 = vmax.f32 %v2138, %v2242
  %v2451 = vmax.f32 %v2139, %v2243
  %v2452 = vmax.f32 %v2140, %v2244
  %v2453 = vmax.f32 %v2141, %v2245
  %v2454 = vmax.f32 %v2142, %v2246
  %v2455 = vmax.f32 %v2143, %v2247
  %v2456 = vmax.f32 %v2144, %v2248
  %v2457 = vmax.f32 %v2145, %v2249
  %v2458 = vmax.f32 %v2146, %v2250
  %v2459 = vmax.f32 %v2147, %v2251
  %v2460 = vmax.f32 %v2148, %v2252
  %v2461 = vmax.f32 %v2149, %v2253
  %v2462 = vmax.f32 %v2150, %v2254
  %v2463 = vmax.f32 %v2151, %v2255
  %v2464 = vmax.f32 %v2152, %v2256
  %v2465 = vmax.f32 %v2153, %v2257
  %v2466 = vmax.f32 %v2154, %v2258
  %v2467 = vmax.f32 %v2155, %v2259
  %v2468 = vmax.f32 %v2156, %v2260
  %v2469 = vmax.f32 %v2157, %v2261
  %v2470 = vmax.f32 %v2158, %v2262
  %v2471 = vmax.f32 %v2159, %v2263
  %v2472 = vmax.f32 %v2160, %v2264
  %v2473 = vmax.f32 %v2161, %v2265
  %v2474 = vmax.f32 %v2162, %v2266
  %v2475 = vmax.f32 %v2163, %v2267
  %v2476 = vmax.f32 %v2164, %v2268
  %v2477 = vmax.f32 %v2165, %v2269
  %v2478 = vmax.f32 %v2166, %v2270
  %v2479 = vmax.f32 %v2167, %v2271
  %v2480 = vmax.f32 %v2168, %v2272
  %v2481 = vmax.f32 %v2169, %v2273
  %v2482 = vmax.f32 %v2170, %v2274
  %v2483 = vmax.f32 %v2171, %v2275
  %v2484 = vmax.f32 %v2172, %v2276
  %v2485 = vmax.f32 %v2173, %v2277
  %v2486 = vmax.f32 %v2174, %v2278
  %v2487 = vmax.f32 %v2175, %v2279
  %v2488 = vmax.f32 %v2176, %v2280
  %v2489 = vmax.f32 %v2177, %v2281
  %v2490 = vmax.f32 %v2178, %v2282
  %v2491 = vmax.f32 %v2179, %v2283
  %v2492 = vmax.f32 %v2180, %v2284
  %v2493 = vmax.f32 %v2181, %v2285
  %v2494 = vmax.f32 %v2182, %v2286
  %v2495 = vmax.f32 %v2183, %v2287
  %v2496 = vmax.f32 %v2184, %v2288
  %v2497 = vmax.f32 %v2185, %v2289
  %v2498 = vmax.f32 %v2186, %v2290
  %v2499 = vmax.f32 %v2187, %v2291
  %v2500 = vmax.f32 %v2188, %v2292
  %v2501 = vmax.f32 %v2189, %v2293
  %v2502 = vmax.f32 %v2190, %v2294
  %v2503 = vmax.f32 %v2191, %v2295
  %v2504 = vmax.f32 %v2400, %v9
  %v2505 = vmax.f32 %v2401, %v11
  %v2506 = vmax.f32 %v2402, %v13
  %v2507 = vmax.f32 %v2403, %v15
  %v2508 = vmax.f32 %v2404, %v17
  %v2509 = vmax.f32 %v2405, %v19
  %v2510 = vmax.f32 %v2406, %v21
  %v2511 = vmax.f32 %v2407, %v23
  %v2512 = vmax.f32 %v2408, %v25
  %v2513 = vmax.f32 %v2409, %v27
  %v2514 = vmax.f32 %v2410, %v29
  %v2515 = vmax.f32 %v2411, %v31
  %v2516 = vmax.f32 %v2412, %v33
  %v2517 = vmax.f32 %v2413, %v35
  %v2518 = vmax.f32 %v2414, %v37
  %v2519 = vmax.f32 %v2415, %v39
  %v2520 = vmax.f32 %v2416, %v41
  %v2521 = vmax.f32 %v2417, %v43
  %v2522 = vmax.f32 %v2418, %v45
  %v2523 = vmax.f32 %v2419, %v47
  %v2524 = vmax.f32 %v2420, %v49
  %v2525 = vmax.f32 %v2421, %v51
  %v2526 = vmax.f32 %v2422, %v53
  %v2527 = vmax.f32 %v2423, %v55
  %v2528 = vmax.f32 %v2424, %v57
  %v2529 = vmax.f32 %v2425, %v59
  %v2530 = vmax.f32 %v2426, %v61
  %v2531 = vmax.f32 %v2427, %v63
  %v2532 = vmax.f32 %v2428, %v65
  %v2533 = vmax.f32 %v2429, %v67
  %v2534 = vmax.f32 %v2430, %v69
  %v2535 = vmax.f32 %v2431, %v71
  %v2536 = vmax.f32 %v2432, %v73
  %v2537 = vmax.f32 %v2433, %v75
  %v2538 = vmax.f32 %v2434, %v77
  %v2539 = vmax.f32 %v2435, %v79
  %v2540 = vmax.f32 %v2436, %v81
  %v2541 = vmax.f32 %v2437, %v83
  %v2542 = vmax.f32 %v2438, %v85
  %v2543 = vmax.f32 %v2439, %v87
  %v2544 = vmax.f32 %v2440, %v89
  %v2545 = vmax.f32 %v2441, %v91
  %v2546 = vmax.f32 %v2442, %v93
  %v2547 = vmax.f32 %v2443, %v95
  %v2548 = vmax.f32 %v2444, %v97
  %v2549 = vmax.f32 %v2445, %v99
  %v2550 = vmax.f32 %v2446, %v101
  %v2551 = vmax.f32 %v2447, %v103
  %v2552 = vmax.f32 %v2448, %v105
  %v2553 = vmax.f32 %v2449, %v107
  %v2554 = vmax.f32 %v2450, %v109
  %v2555 = vmax.f32 %v2451, %v111
  %v2556 = vmax.f32 %v2452, %v113
  %v2557 = vmax.f32 %v2453, %v115
  %v2558 = vmax.f32 %v2454, %v117
  %v2559 = vmax.f32 %v2455, %v119
  %v2560 = vmax.f32 %v2456, %v121
  %v2561 = vmax.f32 %v2457, %v123
  %v2562 = vmax.f32 %v2458, %v125
  %v2563 = vmax.f32 %v2459, %v127
  %v2564 = vmax.f32 %v2460, %v129
  %v2565 = vmax.f32 %v2461, %v131
  %v2566 = vmax.f32 %v2462, %v133
  %v2567 = vmax.f32 %v2463, %v135
  %v2568 = vmax.f32 %v2464, %v137
  %v2569 = vmax.f32 %v2465, %v139
  %v2570 = vmax.f32 %v2466, %v141
  %v2571 = vmax.f32 %v2467, %v143
  %v2572 = vmax.f32 %v2468, %v145
  %v2573 = vmax.f32 %v2469, %v147
  %v2574 = vmax.f32 %v2470, %v149
  %v2575 = vmax.f32 %v2471, %v151
  %v2576 = vmax.f32 %v2472, %v153
  %v2577 = vmax.f32 %v2473, %v155
  %v2578 = vmax.f32 %v2474, %v157
  %v2579 = vmax.f32 %v2475, %v159
  %v2580 = vmax.f32 %v2476, %v161
  %v2581 = vmax.f32 %v2477, %v163
  %v2582 = vmax.f32 %v2478, %v165
  %v2583 = vmax.f32 %v2479, %v167
  %v2584 = vmax.f32 %v2480, %v169
  %v2585 = vmax.f32 %v2481, %v171
  %v2586 = vmax.f32 %v2482, %v173
  %v2587 = vmax.f32 %v2483, %v175
  %v2588 = vmax.f32 %v2484, %v177
  %v2589 = vmax.f32 %v2485, %v179
  %v2590 = vmax.f32 %v2486, %v181
  %v2591 = vmax.f32 %v2487, %v183
  %v2592 = vmax.f32 %v2488, %v185
  %v2593 = vmax.f32 %v2489, %v187
  %v2594 = vmax.f32 %v2490, %v189
  %v2595 = vmax.f32 %v2491, %v191
  %v2596 = vmax.f32 %v2492, %v193
  %v2597 = vmax.f32 %v2493, %v195
  %v2598 = vmax.f32 %v2494, %v197
  %v2599 = vmax.f32 %v2495, %v199
  %v2600 = vmax.f32 %v2496, %v201
  %v2601 = vmax.f32 %v2497, %v203
  %v2602 = vmax.f32 %v2498, %v205
  %v2603 = vmax.f32 %v2499, %v207
  %v2604 = vmax.f32 %v2500, %v209
  %v2605 = vmax.f32 %v2501, %v211
  %v2606 = vmax.f32 %v2502, %v213
  %v2607 = vmax.f32 %v2503, %v215
  %v2712 = vrot.slane %v2505, 7
  %vm2713 = vcmask 1041409
  %v2714 = vsel %vm2713, %v2712, %v2504
  %v2715 = vrot.slane %v2506, 6
  %vm2716 = vcmask 1042434
  %v2717 = vsel %vm2716, %v2715, %v2714
  %v2718 = vrot.slane %v2507, 5
  %vm2719 = vcmask 1043459
  %v2720 = vsel %vm2719, %v2718, %v2717
  %v2721 = vrot.slane %v2508, 4
  %vm2722 = vcmask 1044484
  %v2723 = vsel %vm2722, %v2721, %v2720
  %v2724 = vrot.slane %v2509, 3
  %vm2725 = vcmask 1045509
  %v2726 = vsel %vm2725, %v2724, %v2723
  %v2727 = vrot.slane %v2510, 2
  %vm2728 = vcmask 1046534
  %v2729 = vsel %vm2728, %v2727, %v2726
  %v2730 = vrot.slane %v2511, 1
  %vm2731 = vcmask 1047559
  %v2732 = vsel %vm2731, %v2730, %v2729
  %v2733 = vrot.slane %v2513, 7
  %v2734 = vsel %vm2713, %v2733, %v2512
  %v2735 = vrot.slane %v2514, 6
  %v2736 = vsel %vm2716, %v2735, %v2734
  %v2737 = vrot.slane %v2515, 5
  %v2738 = vsel %vm2719, %v2737, %v2736
  %v2739 = vrot.slane %v2516, 4
  %v2740 = vsel %vm2722, %v2739, %v2738
  %v2741 = vrot.slane %v2517, 3
  %v2742 = vsel %vm2725, %v2741, %v2740
  %v2743 = vrot.slane %v2518, 2
  %v2744 = vsel %vm2728, %v2743, %v2742
  %v2745 = vrot.slane %v2519, 1
  %v2746 = vsel %vm2731, %v2745, %v2744
  %v2747 = vrot.slane %v2521, 7
  %v2748 = vsel %vm2713, %v2747, %v2520
  %v2749 = vrot.slane %v2522, 6
  %v2750 = vsel %vm2716, %v2749, %v2748
  %v2751 = vrot.slane %v2523, 5
  %v2752 = vsel %vm2719, %v2751, %v2750
  %v2753 = vrot.slane %v2524, 4
  %v2754 = vsel %vm2722, %v2753, %v2752
  %v2755 = vrot.slane %v2525, 3
  %v2756 = vsel %vm2725, %v2755, %v2754
  %v2757 = vrot.slane %v2526, 2
  %v2758 = vsel %vm2728, %v2757, %v2756
  %v2759 = vrot.slane %v2527, 1
  %v2760 = vsel %vm2731, %v2759, %v2758
  %v2761 = vrot.slane %v2529, 7
  %v2762 = vsel %vm2713, %v2761, %v2528
  %v2763 = vrot.slane %v2530, 6
  %v2764 = vsel %vm2716, %v2763, %v2762
  %v2765 = vrot.slane %v2531, 5
  %v2766 = vsel %vm2719, %v2765, %v2764
  %v2767 = vrot.slane %v2532, 4
  %v2768 = vsel %vm2722, %v2767, %v2766
  %v2769 = vrot.slane %v2533, 3
  %v2770 = vsel %vm2725, %v2769, %v2768
  %v2771 = vrot.slane %v2534, 2
  %v2772 = vsel %vm2728, %v2771, %v2770
  %v2773 = vrot.slane %v2535, 1
  %v2774 = vsel %vm2731, %v2773, %v2772
  %v2775 = vrot.slane %v2537, 7
  %v2776 = vsel %vm2713, %v2775, %v2536
  %v2777 = vrot.slane %v2538, 6
  %v2778 = vsel %vm2716, %v2777, %v2776
  %v2779 = vrot.slane %v2539, 5
  %v2780 = vsel %vm2719, %v2779, %v2778
  %v2781 = vrot.slane %v2540, 4
  %v2782 = vsel %vm2722, %v2781, %v2780
  %v2783 = vrot.slane %v2541, 3
  %v2784 = vsel %vm2725, %v2783, %v2782
  %v2785 = vrot.slane %v2542, 2
  %v2786 = vsel %vm2728, %v2785, %v2784
  %v2787 = vrot.slane %v2543, 1
  %v2788 = vsel %vm2731, %v2787, %v2786
  %v2789 = vrot.slane %v2545, 7
  %v2790 = vsel %vm2713, %v2789, %v2544
  %v2791 = vrot.slane %v2546, 6
  %v2792 = vsel %vm2716, %v2791, %v2790
  %v2793 = vrot.slane %v2547, 5
  %v2794 = vsel %vm2719, %v2793, %v2792
  %v2795 = vrot.slane %v2548, 4
  %v2796 = vsel %vm2722, %v2795, %v2794
  %v2797 = vrot.slane %v2549, 3
  %v2798 = vsel %vm2725, %v2797, %v2796
  %v2799 = vrot.slane %v2550, 2
  %v2800 = vsel %vm2728, %v2799, %v2798
  %v2801 = vrot.slane %v2551, 1
  %v2802 = vsel %vm2731, %v2801, %v2800
  %v2803 = vrot.slane %v2553, 7
  %v2804 = vsel %vm2713, %v2803, %v2552
  %v2805 = vrot.slane %v2554, 6
  %v2806 = vsel %vm2716, %v2805, %v2804
  %v2807 = vrot.slane %v2555, 5
  %v2808 = vsel %vm2719, %v2807, %v2806
  %v2809 = vrot.slane %v2556, 4
  %v2810 = vsel %vm2722, %v2809, %v2808
  %v2811 = vrot.slane %v2557, 3
  %v2812 = vsel %vm2725, %v2811, %v2810
  %v2813 = vrot.slane %v2558, 2
  %v2814 = vsel %vm2728, %v2813, %v2812
  %v2815 = vrot.slane %v2559, 1
  %v2816 = vsel %vm2731, %v2815, %v2814
  %v2817 = vrot.slane %v2561, 7
  %v2818 = vsel %vm2713, %v2817, %v2560
  %v2819 = vrot.slane %v2562, 6
  %v2820 = vsel %vm2716, %v2819, %v2818
  %v2821 = vrot.slane %v2563, 5
  %v2822 = vsel %vm2719, %v2821, %v2820
  %v2823 = vrot.slane %v2564, 4
  %v2824 = vsel %vm2722, %v2823, %v2822
  %v2825 = vrot.slane %v2565, 3
  %v2826 = vsel %vm2725, %v2825, %v2824
  %v2827 = vrot.slane %v2566, 2
  %v2828 = vsel %vm2728, %v2827, %v2826
  %v2829 = vrot.slane %v2567, 1
  %v2830 = vsel %vm2731, %v2829, %v2828
  %v2831 = vrot.slane %v2569, 7
  %v2832 = vsel %vm2713, %v2831, %v2568
  %v2833 = vrot.slane %v2570, 6
  %v2834 = vsel %vm2716, %v2833, %v2832
  %v2835 = vrot.slane %v2571, 5
  %v2836 = vsel %vm2719, %v2835, %v2834
  %v2837 = vrot.slane %v2572, 4
  %v2838 = vsel %vm2722, %v2837, %v2836
  %v2839 = vrot.slane %v2573, 3
  %v2840 = vsel %vm2725, %v2839, %v2838
  %v2841 = vrot.slane %v2574, 2
  %v2842 = vsel %vm2728, %v2841, %v2840
  %v2843 = vrot.slane %v2575, 1
  %v2844 = vsel %vm2731, %v2843, %v2842
  %v2845 = vrot.slane %v2577, 7
  %v2846 = vsel %vm2713, %v2845, %v2576
  %v2847 = vrot.slane %v2578, 6
  %v2848 = vsel %vm2716, %v2847, %v2846
  %v2849 = vrot.slane %v2579, 5
  %v2850 = vsel %vm2719, %v2849, %v2848
  %v2851 = vrot.slane %v2580, 4
  %v2852 = vsel %vm2722, %v2851, %v2850
  %v2853 = vrot.slane %v2581, 3
  %v2854 = vsel %vm2725, %v2853, %v2852
  %v2855 = vrot.slane %v2582, 2
  %v2856 = vsel %vm2728, %v2855, %v2854
  %v2857 = vrot.slane %v2583, 1
  %v2858 = vsel %vm2731, %v2857, %v2856
  %v2859 = vrot.slane %v2585, 7
  %v2860 = vsel %vm2713, %v2859, %v2584
  %v2861 = vrot.slane %v2586, 6
  %v2862 = vsel %vm2716, %v2861, %v2860
  %v2863 = vrot.slane %v2587, 5
  %v2864 = vsel %vm2719, %v2863, %v2862
  %v2865 = vrot.slane %v2588, 4
  %v2866 = vsel %vm2722, %v2865, %v2864
  %v2867 = vrot.slane %v2589, 3
  %v2868 = vsel %vm2725, %v2867, %v2866
  %v2869 = vrot.slane %v2590, 2
  %v2870 = vsel %vm2728, %v2869, %v2868
  %v2871 = vrot.slane %v2591, 1
  %v2872 = vsel %vm2731, %v2871, %v2870
  %v2873 = vrot.slane %v2593, 7
  %v2874 = vsel %vm2713, %v2873, %v2592
  %v2875 = vrot.slane %v2594, 6
  %v2876 = vsel %vm2716, %v2875, %v2874
  %v2877 = vrot.slane %v2595, 5
  %v2878 = vsel %vm2719, %v2877, %v2876
  %v2879 = vrot.slane %v2596, 4
  %v2880 = vsel %vm2722, %v2879, %v2878
  %v2881 = vrot.slane %v2597, 3
  %v2882 = vsel %vm2725, %v2881, %v2880
  %v2883 = vrot.slane %v2598, 2
  %v2884 = vsel %vm2728, %v2883, %v2882
  %v2885 = vrot.slane %v2599, 1
  %v2886 = vsel %vm2731, %v2885, %v2884
  %v2887 = vrot.slane %v2601, 7
  %v2888 = vsel %vm2713, %v2887, %v2600
  %v2889 = vrot.slane %v2602, 6
  %v2890 = vsel %vm2716, %v2889, %v2888
  %v2891 = vrot.slane %v2603, 5
  %v2892 = vsel %vm2719, %v2891, %v2890
  %v2893 = vrot.slane %v2604, 4
  %v2894 = vsel %vm2722, %v2893, %v2892
  %v2895 = vrot.slane %v2605, 3
  %v2896 = vsel %vm2725, %v2895, %v2894
  %v2897 = vrot.slane %v2606, 2
  %v2898 = vsel %vm2728, %v2897, %v2896
  %v2899 = vrot.slane %v2607, 1
  %v2900 = vsel %vm2731, %v2899, %v2898
  %vm2914 = vcmask 31744
  %2915 = vst.msk [vmem:[%s1] sm:$0xff] %vm2914, %v2732
  %2916 = vst.msk [vmem:[%s1 + $0x8] sm:$0xff] %vm2914, %v2746
  %2917 = vst.msk [vmem:[%s1 + $0x10] sm:$0xff] %vm2914, %v2760
  %2918 = vst.msk [vmem:[%s1 + $0x18] sm:$0xff] %vm2914, %v2774
  %2919 = vst.msk [vmem:[%s1 + $0x20] sm:$0xff] %vm2914, %v2788
  %2920 = vst.msk [vmem:[%s1 + $0x28] sm:$0xff] %vm2914, %v2802
  %2921 = vst.msk [vmem:[%s1 + $0x30] sm:$0xff] %vm2914, %v2816
  %2922 = vst.msk [vmem:[%s1 + $0x38] sm:$0xff] %vm2914, %v2830
  %2923 = vst.msk [vmem:[%s1 + $0x40] sm:$0xff] %vm2914, %v2844
  %2924 = vst.msk [vmem:[%s1 + $0x48] sm:$0xff] %vm2914, %v2858
  %2925 = vst.msk [vmem:[%s1 + $0x50] sm:$0xff] %vm2914, %v2872
  %2926 = vst.msk [vmem:[%s1 + $0x58] sm:$0xff] %vm2914, %v2886
  %2927 = vst.msk [vmem:[%s1 + $0x60] sm:$0xff] %vm2914, %v2900
  // Predicated region
  $region6: #{reduction_a.9} parent=0 // pred_check
    _
  $region7: #{reduction_a.9} parent=0 // pred_check_branch
    %2929 = sbr.rel (0) target = $region9
  $region8: #{reduction_a.9} parent=0 // pred_region
    _
  $region9: #{reduction_a.9} parent=0 // pred_fallthru
    _
  // Predicated region
  $region10: #{reduction_a.9} parent=0 // pred_check
    _
  $region11: #{reduction_a.9} parent=0 // pred_check_branch
    %2931 = sbr.rel (0) target = $region13
  $region12: #{reduction_a.9} parent=0 // pred_region
    _
  $region13: #{reduction_a.9} parent=0 // pred_fallthru
    _

</llo_original>
